<compile_context>
chip_gen: v7x
topology: tpu7x:2x2x1
jax: 0.10.0
libtpu: 0.0.40
codegen_flags: <defaults>
</compile_context>

<pallas_src>
import jax
import jax.numpy as jnp
from jax.experimental import pallas as pl
from jax.experimental.pallas import tpu as pltpu

BF16 = jnp.bfloat16
F32 = jnp.float32

TILE_CAP = 1024                     # largest live f32 slab = 1024x1024 = 4 MiB (v7x-safe)
VMEM_LIMIT = 48 * 1024 * 1024       # < v7x physical (64 MiB); plenty for ~13 MiB actual use


def _mm(a, w_ref):
    """bf16 x bf16 matmul with f32 accumulation (single-pass MXU)."""
    return jnp.dot(a.astype(BF16), w_ref[...], preferred_element_type=F32)


def _relu(x):
    return jnp.maximum(x, 0.0)


def _mm_xla(a, w):
    """Same math for the XLA glue / reference (bf16 operands, f32 accum)."""
    return jnp.dot(a.astype(BF16), w.astype(BF16), preferred_element_type=F32)


# ----------------------------------------------------------------------------
# Kernel A: conv1 + STNkd conv stack + running max over points
# ----------------------------------------------------------------------------
def _kernel_a(x_ref, w1, b1, ws1, bs1, ws2, bs2, ws3, bs3, smax_ref):
    ti = pl.program_id(2)
    x = x_ref[0]                                        # (TILE_N, 8) bf16
    h1 = _relu(_mm(x, w1) + b1[...]).astype(BF16)       # (TILE_N, 64)
    s1 = _relu(_mm(h1, ws1) + bs1[...])                 # (TILE_N, 64)
    s2 = _relu(_mm(s1, ws2) + bs2[...])                 # (TILE_N, 128)
    s3 = _relu(_mm(s2, ws3) + bs3[...])                 # (TILE_N, 1024)
    tmax = jnp.max(s3, axis=0, keepdims=True)           # (1, 1024) tile max

    @pl.when(ti == 0)
    def _():
        smax_ref[0] = tmax

    @pl.when(ti > 0)
    def _():
        smax_ref[0] = jnp.maximum(smax_ref[0], tmax)


# ----------------------------------------------------------------------------
# Kernel B1: conv1 recompute, feature-transform bmm, conv2, conv3, global max
# ----------------------------------------------------------------------------
def _kernel_b1(x_ref, t_ref, w1, b1, w2, b2, w3, b3, gmax_ref):
    ti = pl.program_id(2)
    x = x_ref[0]                                        # (TILE_N, 8) bf16
    h1 = _relu(_mm(x, w1) + b1[...]).astype(BF16)       # (TILE_N, 64)
    pf = jnp.dot(h1, t_ref[0], preferred_element_type=F32).astype(BF16)
    h2 = _relu(_mm(pf, w2) + b2[...])                   # (TILE_N, 128)
    h3 = _mm(h2, w3) + b3[...]                          # (TILE_N, 1024) no relu
    tmax = jnp.max(h3, axis=0, keepdims=True)           # (1, 1024)

    @pl.when(ti == 0)
    def _():
        gmax_ref[0] = tmax

    @pl.when(ti > 0)
    def _():
        gmax_ref[0] = jnp.maximum(gmax_ref[0], tmax)


# ----------------------------------------------------------------------------
# Kernel B2: per-point regressor head (global contribution precomputed in XLA)
# ----------------------------------------------------------------------------
def _kernel_b2(x_ref, t_ref, r1base_ref, w1, b1, wr1b, wr2, br2, wr3, br3, out_ref):
    x = x_ref[0]                                        # (TILE_N, 8) bf16
    h1 = _relu(_mm(x, w1) + b1[...]).astype(BF16)       # (TILE_N, 64)
    pf = jnp.dot(h1, t_ref[0], preferred_element_type=F32).astype(BF16)
    r1 = _relu(_mm(pf, wr1b) + r1base_ref[0])           # (TILE_N, 1024)
    r2 = _relu(_mm(r1, wr2) + br2[...])                 # (TILE_N, 512)
    out_ref[0] = (_mm(r2, wr3) + br3[...]).astype(BF16)  # (TILE_N, 128) lane-dense


# ----------------------------------------------------------------------------
# XLA glue (M=B GEMMs that would be M=1 inside the kernels)
# ----------------------------------------------------------------------------
def _stn_tail(smax_vec, p):
    f1 = _relu(_mm_xla(smax_vec, p["wf1"]) + p["bf1"])
    f2 = _relu(_mm_xla(f1, p["wf2"]) + p["bf2"])
    f3 = _mm_xla(f2, p["wf3"]) + p["bf3"]
    return f3.reshape(-1, 64, 64) + jnp.eye(64, dtype=F32)[None]


# ----------------------------------------------------------------------------
# Tiling plan & wrapper
# ----------------------------------------------------------------------------
def _plan_tiles(n, tile_cap=TILE_CAP):
    """Pick (tile_n, core_split, tiles_per_core) for the point axis.

    tile_cap=1024 keeps the largest live f32 intermediate at 4 MiB (v7x 64 MiB
    VMEM budget); N is padded up to tile_n * core_split * tiles_per_core by
    replicating the last point, so all maxes stay correct.
    """
    cdiv = lambda a, b: -(-a // b)
    ncs = 2 if n >= 512 else 1              # v7x: split point tiles over both TCs
    nt = max(cdiv(n, tile_cap), ncs)
    nt = cdiv(nt, ncs) * ncs                # divisible by the core split
    tile_n = cdiv(cdiv(n, nt), 8) * 8       # sublane multiple, <= tile_cap
    return tile_n, ncs, nt // ncs


def _wspec(arr):
    nd = arr.ndim
    # TODO(synk): add pipeline_mode=pl.Buffered(1) for these constant blocks once
    # verified on this jax version (weights never change block index; at the
    # current tile sizes VMEM has ample headroom so this is not load-bearing).
    return pl.BlockSpec(arr.shape, lambda *idx, _nd=nd: (0,) * _nd)


def _prep_kernel_params(p):
    kp = {}
    kp["w1"] = jnp.pad(p["w1"], ((0, 1), (0, 0))).astype(BF16)        # (8, 64)
    for name in ("ws1", "ws2", "ws3", "w2", "w3", "wr1b", "wr2"):
        kp[name] = p[name].astype(BF16)
    # TODO(synk): optional fp8 (e4m3) storage for wr2/w3/ws3 on v7x if numerics allow.
    kp["wr3"] = jnp.pad(p["wr3"], ((0, 0), (0, 125))).astype(BF16)    # (512, 128)
    kp["br3"] = jnp.pad(p["br3"], ((0, 0), (0, 125))).astype(F32)     # (1, 128)
    for name in ("b1", "bs1", "bs2", "bs3", "b2", "b3", "br2"):
        kp[name] = p[name].astype(F32)
    return kp


def pointnetfeat_forward(x, p):
    B, N, Cin = x.shape
    assert Cin == 7
    tile_n, ncs, ntc = _plan_tiles(N)
    nt = ncs * ntc
    n_pad = tile_n * nt

    # Pad points by replicating the last point (keeps every max correct; padded
    # rows are sliced off), pad channels 7 -> 8 with zeros (w1 has a zero row),
    # cast MXU operands to bf16.
    xp = jnp.pad(x, ((0, 0), (0, n_pad - N), (0, 0)), mode="edge")
    x8 = jnp.pad(xp, ((0, 0), (0, 0), (0, 1))).astype(BF16)
    kp = _prep_kernel_params(p)

    cp_red = pltpu.CompilerParams(
        dimension_semantics=("parallel", "parallel", "arbitrary"),
        vmem_limit_bytes=VMEM_LIMIT)
    cp_par = pltpu.CompilerParams(
        dimension_semantics=("parallel", "parallel"),
        vmem_limit_bytes=VMEM_LIMIT)

    x_spec_red = pl.BlockSpec((1, tile_n, 8), lambda c, b, t: (b, c * ntc + t, 0))
    t_spec_red = pl.BlockSpec((1, 64, 64), lambda c, b, t: (b, 0, 0))
    max_spec = pl.BlockSpec((1, 1, 1024), lambda c, b, t: (b, c, 0))

    macs_conv = 8 * 64 + 64 * 64 + 64 * 128 + 128 * 1024          # A and B1
    macs_reg = 8 * 64 + 64 * 64 + 64 * 1024 + 1024 * 512 + 512 * 128  # B2

    # ---- Kernel A: conv1 + STN conv stack + running max over points ----
    a_weights = [kp[k] for k in ("w1", "b1", "ws1", "bs1", "ws2", "bs2",
                                 "ws3", "bs3")]
    smax = pl.pallas_call(
        _kernel_a,
        out_shape=jax.ShapeDtypeStruct((B, ncs, 1024), F32),
        grid=(ncs, B, ntc),
        in_specs=[x_spec_red] + [_wspec(w) for w in a_weights],
        out_specs=max_spec,
        compiler_params=cp_red,
        cost_estimate=pl.CostEstimate(
            flops=2 * B * n_pad * macs_conv, transcendentals=0,
            bytes_accessed=B * n_pad * 16 + B * ncs * 4096 + 310_000),
    )(x8, *a_weights)

    # ---- XLA glue: STN fc tail + identity ------------------------------
    trans_feat = _stn_tail(jnp.max(smax, axis=1), p)          # (B, 64, 64) f32
    trans_b = trans_feat.astype(BF16)

    # ---- Kernel B1: feature transform + conv2/conv3 + global max -------
    b1_weights = [kp[k] for k in ("w1", "b1", "w2", "b2", "w3", "b3")]
    gmax = pl.pallas_call(
        _kernel_b1,
        out_shape=jax.ShapeDtypeStruct((B, ncs, 1024), F32),
        grid=(ncs, B, ntc),
        in_specs=[x_spec_red, t_spec_red] + [_wspec(w) for w in b1_weights],
        out_specs=max_spec,
        compiler_params=cp_red,
        cost_estimate=pl.CostEstimate(
            flops=2 * B * n_pad * macs_conv, transcendentals=0,
            bytes_accessed=B * n_pad * 16 + B * 8192 + B * ncs * 4096 + 310_000),
    )(x8, trans_b, *b1_weights)

    # ---- XLA glue: global-feature contribution of regressor layer 1 ----
    r1_base = (_mm_xla(jnp.max(gmax, axis=1), p["wr1a"])
               + p["br1"]).reshape(B, 1, 1024)                 # (B, 1, 1024) f32

    # ---- Kernel B2: per-point regressor head ---------------------------
    x_spec_par = pl.BlockSpec((1, tile_n, 8), lambda b, t: (b, t, 0))
    t_spec_par = pl.BlockSpec((1, 64, 64), lambda b, t: (b, 0, 0))
    b2_weights = [kp[k] for k in ("w1", "b1", "wr1b", "wr2", "br2", "wr3", "br3")]
    out_pad = pl.pallas_call(
        _kernel_b2,
        out_shape=jax.ShapeDtypeStruct((B, n_pad, 128), BF16),
        grid=(B, nt),
        in_specs=[x_spec_par, t_spec_par,
                  pl.BlockSpec((1, 1, 1024), lambda b, t: (b, 0, 0))]
                 + [_wspec(w) for w in b2_weights],
        out_specs=pl.BlockSpec((1, tile_n, 128), lambda b, t: (b, t, 0)),
        compiler_params=cp_par,
        cost_estimate=pl.CostEstimate(
            flops=2 * B * n_pad * macs_reg, transcendentals=0,
            bytes_accessed=(B * n_pad * 16 + B * 8192 + B * 4096
                            + B * n_pad * 256 + 1_500_000)),
    )(x8, trans_b, r1_base, *b2_weights)

    out = out_pad[:, :N, :3].astype(F32)
    # matches PyTorch: (regressor_out, None, trans_feat)
    return out, None, trans_feat


# ----------------------------------------------------------------------------
# Deterministic parameter init (PyTorch default U(-1/sqrt(fan_in), 1/sqrt(fan_in)))
# ----------------------------------------------------------------------------
def init_params(key):
    def linear(k, fan_in, fan_out):
        kw, kb = jax.random.split(k)
        bound = 1.0 / (fan_in ** 0.5)
        w = jax.random.uniform(kw, (fan_in, fan_out), F32, -bound, bound)
        b = jax.random.uniform(kb, (1, fan_out), F32, -bound, bound)
        return w, b

    keys = jax.random.split(key, 12)
    p = {}
    p["w1"], p["b1"] = linear(keys[0], 7, 64)          # conv1
    p["w2"], p["b2"] = linear(keys[1], 64, 128)        # conv2
    p["w3"], p["b3"] = linear(keys[2], 128, 1024)      # conv3
    p["ws1"], p["bs1"] = linear(keys[3], 64, 64)       # fstn.conv1
    p["ws2"], p["bs2"] = linear(keys[4], 64, 128)      # fstn.conv2
    p["ws3"], p["bs3"] = linear(keys[5], 128, 1024)    # fstn.conv3
    p["wf1"], p["bf1"] = linear(keys[6], 1024, 512)    # fstn.fc1
    p["wf2"], p["bf2"] = linear(keys[7], 512, 256)     # fstn.fc2
    p["wf3"], p["bf3"] = linear(keys[8], 256, 4096)    # fstn.fc3 (k*k)
    wr1, br1 = linear(keys[9], 1088, 1024)             # regressor Linear(1088,1024)
    p["wr1a"], p["wr1b"], p["br1"] = wr1[:1024], wr1[1024:], br1
    p["wr2"], p["br2"] = linear(keys[10], 1024, 512)   # regressor Linear(1024,512)
    p["wr3"], p["br3"] = linear(keys[11], 512, 3)      # regressor Linear(512,3)
    return p


# ----------------------------------------------------------------------------
# Pure-JAX reference (same math / precision, for validation)
# ----------------------------------------------------------------------------
def reference_forward(x, p):
    h1 = _relu(_mm_xla(x, p["w1"]) + p["b1"]).astype(BF16)
    s1 = _relu(_mm_xla(h1, p["ws1"]) + p["bs1"])
    s2 = _relu(_mm_xla(s1, p["ws2"]) + p["bs2"])
    s3 = _relu(_mm_xla(s2, p["ws3"]) + p["bs3"])
    g = jnp.max(s3, axis=1)                                    # (B, 1024)
    trans = _stn_tail(g, p)                                    # (B, 64, 64)
    pf = jnp.einsum("bnc,bcd->bnd", h1, trans.astype(BF16),
                    preferred_element_type=F32).astype(BF16)
    h2 = _relu(_mm_xla(pf, p["w2"]) + p["b2"])
    h3 = _mm_xla(h2, p["w3"]) + p["b3"]
    gmax = jnp.max(h3, axis=1)                                 # (B, 1024)
    r1 = _relu(_mm_xla(gmax, p["wr1a"])[:, None, :]
               + _mm_xla(pf, p["wr1b"]) + p["br1"])
    r2 = _relu(_mm_xla(r1, p["wr2"]) + p["br2"])
    out = _mm_xla(r2, p["wr3"]) + p["br3"]
    return out, trans


if __name__ == "__main__":
    key = jax.random.PRNGKey(0)
    kx1, kx2, kparam = jax.random.split(key, 3)
    params = init_params(kparam)
    fwd = jax.jit(pointnetfeat_forward)

    # Two configs: tiny (single tile) and one that exercises the point-axis
    # padding (520 -> 528) and the 2-TensorCore point-tile split.
    for Bsz, Npts, kx in ((2, 16, kx1), (1, 520, kx2)):
        x = jax.random.normal(kx, (Bsz, Npts, 7), F32)
        out, none_ret, trans_feat = fwd(x, params)
        out = jax.block_until_ready(out)
        trans_feat = jax.block_until_ready(trans_feat)

        ref_out, ref_trans = reference_forward(x, params)
        assert none_ret is None
        assert out.shape == (Bsz, Npts, 3) and trans_feat.shape == (Bsz, 64, 64)
        assert jnp.allclose(out, ref_out, atol=1e-2, rtol=1e-2), (
            f"out max abs err {jnp.max(jnp.abs(out - ref_out))}")
        assert jnp.allclose(trans_feat, ref_trans, atol=1e-2, rtol=1e-2), (
            f"trans max abs err {jnp.max(jnp.abs(trans_feat - ref_trans))}")
    print("KERNEL_OK")
</pallas_src>

<mosaic_0001>
module attributes {stable_mosaic.version = 11 : i64} {
  func.func @_kernel_a(%arg0: i32, %arg1: i32, %arg2: i32, %arg3: memref<1x16x8xbf16, #tpu.memory_space<vmem>>, %arg4: memref<8x64xbf16, #tpu.memory_space<vmem>>, %arg5: memref<1x64xf32, #tpu.memory_space<vmem>>, %arg6: memref<64x64xbf16, #tpu.memory_space<vmem>>, %arg7: memref<1x64xf32, #tpu.memory_space<vmem>>, %arg8: memref<64x128xbf16, #tpu.memory_space<vmem>>, %arg9: memref<1x128xf32, #tpu.memory_space<vmem>>, %arg10: memref<128x1024xbf16, #tpu.memory_space<vmem>>, %arg11: memref<1x1024xf32, #tpu.memory_space<vmem>>, %arg12: memref<1x1x1024xf32, #tpu.memory_space<vmem>>) attributes {dimension_semantics = [#tpu.dimension_semantics<parallel>, #tpu.dimension_semantics<parallel>, #tpu.dimension_semantics<arbitrary>], iteration_bounds = array<i64: 1, 2, 1>, scalar_prefetch = 0 : i64, scratch_operands = 0 : i64, tpu.core_type = #tpu.core_type<tc>, window_params = [{transform_indices = @transform_0, window_bounds = array<i64: 1, 16, 8>}, {pipeline_mode = #tpu.pipeline_mode<synchronous>, transform_indices = @transform_1, window_bounds = array<i64: 8, 64>}, {pipeline_mode = #tpu.pipeline_mode<synchronous>, transform_indices = @transform_2, window_bounds = array<i64: 1, 64>}, {pipeline_mode = #tpu.pipeline_mode<synchronous>, transform_indices = @transform_3, window_bounds = array<i64: 64, 64>}, {pipeline_mode = #tpu.pipeline_mode<synchronous>, transform_indices = @transform_4, window_bounds = array<i64: 1, 64>}, {pipeline_mode = #tpu.pipeline_mode<synchronous>, transform_indices = @transform_5, window_bounds = array<i64: 64, 128>}, {pipeline_mode = #tpu.pipeline_mode<synchronous>, transform_indices = @transform_6, window_bounds = array<i64: 1, 128>}, {pipeline_mode = #tpu.pipeline_mode<synchronous>, transform_indices = @transform_7, window_bounds = array<i64: 128, 1024>}, {pipeline_mode = #tpu.pipeline_mode<synchronous>, transform_indices = @transform_8, window_bounds = array<i64: 1, 1024>}, {transform_indices = @transform_9, window_bounds = array<i64: 1, 1, 1024>}]} {
    %c0 = arith.constant 0 : index
    %c0_0 = arith.constant 0 : index
    %c0_1 = arith.constant 0 : index
    %0 = vector.load %arg3[%c0, %c0_0, %c0_1] : memref<1x16x8xbf16, #tpu.memory_space<vmem>>, vector<1x16x8xbf16>
    %1 = vector.shape_cast %0 : vector<1x16x8xbf16> to vector<16x8xbf16>
    %c0_2 = arith.constant 0 : index
    %c0_3 = arith.constant 0 : index
    %2 = vector.load %arg4[%c0_2, %c0_3] : memref<8x64xbf16, #tpu.memory_space<vmem>>, vector<8x64xbf16>
    %cst = arith.constant dense<0.000000e+00> : vector<16x64xf32>
    %3 = tpu.matmul %1, %2, %cst {dimension_numbers = #tpu.dot_dimension_numbers<[1], [0], [0], [1], [0, 0, 1, 1], [], []>} : vector<16x8xbf16>, vector<8x64xbf16>, vector<16x64xf32> -> vector<16x64xf32>
    %c0_4 = arith.constant 0 : index
    %c0_5 = arith.constant 0 : index
    %4 = vector.load %arg5[%c0_4, %c0_5] : memref<1x64xf32, #tpu.memory_space<vmem>>, vector<1x64xf32>
    %5 = vector.broadcast %4 : vector<1x64xf32> to vector<16x64xf32>
    %6 = arith.addf %3, %5 : vector<16x64xf32>
    %cst_6 = arith.constant 0.000000e+00 : f32
    %7 = vector.broadcast %cst_6 : f32 to vector<16x64xf32>
    %8 = arith.maximumf %6, %7 : vector<16x64xf32>
    %9 = arith.truncf %8 : vector<16x64xf32> to vector<16x64xbf16>
    %c0_7 = arith.constant 0 : index
    %c0_8 = arith.constant 0 : index
    %10 = vector.load %arg6[%c0_7, %c0_8] : memref<64x64xbf16, #tpu.memory_space<vmem>>, vector<64x64xbf16>
    %cst_9 = arith.constant dense<0.000000e+00> : vector<16x64xf32>
    %11 = tpu.matmul %9, %10, %cst_9 {dimension_numbers = #tpu.dot_dimension_numbers<[1], [0], [0], [1], [0, 0, 1, 1], [], []>} : vector<16x64xbf16>, vector<64x64xbf16>, vector<16x64xf32> -> vector<16x64xf32>
    %c0_10 = arith.constant 0 : index
    %c0_11 = arith.constant 0 : index
    %12 = vector.load %arg7[%c0_10, %c0_11] : memref<1x64xf32, #tpu.memory_space<vmem>>, vector<1x64xf32>
    %13 = vector.broadcast %12 : vector<1x64xf32> to vector<16x64xf32>
    %14 = arith.addf %11, %13 : vector<16x64xf32>
    %cst_12 = arith.constant 0.000000e+00 : f32
    %15 = vector.broadcast %cst_12 : f32 to vector<16x64xf32>
    %16 = arith.maximumf %14, %15 : vector<16x64xf32>
    %17 = arith.truncf %16 : vector<16x64xf32> to vector<16x64xbf16>
    %c0_13 = arith.constant 0 : index
    %c0_14 = arith.constant 0 : index
    %18 = vector.load %arg8[%c0_13, %c0_14] : memref<64x128xbf16, #tpu.memory_space<vmem>>, vector<64x128xbf16>
    %cst_15 = arith.constant dense<0.000000e+00> : vector<16x128xf32>
    %19 = tpu.matmul %17, %18, %cst_15 {dimension_numbers = #tpu.dot_dimension_numbers<[1], [0], [0], [1], [0, 0, 1, 1], [], []>} : vector<16x64xbf16>, vector<64x128xbf16>, vector<16x128xf32> -> vector<16x128xf32>
    %c0_16 = arith.constant 0 : index
    %c0_17 = arith.constant 0 : index
    %20 = vector.load %arg9[%c0_16, %c0_17] : memref<1x128xf32, #tpu.memory_space<vmem>>, vector<1x128xf32>
    %21 = vector.broadcast %20 : vector<1x128xf32> to vector<16x128xf32>
    %22 = arith.addf %19, %21 : vector<16x128xf32>
    %cst_18 = arith.constant 0.000000e+00 : f32
    %23 = vector.broadcast %cst_18 : f32 to vector<16x128xf32>
    %24 = arith.maximumf %22, %23 : vector<16x128xf32>
    %25 = arith.truncf %24 : vector<16x128xf32> to vector<16x128xbf16>
    %c0_19 = arith.constant 0 : index
    %c0_20 = arith.constant 0 : index
    %26 = vector.load %arg10[%c0_19, %c0_20] : memref<128x1024xbf16, #tpu.memory_space<vmem>>, vector<128x1024xbf16>
    %cst_21 = arith.constant dense<0.000000e+00> : vector<16x1024xf32>
    %27 = tpu.matmul %25, %26, %cst_21 {dimension_numbers = #tpu.dot_dimension_numbers<[1], [0], [0], [1], [0, 0, 1, 1], [], []>} : vector<16x128xbf16>, vector<128x1024xbf16>, vector<16x1024xf32> -> vector<16x1024xf32>
    %c0_22 = arith.constant 0 : index
    %c0_23 = arith.constant 0 : index
    %28 = vector.load %arg11[%c0_22, %c0_23] : memref<1x1024xf32, #tpu.memory_space<vmem>>, vector<1x1024xf32>
    %29 = vector.broadcast %28 : vector<1x1024xf32> to vector<16x1024xf32>
    %30 = arith.addf %27, %29 : vector<16x1024xf32>
    %cst_24 = arith.constant 0.000000e+00 : f32
    %31 = vector.broadcast %cst_24 : f32 to vector<16x1024xf32>
    %32 = arith.maximumf %30, %31 : vector<16x1024xf32>
    %cst_25 = arith.constant dense<0xFF800000> : vector<1024xf32>
    %33 = vector.multi_reduction <maximumf>, %32, %cst_25 [0] : vector<16x1024xf32> to vector<1024xf32>
    %34 = vector.shape_cast %33 : vector<1024xf32> to vector<1x1024xf32>
    %c0_i32 = arith.constant 0 : i32
    %35 = arith.cmpi eq, %arg2, %c0_i32 : i32
    %36 = arith.extui %35 : i1 to i32
    %c0_i32_26 = arith.constant 0 : i32
    %37 = arith.cmpi ne, %36, %c0_i32_26 : i32
    scf.if %37 {
      %c0_29 = arith.constant 0 : index
      %c0_30 = arith.constant 0 : index
      %c0_31 = arith.constant 0 : index
      %41 = vector.load %arg12[%c0_29, %c0_30, %c0_31] : memref<1x1x1024xf32, #tpu.memory_space<vmem>>, vector<1x1x1024xf32>
      %42 = vector.shape_cast %41 : vector<1x1x1024xf32> to vector<1x1024xf32>
      %43 = vector.shape_cast %34 : vector<1x1024xf32> to vector<1x1x1024xf32>
      tpu.vector_store %arg12[%c0_29, %c0_30, %c0_31], %43 {strides = array<i32>} : memref<1x1x1024xf32, #tpu.memory_space<vmem>>, vector<1x1x1024xf32>,
    } else {
    }
    %c0_i32_27 = arith.constant 0 : i32
    %38 = arith.cmpi sgt, %arg2, %c0_i32_27 : i32
    %39 = arith.extui %38 : i1 to i32
    %c0_i32_28 = arith.constant 0 : i32
    %40 = arith.cmpi ne, %39, %c0_i32_28 : i32
    scf.if %40 {
      %c0_29 = arith.constant 0 : index
      %c0_30 = arith.constant 0 : index
      %c0_31 = arith.constant 0 : index
      %41 = vector.load %arg12[%c0_29, %c0_30, %c0_31] : memref<1x1x1024xf32, #tpu.memory_space<vmem>>, vector<1x1x1024xf32>
      %42 = vector.shape_cast %41 : vector<1x1x1024xf32> to vector<1x1024xf32>
      %43 = arith.maximumf %42, %34 : vector<1x1024xf32>
      %c0_32 = arith.constant 0 : index
      %c0_33 = arith.constant 0 : index
      %c0_34 = arith.constant 0 : index
      %44 = vector.load %arg12[%c0_32, %c0_33, %c0_34] : memref<1x1x1024xf32, #tpu.memory_space<vmem>>, vector<1x1x1024xf32>
      %45 = vector.shape_cast %44 : vector<1x1x1024xf32> to vector<1x1024xf32>
      %46 = vector.shape_cast %43 : vector<1x1024xf32> to vector<1x1x1024xf32>
      tpu.vector_store %arg12[%c0_32, %c0_33, %c0_34], %46 {strides = array<i32>} : memref<1x1x1024xf32, #tpu.memory_space<vmem>>, vector<1x1x1024xf32>,
    } else {
    }
    return
  }
  func.func @transform_0(%arg0: i32, %arg1: i32, %arg2: i32) -> (i32, i32, i32) {
    %c1_i32 = arith.constant 1 : i32
    %0 = arith.muli %arg0, %c1_i32 : i32
    %1 = arith.addi %0, %arg2 : i32
    %c0_i32 = arith.constant 0 : i32
    %c0_i32_0 = arith.constant 0 : i32
    return %arg1, %1, %c0_i32 : i32, i32, i32
  }
  func.func @transform_1(%arg0: i32, %arg1: i32, %arg2: i32) -> (i32, i32) {
    %c0_i32 = arith.constant 0 : i32
    %c0_i32_0 = arith.constant 0 : i32
    %c0_i32_1 = arith.constant 0 : i32
    return %c0_i32, %c0_i32_0 : i32, i32
  }
  func.func @transform_2(%arg0: i32, %arg1: i32, %arg2: i32) -> (i32, i32) {
    %c0_i32 = arith.constant 0 : i32
    %c0_i32_0 = arith.constant 0 : i32
    %c0_i32_1 = arith.constant 0 : i32
    return %c0_i32, %c0_i32_0 : i32, i32
  }
  func.func @transform_3(%arg0: i32, %arg1: i32, %arg2: i32) -> (i32, i32) {
    %c0_i32 = arith.constant 0 : i32
    %c0_i32_0 = arith.constant 0 : i32
    %c0_i32_1 = arith.constant 0 : i32
    return %c0_i32, %c0_i32_0 : i32, i32
  }
  func.func @transform_4(%arg0: i32, %arg1: i32, %arg2: i32) -> (i32, i32) {
    %c0_i32 = arith.constant 0 : i32
    %c0_i32_0 = arith.constant 0 : i32
    %c0_i32_1 = arith.constant 0 : i32
    return %c0_i32, %c0_i32_0 : i32, i32
  }
  func.func @transform_5(%arg0: i32, %arg1: i32, %arg2: i32) -> (i32, i32) {
    %c0_i32 = arith.constant 0 : i32
    %c0_i32_0 = arith.constant 0 : i32
    %c0_i32_1 = arith.constant 0 : i32
    return %c0_i32, %c0_i32_0 : i32, i32
  }
  func.func @transform_6(%arg0: i32, %arg1: i32, %arg2: i32) -> (i32, i32) {
    %c0_i32 = arith.constant 0 : i32
    %c0_i32_0 = arith.constant 0 : i32
    %c0_i32_1 = arith.constant 0 : i32
    return %c0_i32, %c0_i32_0 : i32, i32
  }
  func.func @transform_7(%arg0: i32, %arg1: i32, %arg2: i32) -> (i32, i32) {
    %c0_i32 = arith.constant 0 : i32
    %c0_i32_0 = arith.constant 0 : i32
    %c0_i32_1 = arith.constant 0 : i32
    return %c0_i32, %c0_i32_0 : i32, i32
  }
  func.func @transform_8(%arg0: i32, %arg1: i32, %arg2: i32) -> (i32, i32) {
    %c0_i32 = arith.constant 0 : i32
    %c0_i32_0 = arith.constant 0 : i32
    %c0_i32_1 = arith.constant 0 : i32
    return %c0_i32, %c0_i32_0 : i32, i32
  }
  func.func @transform_9(%arg0: i32, %arg1: i32, %arg2: i32) -> (i32, i32, i32) {
    %c0_i32 = arith.constant 0 : i32
    %c0_i32_0 = arith.constant 0 : i32
    return %arg1, %arg0, %c0_i32 : i32, i32, i32
  }
}

module attributes {stable_mosaic.version = 11 : i64} {
  func.func @_kernel_b1(%arg0: i32, %arg1: i32, %arg2: i32, %arg3: memref<1x16x8xbf16, #tpu.memory_space<vmem>>, %arg4: memref<1x64x64xbf16, #tpu.memory_space<vmem>>, %arg5: memref<8x64xbf16, #tpu.memory_space<vmem>>, %arg6: memref<1x64xf32, #tpu.memory_space<vmem>>, %arg7: memref<64x128xbf16, #tpu.memory_space<vmem>>, %arg8: memref<1x128xf32, #tpu.memory_space<vmem>>, %arg9: memref<128x1024xbf16, #tpu.memory_space<vmem>>, %arg10: memref<1x1024xf32, #tpu.memory_space<vmem>>, %arg11: memref<1x1x1024xf32, #tpu.memory_space<vmem>>) attributes {dimension_semantics = [#tpu.dimension_semantics<parallel>, #tpu.dimension_semantics<parallel>, #tpu.dimension_semantics<arbitrary>], iteration_bounds = array<i64: 1, 2, 1>, scalar_prefetch = 0 : i64, scratch_operands = 0 : i64, tpu.core_type = #tpu.core_type<tc>, window_params = [{transform_indices = @transform_0, window_bounds = array<i64: 1, 16, 8>}, {transform_indices = @transform_1, window_bounds = array<i64: 1, 64, 64>}, {pipeline_mode = #tpu.pipeline_mode<synchronous>, transform_indices = @transform_2, window_bounds = array<i64: 8, 64>}, {pipeline_mode = #tpu.pipeline_mode<synchronous>, transform_indices = @transform_3, window_bounds = array<i64: 1, 64>}, {pipeline_mode = #tpu.pipeline_mode<synchronous>, transform_indices = @transform_4, window_bounds = array<i64: 64, 128>}, {pipeline_mode = #tpu.pipeline_mode<synchronous>, transform_indices = @transform_5, window_bounds = array<i64: 1, 128>}, {pipeline_mode = #tpu.pipeline_mode<synchronous>, transform_indices = @transform_6, window_bounds = array<i64: 128, 1024>}, {pipeline_mode = #tpu.pipeline_mode<synchronous>, transform_indices = @transform_7, window_bounds = array<i64: 1, 1024>}, {transform_indices = @transform_8, window_bounds = array<i64: 1, 1, 1024>}]} {
    %c0 = arith.constant 0 : index
    %c0_0 = arith.constant 0 : index
    %c0_1 = arith.constant 0 : index
    %0 = vector.load %arg3[%c0, %c0_0, %c0_1] : memref<1x16x8xbf16, #tpu.memory_space<vmem>>, vector<1x16x8xbf16>
    %1 = vector.shape_cast %0 : vector<1x16x8xbf16> to vector<16x8xbf16>
    %c0_2 = arith.constant 0 : index
    %c0_3 = arith.constant 0 : index
    %2 = vector.load %arg5[%c0_2, %c0_3] : memref<8x64xbf16, #tpu.memory_space<vmem>>, vector<8x64xbf16>
    %cst = arith.constant dense<0.000000e+00> : vector<16x64xf32>
    %3 = tpu.matmul %1, %2, %cst {dimension_numbers = #tpu.dot_dimension_numbers<[1], [0], [0], [1], [0, 0, 1, 1], [], []>} : vector<16x8xbf16>, vector<8x64xbf16>, vector<16x64xf32> -> vector<16x64xf32>
    %c0_4 = arith.constant 0 : index
    %c0_5 = arith.constant 0 : index
    %4 = vector.load %arg6[%c0_4, %c0_5] : memref<1x64xf32, #tpu.memory_space<vmem>>, vector<1x64xf32>
    %5 = vector.broadcast %4 : vector<1x64xf32> to vector<16x64xf32>
    %6 = arith.addf %3, %5 : vector<16x64xf32>
    %cst_6 = arith.constant 0.000000e+00 : f32
    %7 = vector.broadcast %cst_6 : f32 to vector<16x64xf32>
    %8 = arith.maximumf %6, %7 : vector<16x64xf32>
    %9 = arith.truncf %8 : vector<16x64xf32> to vector<16x64xbf16>
    %c0_7 = arith.constant 0 : index
    %c0_8 = arith.constant 0 : index
    %c0_9 = arith.constant 0 : index
    %10 = vector.load %arg4[%c0_7, %c0_8, %c0_9] : memref<1x64x64xbf16, #tpu.memory_space<vmem>>, vector<1x64x64xbf16>
    %11 = vector.shape_cast %10 : vector<1x64x64xbf16> to vector<64x64xbf16>
    %cst_10 = arith.constant dense<0.000000e+00> : vector<16x64xf32>
    %12 = tpu.matmul %9, %11, %cst_10 {dimension_numbers = #tpu.dot_dimension_numbers<[1], [0], [0], [1], [0, 0, 1, 1], [], []>} : vector<16x64xbf16>, vector<64x64xbf16>, vector<16x64xf32> -> vector<16x64xf32>
    %13 = arith.truncf %12 : vector<16x64xf32> to vector<16x64xbf16>
    %c0_11 = arith.constant 0 : index
    %c0_12 = arith.constant 0 : index
    %14 = vector.load %arg7[%c0_11, %c0_12] : memref<64x128xbf16, #tpu.memory_space<vmem>>, vector<64x128xbf16>
    %cst_13 = arith.constant dense<0.000000e+00> : vector<16x128xf32>
    %15 = tpu.matmul %13, %14, %cst_13 {dimension_numbers = #tpu.dot_dimension_numbers<[1], [0], [0], [1], [0, 0, 1, 1], [], []>} : vector<16x64xbf16>, vector<64x128xbf16>, vector<16x128xf32> -> vector<16x128xf32>
    %c0_14 = arith.constant 0 : index
    %c0_15 = arith.constant 0 : index
    %16 = vector.load %arg8[%c0_14, %c0_15] : memref<1x128xf32, #tpu.memory_space<vmem>>, vector<1x128xf32>
    %17 = vector.broadcast %16 : vector<1x128xf32> to vector<16x128xf32>
    %18 = arith.addf %15, %17 : vector<16x128xf32>
    %cst_16 = arith.constant 0.000000e+00 : f32
    %19 = vector.broadcast %cst_16 : f32 to vector<16x128xf32>
    %20 = arith.maximumf %18, %19 : vector<16x128xf32>
    %21 = arith.truncf %20 : vector<16x128xf32> to vector<16x128xbf16>
    %c0_17 = arith.constant 0 : index
    %c0_18 = arith.constant 0 : index
    %22 = vector.load %arg9[%c0_17, %c0_18] : memref<128x1024xbf16, #tpu.memory_space<vmem>>, vector<128x1024xbf16>
    %cst_19 = arith.constant dense<0.000000e+00> : vector<16x1024xf32>
    %23 = tpu.matmul %21, %22, %cst_19 {dimension_numbers = #tpu.dot_dimension_numbers<[1], [0], [0], [1], [0, 0, 1, 1], [], []>} : vector<16x128xbf16>, vector<128x1024xbf16>, vector<16x1024xf32> -> vector<16x1024xf32>
    %c0_20 = arith.constant 0 : index
    %c0_21 = arith.constant 0 : index
    %24 = vector.load %arg10[%c0_20, %c0_21] : memref<1x1024xf32, #tpu.memory_space<vmem>>, vector<1x1024xf32>
    %25 = vector.broadcast %24 : vector<1x1024xf32> to vector<16x1024xf32>
    %26 = arith.addf %23, %25 : vector<16x1024xf32>
    %cst_22 = arith.constant dense<0xFF800000> : vector<1024xf32>
    %27 = vector.multi_reduction <maximumf>, %26, %cst_22 [0] : vector<16x1024xf32> to vector<1024xf32>
    %28 = vector.shape_cast %27 : vector<1024xf32> to vector<1x1024xf32>
    %c0_i32 = arith.constant 0 : i32
    %29 = arith.cmpi eq, %arg2, %c0_i32 : i32
    %30 = arith.extui %29 : i1 to i32
    %c0_i32_23 = arith.constant 0 : i32
    %31 = arith.cmpi ne, %30, %c0_i32_23 : i32
    scf.if %31 {
      %c0_26 = arith.constant 0 : index
      %c0_27 = arith.constant 0 : index
      %c0_28 = arith.constant 0 : index
      %35 = vector.load %arg11[%c0_26, %c0_27, %c0_28] : memref<1x1x1024xf32, #tpu.memory_space<vmem>>, vector<1x1x1024xf32>
      %36 = vector.shape_cast %35 : vector<1x1x1024xf32> to vector<1x1024xf32>
      %37 = vector.shape_cast %28 : vector<1x1024xf32> to vector<1x1x1024xf32>
      tpu.vector_store %arg11[%c0_26, %c0_27, %c0_28], %37 {strides = array<i32>} : memref<1x1x1024xf32, #tpu.memory_space<vmem>>, vector<1x1x1024xf32>,
    } else {
    }
    %c0_i32_24 = arith.constant 0 : i32
    %32 = arith.cmpi sgt, %arg2, %c0_i32_24 : i32
    %33 = arith.extui %32 : i1 to i32
    %c0_i32_25 = arith.constant 0 : i32
    %34 = arith.cmpi ne, %33, %c0_i32_25 : i32
    scf.if %34 {
      %c0_26 = arith.constant 0 : index
      %c0_27 = arith.constant 0 : index
      %c0_28 = arith.constant 0 : index
      %35 = vector.load %arg11[%c0_26, %c0_27, %c0_28] : memref<1x1x1024xf32, #tpu.memory_space<vmem>>, vector<1x1x1024xf32>
      %36 = vector.shape_cast %35 : vector<1x1x1024xf32> to vector<1x1024xf32>
      %37 = arith.maximumf %36, %28 : vector<1x1024xf32>
      %c0_29 = arith.constant 0 : index
      %c0_30 = arith.constant 0 : index
      %c0_31 = arith.constant 0 : index
      %38 = vector.load %arg11[%c0_29, %c0_30, %c0_31] : memref<1x1x1024xf32, #tpu.memory_space<vmem>>, vector<1x1x1024xf32>
      %39 = vector.shape_cast %38 : vector<1x1x1024xf32> to vector<1x1024xf32>
      %40 = vector.shape_cast %37 : vector<1x1024xf32> to vector<1x1x1024xf32>
      tpu.vector_store %arg11[%c0_29, %c0_30, %c0_31], %40 {strides = array<i32>} : memref<1x1x1024xf32, #tpu.memory_space<vmem>>, vector<1x1x1024xf32>,
    } else {
    }
    return
  }
  func.func @transform_0(%arg0: i32, %arg1: i32, %arg2: i32) -> (i32, i32, i32) {
    %c1_i32 = arith.constant 1 : i32
    %0 = arith.muli %arg0, %c1_i32 : i32
    %1 = arith.addi %0, %arg2 : i32
    %c0_i32 = arith.constant 0 : i32
    %c0_i32_0 = arith.constant 0 : i32
    return %arg1, %1, %c0_i32 : i32, i32, i32
  }
  func.func @transform_1(%arg0: i32, %arg1: i32, %arg2: i32) -> (i32, i32, i32) {
    %c0_i32 = arith.constant 0 : i32
    %c0_i32_0 = arith.constant 0 : i32
    %c0_i32_1 = arith.constant 0 : i32
    return %arg1, %c0_i32, %c0_i32_0 : i32, i32, i32
  }
  func.func @transform_2(%arg0: i32, %arg1: i32, %arg2: i32) -> (i32, i32) {
    %c0_i32 = arith.constant 0 : i32
    %c0_i32_0 = arith.constant 0 : i32
    %c0_i32_1 = arith.constant 0 : i32
    return %c0_i32, %c0_i32_0 : i32, i32
  }
  func.func @transform_3(%arg0: i32, %arg1: i32, %arg2: i32) -> (i32, i32) {
    %c0_i32 = arith.constant 0 : i32
    %c0_i32_0 = arith.constant 0 : i32
    %c0_i32_1 = arith.constant 0 : i32
    return %c0_i32, %c0_i32_0 : i32, i32
  }
  func.func @transform_4(%arg0: i32, %arg1: i32, %arg2: i32) -> (i32, i32) {
    %c0_i32 = arith.constant 0 : i32
    %c0_i32_0 = arith.constant 0 : i32
    %c0_i32_1 = arith.constant 0 : i32
    return %c0_i32, %c0_i32_0 : i32, i32
  }
  func.func @transform_5(%arg0: i32, %arg1: i32, %arg2: i32) -> (i32, i32) {
    %c0_i32 = arith.constant 0 : i32
    %c0_i32_0 = arith.constant 0 : i32
    %c0_i32_1 = arith.constant 0 : i32
    return %c0_i32, %c0_i32_0 : i32, i32
  }
  func.func @transform_6(%arg0: i32, %arg1: i32, %arg2: i32) -> (i32, i32) {
    %c0_i32 = arith.constant 0 : i32
    %c0_i32_0 = arith.constant 0 : i32
    %c0_i32_1 = arith.constant 0 : i32
    return %c0_i32, %c0_i32_0 : i32, i32
  }
  func.func @transform_7(%arg0: i32, %arg1: i32, %arg2: i32) -> (i32, i32) {
    %c0_i32 = arith.constant 0 : i32
    %c0_i32_0 = arith.constant 0 : i32
    %c0_i32_1 = arith.constant 0 : i32
    return %c0_i32, %c0_i32_0 : i32, i32
  }
  func.func @transform_8(%arg0: i32, %arg1: i32, %arg2: i32) -> (i32, i32, i32) {
    %c0_i32 = arith.constant 0 : i32
    %c0_i32_0 = arith.constant 0 : i32
    return %arg1, %arg0, %c0_i32 : i32, i32, i32
  }
}

module attributes {stable_mosaic.version = 11 : i64} {
  func.func @_kernel_b2(%arg0: i32, %arg1: i32, %arg2: memref<1x16x8xbf16, #tpu.memory_space<vmem>>, %arg3: memref<1x64x64xbf16, #tpu.memory_space<vmem>>, %arg4: memref<1x1x1024xf32, #tpu.memory_space<vmem>>, %arg5: memref<8x64xbf16, #tpu.memory_space<vmem>>, %arg6: memref<1x64xf32, #tpu.memory_space<vmem>>, %arg7: memref<64x1024xbf16, #tpu.memory_space<vmem>>, %arg8: memref<1024x512xbf16, #tpu.memory_space<vmem>>, %arg9: memref<1x512xf32, #tpu.memory_space<vmem>>, %arg10: memref<512x128xbf16, #tpu.memory_space<vmem>>, %arg11: memref<1x128xf32, #tpu.memory_space<vmem>>, %arg12: memref<1x16x128xbf16, #tpu.memory_space<vmem>>) attributes {dimension_semantics = [#tpu.dimension_semantics<parallel>, #tpu.dimension_semantics<parallel>], iteration_bounds = array<i64: 2, 1>, scalar_prefetch = 0 : i64, scratch_operands = 0 : i64, tpu.core_type = #tpu.core_type<tc>, window_params = [{transform_indices = @transform_0, window_bounds = array<i64: 1, 16, 8>}, {transform_indices = @transform_1, window_bounds = array<i64: 1, 64, 64>}, {transform_indices = @transform_2, window_bounds = array<i64: 1, 1, 1024>}, {pipeline_mode = #tpu.pipeline_mode<synchronous>, transform_indices = @transform_3, window_bounds = array<i64: 8, 64>}, {pipeline_mode = #tpu.pipeline_mode<synchronous>, transform_indices = @transform_4, window_bounds = array<i64: 1, 64>}, {pipeline_mode = #tpu.pipeline_mode<synchronous>, transform_indices = @transform_5, window_bounds = array<i64: 64, 1024>}, {pipeline_mode = #tpu.pipeline_mode<synchronous>, transform_indices = @transform_6, window_bounds = array<i64: 1024, 512>}, {pipeline_mode = #tpu.pipeline_mode<synchronous>, transform_indices = @transform_7, window_bounds = array<i64: 1, 512>}, {pipeline_mode = #tpu.pipeline_mode<synchronous>, transform_indices = @transform_8, window_bounds = array<i64: 512, 128>}, {pipeline_mode = #tpu.pipeline_mode<synchronous>, transform_indices = @transform_9, window_bounds = array<i64: 1, 128>}, {transform_indices = @transform_10, window_bounds = array<i64: 1, 16, 128>}]} {
    %c0 = arith.constant 0 : index
    %c0_0 = arith.constant 0 : index
    %c0_1 = arith.constant 0 : index
    %0 = vector.load %arg2[%c0, %c0_0, %c0_1] : memref<1x16x8xbf16, #tpu.memory_space<vmem>>, vector<1x16x8xbf16>
    %1 = vector.shape_cast %0 : vector<1x16x8xbf16> to vector<16x8xbf16>
    %c0_2 = arith.constant 0 : index
    %c0_3 = arith.constant 0 : index
    %2 = vector.load %arg5[%c0_2, %c0_3] : memref<8x64xbf16, #tpu.memory_space<vmem>>, vector<8x64xbf16>
    %cst = arith.constant dense<0.000000e+00> : vector<16x64xf32>
    %3 = tpu.matmul %1, %2, %cst {dimension_numbers = #tpu.dot_dimension_numbers<[1], [0], [0], [1], [0, 0, 1, 1], [], []>} : vector<16x8xbf16>, vector<8x64xbf16>, vector<16x64xf32> -> vector<16x64xf32>
    %c0_4 = arith.constant 0 : index
    %c0_5 = arith.constant 0 : index
    %4 = vector.load %arg6[%c0_4, %c0_5] : memref<1x64xf32, #tpu.memory_space<vmem>>, vector<1x64xf32>
    %5 = vector.broadcast %4 : vector<1x64xf32> to vector<16x64xf32>
    %6 = arith.addf %3, %5 : vector<16x64xf32>
    %cst_6 = arith.constant 0.000000e+00 : f32
    %7 = vector.broadcast %cst_6 : f32 to vector<16x64xf32>
    %8 = arith.maximumf %6, %7 : vector<16x64xf32>
    %9 = arith.truncf %8 : vector<16x64xf32> to vector<16x64xbf16>
    %c0_7 = arith.constant 0 : index
    %c0_8 = arith.constant 0 : index
    %c0_9 = arith.constant 0 : index
    %10 = vector.load %arg3[%c0_7, %c0_8, %c0_9] : memref<1x64x64xbf16, #tpu.memory_space<vmem>>, vector<1x64x64xbf16>
    %11 = vector.shape_cast %10 : vector<1x64x64xbf16> to vector<64x64xbf16>
    %cst_10 = arith.constant dense<0.000000e+00> : vector<16x64xf32>
    %12 = tpu.matmul %9, %11, %cst_10 {dimension_numbers = #tpu.dot_dimension_numbers<[1], [0], [0], [1], [0, 0, 1, 1], [], []>} : vector<16x64xbf16>, vector<64x64xbf16>, vector<16x64xf32> -> vector<16x64xf32>
    %13 = arith.truncf %12 : vector<16x64xf32> to vector<16x64xbf16>
    %c0_11 = arith.constant 0 : index
    %c0_12 = arith.constant 0 : index
    %14 = vector.load %arg7[%c0_11, %c0_12] : memref<64x1024xbf16, #tpu.memory_space<vmem>>, vector<64x1024xbf16>
    %cst_13 = arith.constant dense<0.000000e+00> : vector<16x1024xf32>
    %15 = tpu.matmul %13, %14, %cst_13 {dimension_numbers = #tpu.dot_dimension_numbers<[1], [0], [0], [1], [0, 0, 1, 1], [], []>} : vector<16x64xbf16>, vector<64x1024xbf16>, vector<16x1024xf32> -> vector<16x1024xf32>
    %c0_14 = arith.constant 0 : index
    %c0_15 = arith.constant 0 : index
    %c0_16 = arith.constant 0 : index
    %16 = vector.load %arg4[%c0_14, %c0_15, %c0_16] : memref<1x1x1024xf32, #tpu.memory_space<vmem>>, vector<1x1x1024xf32>
    %17 = vector.shape_cast %16 : vector<1x1x1024xf32> to vector<1x1024xf32>
    %18 = vector.broadcast %17 : vector<1x1024xf32> to vector<16x1024xf32>
    %19 = arith.addf %15, %18 : vector<16x1024xf32>
    %cst_17 = arith.constant 0.000000e+00 : f32
    %20 = vector.broadcast %cst_17 : f32 to vector<16x1024xf32>
    %21 = arith.maximumf %19, %20 : vector<16x1024xf32>
    %22 = arith.truncf %21 : vector<16x1024xf32> to vector<16x1024xbf16>
    %c0_18 = arith.constant 0 : index
    %c0_19 = arith.constant 0 : index
    %23 = vector.load %arg8[%c0_18, %c0_19] : memref<1024x512xbf16, #tpu.memory_space<vmem>>, vector<1024x512xbf16>
    %cst_20 = arith.constant dense<0.000000e+00> : vector<16x512xf32>
    %24 = tpu.matmul %22, %23, %cst_20 {dimension_numbers = #tpu.dot_dimension_numbers<[1], [0], [0], [1], [0, 0, 1, 1], [], []>} : vector<16x1024xbf16>, vector<1024x512xbf16>, vector<16x512xf32> -> vector<16x512xf32>
    %c0_21 = arith.constant 0 : index
    %c0_22 = arith.constant 0 : index
    %25 = vector.load %arg9[%c0_21, %c0_22] : memref<1x512xf32, #tpu.memory_space<vmem>>, vector<1x512xf32>
    %26 = vector.broadcast %25 : vector<1x512xf32> to vector<16x512xf32>
    %27 = arith.addf %24, %26 : vector<16x512xf32>
    %cst_23 = arith.constant 0.000000e+00 : f32
    %28 = vector.broadcast %cst_23 : f32 to vector<16x512xf32>
    %29 = arith.maximumf %27, %28 : vector<16x512xf32>
    %30 = arith.truncf %29 : vector<16x512xf32> to vector<16x512xbf16>
    %c0_24 = arith.constant 0 : index
    %c0_25 = arith.constant 0 : index
    %31 = vector.load %arg10[%c0_24, %c0_25] : memref<512x128xbf16, #tpu.memory_space<vmem>>, vector<512x128xbf16>
    %cst_26 = arith.constant dense<0.000000e+00> : vector<16x128xf32>
    %32 = tpu.matmul %30, %31, %cst_26 {dimension_numbers = #tpu.dot_dimension_numbers<[1], [0], [0], [1], [0, 0, 1, 1], [], []>} : vector<16x512xbf16>, vector<512x128xbf16>, vector<16x128xf32> -> vector<16x128xf32>
    %c0_27 = arith.constant 0 : index
    %c0_28 = arith.constant 0 : index
    %33 = vector.load %arg11[%c0_27, %c0_28] : memref<1x128xf32, #tpu.memory_space<vmem>>, vector<1x128xf32>
    %34 = vector.broadcast %33 : vector<1x128xf32> to vector<16x128xf32>
    %35 = arith.addf %32, %34 : vector<16x128xf32>
    %36 = arith.truncf %35 : vector<16x128xf32> to vector<16x128xbf16>
    %c0_29 = arith.constant 0 : index
    %c0_30 = arith.constant 0 : index
    %c0_31 = arith.constant 0 : index
    %37 = vector.load %arg12[%c0_29, %c0_30, %c0_31] : memref<1x16x128xbf16, #tpu.memory_space<vmem>>, vector<1x16x128xbf16>
    %38 = vector.shape_cast %37 : vector<1x16x128xbf16> to vector<16x128xbf16>
    %39 = vector.shape_cast %36 : vector<16x128xbf16> to vector<1x16x128xbf16>
    tpu.vector_store %arg12[%c0_29, %c0_30, %c0_31], %39 {strides = array<i32>} : memref<1x16x128xbf16, #tpu.memory_space<vmem>>, vector<1x16x128xbf16>,
    return
  }
  func.func @transform_0(%arg0: i32, %arg1: i32) -> (i32, i32, i32) {
    %c0_i32 = arith.constant 0 : i32
    %c0_i32_0 = arith.constant 0 : i32
    return %arg0, %arg1, %c0_i32 : i32, i32, i32
  }
  func.func @transform_1(%arg0: i32, %arg1: i32) -> (i32, i32, i32) {
    %c0_i32 = arith.constant 0 : i32
    %c0_i32_0 = arith.constant 0 : i32
    %c0_i32_1 = arith.constant 0 : i32
    return %arg0, %c0_i32, %c0_i32_0 : i32, i32, i32
  }
  func.func @transform_2(%arg0: i32, %arg1: i32) -> (i32, i32, i32) {
    %c0_i32 = arith.constant 0 : i32
    %c0_i32_0 = arith.constant 0 : i32
    %c0_i32_1 = arith.constant 0 : i32
    return %arg0, %c0_i32, %c0_i32_0 : i32, i32, i32
  }
  func.func @transform_3(%arg0: i32, %arg1: i32) -> (i32, i32) {
    %c0_i32 = arith.constant 0 : i32
    %c0_i32_0 = arith.constant 0 : i32
    %c0_i32_1 = arith.constant 0 : i32
    return %c0_i32, %c0_i32_0 : i32, i32
  }
  func.func @transform_4(%arg0: i32, %arg1: i32) -> (i32, i32) {
    %c0_i32 = arith.constant 0 : i32
    %c0_i32_0 = arith.constant 0 : i32
    %c0_i32_1 = arith.constant 0 : i32
    return %c0_i32, %c0_i32_0 : i32, i32
  }
  func.func @transform_5(%arg0: i32, %arg1: i32) -> (i32, i32) {
    %c0_i32 = arith.constant 0 : i32
    %c0_i32_0 = arith.constant 0 : i32
    %c0_i32_1 = arith.constant 0 : i32
    return %c0_i32, %c0_i32_0 : i32, i32
  }
  func.func @transform_6(%arg0: i32, %arg1: i32) -> (i32, i32) {
    %c0_i32 = arith.constant 0 : i32
    %c0_i32_0 = arith.constant 0 : i32
    %c0_i32_1 = arith.constant 0 : i32
    return %c0_i32, %c0_i32_0 : i32, i32
  }
  func.func @transform_7(%arg0: i32, %arg1: i32) -> (i32, i32) {
    %c0_i32 = arith.constant 0 : i32
    %c0_i32_0 = arith.constant 0 : i32
    %c0_i32_1 = arith.constant 0 : i32
    return %c0_i32, %c0_i32_0 : i32, i32
  }
  func.func @transform_8(%arg0: i32, %arg1: i32) -> (i32, i32) {
    %c0_i32 = arith.constant 0 : i32
    %c0_i32_0 = arith.constant 0 : i32
    %c0_i32_1 = arith.constant 0 : i32
    return %c0_i32, %c0_i32_0 : i32, i32
  }
  func.func @transform_9(%arg0: i32, %arg1: i32) -> (i32, i32) {
    %c0_i32 = arith.constant 0 : i32
    %c0_i32_0 = arith.constant 0 : i32
    %c0_i32_1 = arith.constant 0 : i32
    return %c0_i32, %c0_i32_0 : i32, i32
  }
  func.func @transform_10(%arg0: i32, %arg1: i32) -> (i32, i32, i32) {
    %c0_i32 = arith.constant 0 : i32
    %c0_i32_0 = arith.constant 0 : i32
    return %arg0, %arg1, %c0_i32 : i32, i32, i32
  }
}

</mosaic_0001>

<llo_original>
// kernel: pointnetfeat_forward.3
$region0: #{pointnetfeat_forward.3}
  #allocation0 [shape = 'u32[]', space=smem, size = 0x4, offset = 0x4, fixed_abs, tag = 'smem constant byte address 0x4 - core index']
  #allocation1 [shape = 'u32[144,128]{1,0:T(1,128)}', space=vmem, size = 0x12000, scoped, tag = 'internal scratch']
  %s0 = inlined_call_operand.vmem [shape: bf16[2,16,8], index: 0, kind: input, shape index: {}]
  %s1 = inlined_call_operand.vmem [shape: bf16[8,64], index: 1, kind: input, shape index: {}]
  %s2 = inlined_call_operand.vmem [shape: f32[1,64], index: 2, kind: input, shape index: {}]
  %s3 = inlined_call_operand.vmem [shape: bf16[64,64], index: 3, kind: input, shape index: {}]
  %s4 = inlined_call_operand.vmem [shape: f32[1,64], index: 4, kind: input, shape index: {}]
  %s5 = inlined_call_operand.vmem [shape: bf16[64,128], index: 5, kind: input, shape index: {}]
  %s6 = inlined_call_operand.vmem [shape: f32[1,128], index: 6, kind: input, shape index: {}]
  %s7 = inlined_call_operand.vmem [shape: bf16[128,1024], index: 7, kind: input, shape index: {}]
  %s8 = inlined_call_operand.vmem [shape: f32[1,1024], index: 8, kind: input, shape index: {}]
  %s9 = inlined_call_operand.vmem [shape: f32[2,1,1024], index: 9, kind: output, shape index: {}]
  %s10 = sld [smem:[#allocation0]]
  $region77: #{pointnetfeat_forward.3} parent=0
    _
  %s12 = ssub.s32 1, %s10
  %s13 = scalar_select 0, %s12, %s10
  loop: start=0, step=1, limit=4
  $region2: #{pointnetfeat_forward.3} parent=0 // loop_pre_header
    _
  $region3: #{pointnetfeat_forward.3} parent=0 // loop_header
    %s15 = sphi 0, %s19
    %p16 = scmp.ge.s32.totalorder %s15, 4
    %s22 = sphi 0, %s41
    %s23 = sphi 0, %s37
    %s24 = sphi 0, %s33
    %s25 = sphi 0, %s22
    %s26 = sphi 0, %s23
    %s27 = sphi 0, %s24
    %s28 = sphi 0, %s25
    %s29 = sphi 0, %s26
    %s30 = sphi 0, %s27
    %s48 = sphi 0, %s50
    %s51 = sphi 0, %s48
    %s52 = sphi 0, %s51
    %s68 = sphi 0, %s52
    %s72 = sphi 0, %s72
    %s74 = sphi 0, %s72
    %s75 = sphi 0, %s74
    %s89 = sphi 0, %s75
    %s93 = sphi 0, %s93
    %s95 = sphi 0, %s93
    %s96 = sphi 0, %s95
    %s110 = sphi 0, %s96
    %s114 = sphi 0, %s114
    %s116 = sphi 0, %s114
    %s117 = sphi 0, %s116
    %s131 = sphi 0, %s117
    %s135 = sphi 0, %s135
    %s137 = sphi 0, %s135
    %s138 = sphi 0, %s137
    %s152 = sphi 0, %s138
    %s156 = sphi 0, %s156
    %s158 = sphi 0, %s156
    %s159 = sphi 0, %s158
    %s173 = sphi 0, %s159
    %s177 = sphi 0, %s177
    %s179 = sphi 0, %s177
    %s180 = sphi 0, %s179
    %s194 = sphi 0, %s180
    %s198 = sphi 0, %s198
    %s200 = sphi 0, %s198
    %s201 = sphi 0, %s200
    %s215 = sphi 0, %s201
    %s219 = sphi 0, %s219
    %s221 = sphi 0, %s219
    %s222 = sphi 0, %s221
    %s236 = sphi 0, %s222
    %s244 = sphi 0, %s246
    %s247 = sphi 0, %s244
    %s248 = sphi 0, %s247
    %s264 = sphi 0, %s248
  $region4: #{pointnetfeat_forward.3} parent=0 // loop_header_branch
    %18 = sbr.rel (%p16) target = $region8
  $region5: #{pointnetfeat_forward.3} parent=0 // loop_body
    %s20 = ssub.s32 %s15, 1
    %s21 = ssub.s32 %s15, 2
    %s31 = sadd.s32 1, %s24
    %p32 = scmp.ge.s32.totalorder %s31, 1
    %s33 = scalar_select %p32, 0, %s31
    %s34 = sadd.s32 1, %s23
    %s35 = scalar_select %p32, %s34, %s23
    %p36 = scmp.ge.s32.totalorder %s35, 2
    %s37 = scalar_select %p36, 0, %s35
    %s38 = sadd.s32 1, %s22
    %s39 = scalar_select %p36, %s38, %s22
    %p40 = scmp.ge.s32.totalorder %s39, 1
    %s41 = scalar_select %p40, 0, %s39
    %s42 = sadd.s32 %s22, %s24
    %s43 = sadd.s32 %s41, %s33
    %s44 = ssub.s32 %s23, %s37
    %s45 = ssub.s32 %s42, %s43
    %s46 = sor.u32 %s44, %s45
    %p47 = scmp.eq.s32.totalorder %s46, 0
    %s49 = sadd.s32 %s48, 1
    %s50 = scalar_select %p47, %s48, %s49
    %p53 = pneg %p47
    %p54 = scmp.eq.s32.totalorder %s15, 1
    %p55 = por %p53, %p54
    %p56 = scmp.ne.s32.totalorder %s48, %s51
    %p57 = scmp.eq.s32.totalorder %s15, 0
    %p58 = por %p56, %p57
    %p59 = scmp.ne.s32.totalorder %s48, %s51
    %p60 = scmp.eq.s32.totalorder %s20, 1
    %p61 = por %p59, %p60
    %p62 = scmp.ne.s32.totalorder %s51, %s52
    %p63 = scmp.eq.s32.totalorder %s20, 0
    %p64 = por %p62, %p63
    %p65 = scmp.ne.s32.totalorder %s51, %s52
    %p66 = scmp.eq.s32.totalorder %s21, 1
    %p67 = por %p65, %p66
    %p69 = scmp.ne.s32.totalorder %s52, %s68
    %p70 = scmp.eq.s32.totalorder %s21, 0
    %p71 = por %p69, %p70
    %s73 = sadd.s32 %s72, 1
    %p76 = scmp.eq.s32.totalorder %s15, 1
    %p77 = scmp.ne.s32.totalorder %s72, %s74
    %p78 = scmp.eq.s32.totalorder %s15, 0
    %p79 = por %p77, %p78
    %p80 = scmp.ne.s32.totalorder %s72, %s74
    %p81 = scmp.eq.s32.totalorder %s20, 1
    %p82 = por %p80, %p81
    %p83 = scmp.ne.s32.totalorder %s74, %s75
    %p84 = scmp.eq.s32.totalorder %s20, 0
    %p85 = por %p83, %p84
    %p86 = scmp.ne.s32.totalorder %s74, %s75
    %p87 = scmp.eq.s32.totalorder %s21, 1
    %p88 = por %p86, %p87
    %p90 = scmp.ne.s32.totalorder %s75, %s89
    %p91 = scmp.eq.s32.totalorder %s21, 0
    %p92 = por %p90, %p91
    %s94 = sadd.s32 %s93, 1
    %p97 = scmp.eq.s32.totalorder %s15, 1
    %p98 = scmp.ne.s32.totalorder %s93, %s95
    %p99 = scmp.eq.s32.totalorder %s15, 0
    %p100 = por %p98, %p99
    %p101 = scmp.ne.s32.totalorder %s93, %s95
    %p102 = scmp.eq.s32.totalorder %s20, 1
    %p103 = por %p101, %p102
    %p104 = scmp.ne.s32.totalorder %s95, %s96
    %p105 = scmp.eq.s32.totalorder %s20, 0
    %p106 = por %p104, %p105
    %p107 = scmp.ne.s32.totalorder %s95, %s96
    %p108 = scmp.eq.s32.totalorder %s21, 1
    %p109 = por %p107, %p108
    %p111 = scmp.ne.s32.totalorder %s96, %s110
    %p112 = scmp.eq.s32.totalorder %s21, 0
    %p113 = por %p111, %p112
    %s115 = sadd.s32 %s114, 1
    %p118 = scmp.eq.s32.totalorder %s15, 1
    %p119 = scmp.ne.s32.totalorder %s114, %s116
    %p120 = scmp.eq.s32.totalorder %s15, 0
    %p121 = por %p119, %p120
    %p122 = scmp.ne.s32.totalorder %s114, %s116
    %p123 = scmp.eq.s32.totalorder %s20, 1
    %p124 = por %p122, %p123
    %p125 = scmp.ne.s32.totalorder %s116, %s117
    %p126 = scmp.eq.s32.totalorder %s20, 0
    %p127 = por %p125, %p126
    %p128 = scmp.ne.s32.totalorder %s116, %s117
    %p129 = scmp.eq.s32.totalorder %s21, 1
    %p130 = por %p128, %p129
    %p132 = scmp.ne.s32.totalorder %s117, %s131
    %p133 = scmp.eq.s32.totalorder %s21, 0
    %p134 = por %p132, %p133
    %s136 = sadd.s32 %s135, 1
    %p139 = scmp.eq.s32.totalorder %s15, 1
    %p140 = scmp.ne.s32.totalorder %s135, %s137
    %p141 = scmp.eq.s32.totalorder %s15, 0
    %p142 = por %p140, %p141
    %p143 = scmp.ne.s32.totalorder %s135, %s137
    %p144 = scmp.eq.s32.totalorder %s20, 1
    %p145 = por %p143, %p144
    %p146 = scmp.ne.s32.totalorder %s137, %s138
    %p147 = scmp.eq.s32.totalorder %s20, 0
    %p148 = por %p146, %p147
    %p149 = scmp.ne.s32.totalorder %s137, %s138
    %p150 = scmp.eq.s32.totalorder %s21, 1
    %p151 = por %p149, %p150
    %p153 = scmp.ne.s32.totalorder %s138, %s152
    %p154 = scmp.eq.s32.totalorder %s21, 0
    %p155 = por %p153, %p154
    %s157 = sadd.s32 %s156, 1
    %p160 = scmp.eq.s32.totalorder %s15, 1
    %p161 = scmp.ne.s32.totalorder %s156, %s158
    %p162 = scmp.eq.s32.totalorder %s15, 0
    %p163 = por %p161, %p162
    %p164 = scmp.ne.s32.totalorder %s156, %s158
    %p165 = scmp.eq.s32.totalorder %s20, 1
    %p166 = por %p164, %p165
    %p167 = scmp.ne.s32.totalorder %s158, %s159
    %p168 = scmp.eq.s32.totalorder %s20, 0
    %p169 = por %p167, %p168
    %p170 = scmp.ne.s32.totalorder %s158, %s159
    %p171 = scmp.eq.s32.totalorder %s21, 1
    %p172 = por %p170, %p171
    %p174 = scmp.ne.s32.totalorder %s159, %s173
    %p175 = scmp.eq.s32.totalorder %s21, 0
    %p176 = por %p174, %p175
    %s178 = sadd.s32 %s177, 1
    %p181 = scmp.eq.s32.totalorder %s15, 1
    %p182 = scmp.ne.s32.totalorder %s177, %s179
    %p183 = scmp.eq.s32.totalorder %s15, 0
    %p184 = por %p182, %p183
    %p185 = scmp.ne.s32.totalorder %s177, %s179
    %p186 = scmp.eq.s32.totalorder %s20, 1
    %p187 = por %p185, %p186
    %p188 = scmp.ne.s32.totalorder %s179, %s180
    %p189 = scmp.eq.s32.totalorder %s20, 0
    %p190 = por %p188, %p189
    %p191 = scmp.ne.s32.totalorder %s179, %s180
    %p192 = scmp.eq.s32.totalorder %s21, 1
    %p193 = por %p191, %p192
    %p195 = scmp.ne.s32.totalorder %s180, %s194
    %p196 = scmp.eq.s32.totalorder %s21, 0
    %p197 = por %p195, %p196
    %s199 = sadd.s32 %s198, 1
    %p202 = scmp.eq.s32.totalorder %s15, 1
    %p203 = scmp.ne.s32.totalorder %s198, %s200
    %p204 = scmp.eq.s32.totalorder %s15, 0
    %p205 = por %p203, %p204
    %p206 = scmp.ne.s32.totalorder %s198, %s200
    %p207 = scmp.eq.s32.totalorder %s20, 1
    %p208 = por %p206, %p207
    %p209 = scmp.ne.s32.totalorder %s200, %s201
    %p210 = scmp.eq.s32.totalorder %s20, 0
    %p211 = por %p209, %p210
    %p212 = scmp.ne.s32.totalorder %s200, %s201
    %p213 = scmp.eq.s32.totalorder %s21, 1
    %p214 = por %p212, %p213
    %p216 = scmp.ne.s32.totalorder %s201, %s215
    %p217 = scmp.eq.s32.totalorder %s21, 0
    %p218 = por %p216, %p217
    %s220 = sadd.s32 %s219, 1
    %p223 = scmp.eq.s32.totalorder %s15, 1
    %p224 = scmp.ne.s32.totalorder %s219, %s221
    %p225 = scmp.eq.s32.totalorder %s15, 0
    %p226 = por %p224, %p225
    %p227 = scmp.ne.s32.totalorder %s219, %s221
    %p228 = scmp.eq.s32.totalorder %s20, 1
    %p229 = por %p227, %p228
    %p230 = scmp.ne.s32.totalorder %s221, %s222
    %p231 = scmp.eq.s32.totalorder %s20, 0
    %p232 = por %p230, %p231
    %p233 = scmp.ne.s32.totalorder %s221, %s222
    %p234 = scmp.eq.s32.totalorder %s21, 1
    %p235 = por %p233, %p234
    %p237 = scmp.ne.s32.totalorder %s222, %s236
    %p238 = scmp.eq.s32.totalorder %s21, 0
    %p239 = por %p237, %p238
    %s240 = ssub.s32 %s23, %s37
    %s241 = ssub.s32 %s22, %s41
    %s242 = sor.u32 %s240, %s241
    %p243 = scmp.eq.s32.totalorder %s242, 0
    %s245 = sadd.s32 %s244, 1
    %s246 = scalar_select %p243, %s244, %s245
    %p249 = pneg %p243
    %p250 = scmp.eq.s32.totalorder %s15, 1
    %p251 = por %p249, %p250
    %p252 = scmp.ne.s32.totalorder %s244, %s247
    %p253 = scmp.eq.s32.totalorder %s15, 0
    %p254 = por %p252, %p253
    %p255 = scmp.ne.s32.totalorder %s244, %s247
    %p256 = scmp.eq.s32.totalorder %s20, 1
    %p257 = por %p255, %p256
    %p258 = scmp.ne.s32.totalorder %s247, %s248
    %p259 = scmp.eq.s32.totalorder %s20, 0
    %p260 = por %p258, %p259
    %p261 = scmp.ne.s32.totalorder %s247, %s248
    %p262 = scmp.eq.s32.totalorder %s21, 1
    %p263 = por %p261, %p262
    %p265 = scmp.ne.s32.totalorder %s248, %s264
    %p266 = scmp.eq.s32.totalorder %s21, 0
    %p267 = por %p265, %p266
    %p268 = scmp.le.s32.totalorder 1, %s15
    %p269 = scmp.lt.s32.totalorder %s15, 3
    %p270 = pnand %p268, %p269
    %p271 = pneg %p270
    // Predicated region
    $region9: #{pointnetfeat_forward.3} parent=5 // pred_check
      _
    $region10: #{pointnetfeat_forward.3} parent=5 // pred_check_branch
      %273 = sbr.rel (%p270) target = $region12
    $region11: #{pointnetfeat_forward.3} parent=5 // pred_region
      %s274 = ssub.s32 %s15, 1
      // Predicated region
      $region13: #{pointnetfeat_forward.3} parent=11 // pred_check
        %p275 = pneg %p85
      $region14: #{pointnetfeat_forward.3} parent=11 // pred_check_branch
        %277 = sbr.rel (%p275) target = $region16
      $region15: #{pointnetfeat_forward.3} parent=11 // pred_region
        _
      $region16: #{pointnetfeat_forward.3} parent=11 // pred_fallthru
        _
      // Predicated region
      $region17: #{pointnetfeat_forward.3} parent=11 // pred_check
        %p278 = pneg %p106
      $region18: #{pointnetfeat_forward.3} parent=11 // pred_check_branch
        %280 = sbr.rel (%p278) target = $region20
      $region19: #{pointnetfeat_forward.3} parent=11 // pred_region
        _
      $region20: #{pointnetfeat_forward.3} parent=11 // pred_fallthru
        _
      // Predicated region
      $region21: #{pointnetfeat_forward.3} parent=11 // pred_check
        %p281 = pneg %p127
      $region22: #{pointnetfeat_forward.3} parent=11 // pred_check_branch
        %283 = sbr.rel (%p281) target = $region24
      $region23: #{pointnetfeat_forward.3} parent=11 // pred_region
        _
      $region24: #{pointnetfeat_forward.3} parent=11 // pred_fallthru
        _
      // Predicated region
      $region25: #{pointnetfeat_forward.3} parent=11 // pred_check
        %p284 = pneg %p148
      $region26: #{pointnetfeat_forward.3} parent=11 // pred_check_branch
        %286 = sbr.rel (%p284) target = $region28
      $region27: #{pointnetfeat_forward.3} parent=11 // pred_region
        _
      $region28: #{pointnetfeat_forward.3} parent=11 // pred_fallthru
        _
      // Predicated region
      $region29: #{pointnetfeat_forward.3} parent=11 // pred_check
        %p287 = pneg %p169
      $region30: #{pointnetfeat_forward.3} parent=11 // pred_check_branch
        %289 = sbr.rel (%p287) target = $region32
      $region31: #{pointnetfeat_forward.3} parent=11 // pred_region
        _
      $region32: #{pointnetfeat_forward.3} parent=11 // pred_fallthru
        _
      // Predicated region
      $region33: #{pointnetfeat_forward.3} parent=11 // pred_check
        %p290 = pneg %p190
      $region34: #{pointnetfeat_forward.3} parent=11 // pred_check_branch
        %292 = sbr.rel (%p290) target = $region36
      $region35: #{pointnetfeat_forward.3} parent=11 // pred_region
        _
      $region36: #{pointnetfeat_forward.3} parent=11 // pred_fallthru
        _
      // Predicated region
      $region37: #{pointnetfeat_forward.3} parent=11 // pred_check
        %p293 = pneg %p211
      $region38: #{pointnetfeat_forward.3} parent=11 // pred_check_branch
        %295 = sbr.rel (%p293) target = $region40
      $region39: #{pointnetfeat_forward.3} parent=11 // pred_region
        _
      $region40: #{pointnetfeat_forward.3} parent=11 // pred_fallthru
        _
      // Predicated region
      $region41: #{pointnetfeat_forward.3} parent=11 // pred_check
        %p296 = pneg %p232
      $region42: #{pointnetfeat_forward.3} parent=11 // pred_check_branch
        %298 = sbr.rel (%p296) target = $region44
      $region43: #{pointnetfeat_forward.3} parent=11 // pred_region
        _
      $region44: #{pointnetfeat_forward.3} parent=11 // pred_fallthru
        _
    $region12: #{pointnetfeat_forward.3} parent=5 // pred_fallthru
      _
    %p299 = scmp.lt.s32.totalorder %s15, 2
    // Predicated region
    $region45: #{pointnetfeat_forward.3} parent=5 // pred_check
      %p300 = pneg %p299
    $region46: #{pointnetfeat_forward.3} parent=5 // pred_check_branch
      %302 = sbr.rel (%p300) target = $region48
    $region47: #{pointnetfeat_forward.3} parent=5 // pred_region
      // Predicated region
      $region49: #{pointnetfeat_forward.3} parent=47 // pred_check
        %p303 = pneg %p58
      $region50: #{pointnetfeat_forward.3} parent=47 // pred_check_branch
        %305 = sbr.rel (%p303) target = $region52
      $region51: #{pointnetfeat_forward.3} parent=47 // pred_region
        %s306 = sadd.s32 %s22, %s24
        %s307 = smul.u32 2, %s306
        %p308 = scmp.lt.s32.totalorder %s23, 1
        %s309 = scalar_select %p308, %s23, 1
        %p310 = scmp.lt.s32.totalorder %s307, 1
        %s311 = scalar_select %p310, %s307, 1
        %s312 = smul.addr %s309, 2
        %s313 = sadd.s32 %s311, %s312
        %s314 = smul.addr %s313, 4
        %s315 = scalar_lea.vmem %s0, %s314
        %s316 = sadd.s32 %s22, %s24
        %s317 = smul.u32 2, %s316
      $region52: #{pointnetfeat_forward.3} parent=47 // pred_fallthru
        _
    $region48: #{pointnetfeat_forward.3} parent=5 // pred_fallthru
      _
    %p318 = scmp.le.s32.totalorder 1, %s15
    %p319 = scmp.lt.s32.totalorder %s15, 3
    %p320 = pnand %p318, %p319
    %p321 = pneg %p320
    // Predicated region
    $region53: #{pointnetfeat_forward.3} parent=5 // pred_check
      _
    $region54: #{pointnetfeat_forward.3} parent=5 // pred_check_branch
      %323 = sbr.rel (%p320) target = $region56
    $region55: #{pointnetfeat_forward.3} parent=5 // pred_region
      %s324 = ssub.s32 %s15, 1
      %s325 = sadd.s32 %s25, %s27
      %s326 = smul.u32 2, %s325
      %p327 = scmp.lt.s32.totalorder %s26, 1
      %s328 = scalar_select %p327, %s26, 1
      %p329 = scmp.lt.s32.totalorder %s326, 1
      %s330 = scalar_select %p329, %s326, 1
      %s331 = smul.addr %s328, 2
      %s332 = sadd.s32 %s330, %s331
      %s333 = smul.addr %s332, 4
      %s334 = scalar_lea.vmem %s0, %s333
      %p335 = pneg %p64
      %p336 = pneg %p61
      %p337 = pneg %p85
      %p338 = pneg %p82
      %p339 = pneg %p106
      %p340 = pneg %p103
      %p341 = pneg %p127
      %p342 = pneg %p124
      %p343 = pneg %p148
      %p344 = pneg %p145
      %p345 = pneg %p169
      %p346 = pneg %p166
      %p347 = pneg %p190
      %p348 = pneg %p187
      %p349 = pneg %p211
      %p350 = pneg %p208
      %p351 = pneg %p232
      %p352 = pneg %p229
      %p353 = pneg %p260
      %p354 = pneg %p257
      %p355 = scmp.lt.s32.totalorder %s26, 1
      %s356 = scalar_select %p355, %s26, 1
      %p357 = scmp.lt.s32.totalorder %s25, 0
      %s358 = scalar_select %p357, %s25, 0
      %s359 = smul.addr %s358, 8
      %s360 = smul.addr %s356, 8
      %s361 = sadd.s32 %s359, %s360
      %s362 = scalar_lea.vmem %s9, %s361
      %s363 = sadd.s32 %s25, %s27
      %s364 = smul.u32 2, %s363
      %p365 = scmp.lt.s32.totalorder %s26, 1
      %s366 = scalar_select %p365, %s26, 1
      %p367 = scmp.lt.s32.totalorder %s364, 1
      %s368 = scalar_select %p367, %s364, 1
      %s369 = smul.addr %s366, 2
      %s370 = sadd.s32 %s368, %s369
      %s371 = smul.addr %s370, 4
      %s372 = scalar_lea.vmem %s0, %s371
      %s373 = sadd.s32 %s25, %s27
      %s374 = smul.u32 2, %s373
      %p375 = scmp.lt.s32.totalorder %s26, 1
      %s376 = scalar_select %p375, %s26, 1
      %p377 = scmp.lt.s32.totalorder %s25, 0
      %s378 = scalar_select %p377, %s25, 0
      %s379 = smul.addr %s378, 8
      %s380 = smul.addr %s376, 8
      %s381 = sadd.s32 %s379, %s380
      %s382 = scalar_lea.vmem %s9, %s381
      %v384 = vld [vmem:[%s372] sm:$0xf]
      %v385 = vld [vmem:[%s372 + $0x4] sm:$0xf]
      %v386 = vld [vmem:[%s1] sm:$0xf]
      %v387 = vld [vmem:[%s2] sm:$0x1]
      %v389 = vlaneseq
      %v390 = vshrl.u32 %v389, 7
      %v391 = vsub.s32 0, %v390
      %v392 = vrot.slane %v387, %v391
      %v396 = vunpack.c.l.b16 %v384
      %v397 = vunpack.c.l.b16 %v385
      %v398 = vpack.c.b16 %v397, %v396
      %vm399 = vcmask 64512
      %v401 = vsel %vm399, %v398, 0
      %vm403 = vcmask 1043456
      %v405 = vsel %vm403, %v386, 0
      %407 = vmatprep.subr.bf16.mxu0 0
      %408 = vmatpush1.bf16.msra.mxu0 %v405
      %409 = vmatprep.subr.bf16.mxu0 0
      %410 = vmatpush1.bf16.msra.mxu0 0
      %411 = vmatprep.subr.bf16.mxu0 0
      %412 = vmatpush1.bf16.msra.mxu0 0
      %413 = vmatprep.subr.bf16.mxu0 0
      %414 = vmatpush1.bf16.msra.mxu0 0
      %415 = vmatprep.subr.bf16.mxu0 0
      %416 = vmatpush1.bf16.msra.mxu0 0
      %417 = vmatprep.subr.bf16.mxu0 0
      %418 = vmatpush1.bf16.msra.mxu0 0
      %419 = vmatprep.subr.bf16.mxu0 0
      %420 = vmatpush1.bf16.msra.mxu0 0
      %421 = vmatprep.subr.bf16.mxu0 0
      %422 = vmatpush1.bf16.msra.mxu0 0
      %423 = vmatprep.subr.bf16.mxu0 0
      %424 = vmatpush1.bf16.msra.mxu0 0
      %425 = vmatprep.subr.bf16.mxu0 0
      %426 = vmatpush1.bf16.msra.mxu0 0
      %427 = vmatprep.subr.bf16.mxu0 0
      %428 = vmatpush1.bf16.msra.mxu0 0
      %429 = vmatprep.subr.bf16.mxu0 0
      %430 = vmatpush1.bf16.msra.mxu0 0
      %431 = vmatprep.subr.bf16.mxu0 0
      %432 = vmatpush1.bf16.msra.mxu0 0
      %433 = vmatprep.subr.bf16.mxu0 0
      %434 = vmatpush1.bf16.msra.mxu0 0
      %435 = vmatprep.subr.bf16.mxu0 0
      %436 = vmatpush1.bf16.msra.mxu0 0
      %437 = vmatprep.subr.bf16.mxu0 0
      %438 = vmatpush1.bf16.msra.mxu0 0
      %439 = vmatprep.mubr.bf16.mxu0 0
      %440 = vmatmul.mubr.bf16.gmra.mrb[0].mxu0 %v401
      %v441 = vpop.f32.mrb[0].mxu0
      %v442 = vadd.f32 %v392, %v441
      %v443 = vpop.f32.mrb[0].mxu0
      %v444 = vpop.f32.mrb[0].mxu0
      %v445 = vadd.f32 %v392, %v444
      %v446 = vpop.f32.mrb[0].mxu0
      %447 = vdwg.mxu0
      %v448 = vmax.f32 %v442, 0.0
      %v449 = vmax.f32 %v445, 0.0
      %v450 = vpack.c.bf16 %v449, %v448
      %v451 = vld [vmem:[%s3] sm:$0xf]
      %v452 = vld [vmem:[%s3 + $0x4] sm:$0xf]
      %v453 = vld [vmem:[%s3 + $0x8] sm:$0xf]
      %v454 = vld [vmem:[%s3 + $0xc] sm:$0xf]
      %v455 = vld [vmem:[%s3 + $0x10] sm:$0xf]
      %v456 = vld [vmem:[%s3 + $0x14] sm:$0xf]
      %v457 = vld [vmem:[%s3 + $0x18] sm:$0xf]
      %v458 = vld [vmem:[%s3 + $0x1c] sm:$0xf]
      %v459 = vld [vmem:[%s4] sm:$0x1]
      %v461 = vlaneseq
      %v462 = vshrl.u32 %v461, 7
      %v463 = vsub.s32 0, %v462
      %v464 = vrot.slane %v459, %v463
      %v474 = vunpack.c.l.b16 %v451
      %v475 = vunpack.c.l.b16 %v452
      %v476 = vunpack.c.l.b16 %v453
      %v477 = vunpack.c.l.b16 %v454
      %v478 = vunpack.c.l.b16 %v455
      %v479 = vunpack.c.l.b16 %v456
      %v480 = vunpack.c.l.b16 %v457
      %v481 = vunpack.c.l.b16 %v458
      %v482 = vpack.c.b16 %v475, %v474
      %v483 = vpack.c.b16 %v477, %v476
      %v484 = vpack.c.b16 %v479, %v478
      %v485 = vpack.c.b16 %v481, %v480
      %vm490 = vcmask 523264
      %v492 = vsel %vm490, %v450, 0
      %494 = vmatprep.subr.bf16.mxu0 0
      %495 = vmatpush1.bf16.msra.mxu0 %v482
      %496 = vmatprep.subr.bf16.mxu0 0
      %497 = vmatpush1.bf16.msra.mxu0 %v483
      %498 = vmatprep.subr.bf16.mxu0 0
      %499 = vmatpush1.bf16.msra.mxu0 %v484
      %500 = vmatprep.subr.bf16.mxu0 0
      %501 = vmatpush1.bf16.msra.mxu0 %v485
      %502 = vmatprep.subr.bf16.mxu0 0
      %503 = vmatpush1.bf16.msra.mxu0 0
      %504 = vmatprep.subr.bf16.mxu0 0
      %505 = vmatpush1.bf16.msra.mxu0 0
      %506 = vmatprep.subr.bf16.mxu0 0
      %507 = vmatpush1.bf16.msra.mxu0 0
      %508 = vmatprep.subr.bf16.mxu0 0
      %509 = vmatpush1.bf16.msra.mxu0 0
      %510 = vmatprep.subr.bf16.mxu0 0
      %511 = vmatpush1.bf16.msra.mxu0 0
      %512 = vmatprep.subr.bf16.mxu0 0
      %513 = vmatpush1.bf16.msra.mxu0 0
      %514 = vmatprep.subr.bf16.mxu0 0
      %515 = vmatpush1.bf16.msra.mxu0 0
      %516 = vmatprep.subr.bf16.mxu0 0
      %517 = vmatpush1.bf16.msra.mxu0 0
      %518 = vmatprep.subr.bf16.mxu0 0
      %519 = vmatpush1.bf16.msra.mxu0 0
      %520 = vmatprep.subr.bf16.mxu0 0
      %521 = vmatpush1.bf16.msra.mxu0 0
      %522 = vmatprep.subr.bf16.mxu0 0
      %523 = vmatpush1.bf16.msra.mxu0 0
      %524 = vmatprep.subr.bf16.mxu0 0
      %525 = vmatpush1.bf16.msra.mxu0 0
      %526 = vmatprep.mubr.bf16.mxu0 0
      %527 = vmatmul.mubr.bf16.gmra.mrb[0].mxu0 %v492
      %v528 = vpop.f32.mrb[0].mxu0
      %v529 = vadd.f32 %v464, %v528
      %v530 = vpop.f32.mrb[0].mxu0
      %v531 = vpop.f32.mrb[0].mxu0
      %v532 = vadd.f32 %v464, %v531
      %v533 = vpop.f32.mrb[0].mxu0
      %534 = vdwg.mxu0
      %v535 = vmax.f32 %v529, 0.0
      %v536 = vmax.f32 %v532, 0.0
      %v537 = vpack.c.bf16 %v536, %v535
      %v538 = vld [vmem:[%s5] sm:$0xf]
      %v539 = vld [vmem:[%s5 + $0x4] sm:$0xf]
      %v540 = vld [vmem:[%s5 + $0x8] sm:$0xf]
      %v541 = vld [vmem:[%s5 + $0xc] sm:$0xf]
      %v542 = vld [vmem:[%s5 + $0x10] sm:$0xf]
      %v543 = vld [vmem:[%s5 + $0x14] sm:$0xf]
      %v544 = vld [vmem:[%s5 + $0x18] sm:$0xf]
      %v545 = vld [vmem:[%s5 + $0x1c] sm:$0xf]
      %v546 = vld [vmem:[%s6] sm:$0x1]
      %v548 = vlaneseq
      %v549 = vshrl.u32 %v548, 7
      %v550 = vsub.s32 0, %v549
      %v551 = vrot.slane %v546, %v550
      %v561 = vunpack.c.l.b16 %v538
      %v562 = vunpack.c.l.b16 %v539
      %v563 = vunpack.c.l.b16 %v540
      %v564 = vunpack.c.l.b16 %v541
      %v565 = vunpack.c.l.b16 %v542
      %v566 = vunpack.c.l.b16 %v543
      %v567 = vunpack.c.l.b16 %v544
      %v568 = vunpack.c.l.b16 %v545
      %v569 = vpack.c.b16 %v562, %v561
      %v570 = vpack.c.b16 %v564, %v563
      %v571 = vpack.c.b16 %v566, %v565
      %v572 = vpack.c.b16 %v568, %v567
      %v578 = vsel %vm490, %v537, 0
      %580 = vmatprep.subr.bf16.mxu0 0
      %581 = vmatpush1.bf16.msra.mxu0 %v569
      %582 = vmatprep.subr.bf16.mxu0 0
      %583 = vmatpush1.bf16.msra.mxu0 %v570
      %584 = vmatprep.subr.bf16.mxu0 0
      %585 = vmatpush1.bf16.msra.mxu0 %v571
      %586 = vmatprep.subr.bf16.mxu0 0
      %587 = vmatpush1.bf16.msra.mxu0 %v572
      %588 = vmatprep.subr.bf16.mxu0 0
      %589 = vmatpush1.bf16.msra.mxu0 0
      %590 = vmatprep.subr.bf16.mxu0 0
      %591 = vmatpush1.bf16.msra.mxu0 0
      %592 = vmatprep.subr.bf16.mxu0 0
      %593 = vmatpush1.bf16.msra.mxu0 0
      %594 = vmatprep.subr.bf16.mxu0 0
      %595 = vmatpush1.bf16.msra.mxu0 0
      %596 = vmatprep.subr.bf16.mxu0 0
      %597 = vmatpush1.bf16.msra.mxu0 0
      %598 = vmatprep.subr.bf16.mxu0 0
      %599 = vmatpush1.bf16.msra.mxu0 0
      %600 = vmatprep.subr.bf16.mxu0 0
      %601 = vmatpush1.bf16.msra.mxu0 0
      %602 = vmatprep.subr.bf16.mxu0 0
      %603 = vmatpush1.bf16.msra.mxu0 0
      %604 = vmatprep.subr.bf16.mxu0 0
      %605 = vmatpush1.bf16.msra.mxu0 0
      %606 = vmatprep.subr.bf16.mxu0 0
      %607 = vmatpush1.bf16.msra.mxu0 0
      %608 = vmatprep.subr.bf16.mxu0 0
      %609 = vmatpush1.bf16.msra.mxu0 0
      %610 = vmatprep.subr.bf16.mxu0 0
      %611 = vmatpush1.bf16.msra.mxu0 0
      %612 = vmatprep.mubr.bf16.mxu0 0
      %613 = vmatmul.mubr.bf16.gmra.mrb[0].mxu0 %v578
      %v614 = vpop.f32.mrb[0].mxu0
      %v615 = vadd.f32 %v551, %v614
      %v616 = vpop.f32.mrb[0].mxu0
      %v617 = vpop.f32.mrb[0].mxu0
      %v618 = vadd.f32 %v551, %v617
      %v619 = vpop.f32.mrb[0].mxu0
      %620 = vdwg.mxu0
      %v621 = vmax.f32 %v615, 0.0
      %v622 = vmax.f32 %v618, 0.0
      %v623 = vpack.c.bf16 %v622, %v621
      %v624 = vld [vmem:[%s7] sm:$0xff]
      %v625 = vld [vmem:[%s7 + $0x8] sm:$0xff]
      %v626 = vld [vmem:[%s7 + $0x10] sm:$0xff]
      %v627 = vld [vmem:[%s7 + $0x18] sm:$0xff]
      %v628 = vld [vmem:[%s7 + $0x20] sm:$0xff]
      %v629 = vld [vmem:[%s7 + $0x28] sm:$0xff]
      %v630 = vld [vmem:[%s7 + $0x30] sm:$0xff]
      %v631 = vld [vmem:[%s7 + $0x38] sm:$0xff]
      %v632 = vld [vmem:[%s7 + $0x40] sm:$0xff]
      %v633 = vld [vmem:[%s7 + $0x48] sm:$0xff]
      %v634 = vld [vmem:[%s7 + $0x50] sm:$0xff]
      %v635 = vld [vmem:[%s7 + $0x58] sm:$0xff]
      %v636 = vld [vmem:[%s7 + $0x60] sm:$0xff]
      %v637 = vld [vmem:[%s7 + $0x68] sm:$0xff]
      %v638 = vld [vmem:[%s7 + $0x70] sm:$0xff]
      %v639 = vld [vmem:[%s7 + $0x78] sm:$0xff]
      %v640 = vld [vmem:[%s7 + $0x80] sm:$0xff]
      %v641 = vld [vmem:[%s7 + $0x88] sm:$0xff]
      %v642 = vld [vmem:[%s7 + $0x90] sm:$0xff]
      %v643 = vld [vmem:[%s7 + $0x98] sm:$0xff]
      %v644 = vld [vmem:[%s7 + $0xa0] sm:$0xff]
      %v645 = vld [vmem:[%s7 + $0xa8] sm:$0xff]
      %v646 = vld [vmem:[%s7 + $0xb0] sm:$0xff]
      %v647 = vld [vmem:[%s7 + $0xb8] sm:$0xff]
      %v648 = vld [vmem:[%s7 + $0xc0] sm:$0xff]
      %v649 = vld [vmem:[%s7 + $0xc8] sm:$0xff]
      %v650 = vld [vmem:[%s7 + $0xd0] sm:$0xff]
      %v651 = vld [vmem:[%s7 + $0xd8] sm:$0xff]
      %v652 = vld [vmem:[%s7 + $0xe0] sm:$0xff]
      %v653 = vld [vmem:[%s7 + $0xe8] sm:$0xff]
      %v654 = vld [vmem:[%s7 + $0xf0] sm:$0xff]
      %v655 = vld [vmem:[%s7 + $0xf8] sm:$0xff]
      %v656 = vld [vmem:[%s7 + $0x100] sm:$0xff]
      %v657 = vld [vmem:[%s7 + $0x108] sm:$0xff]
      %v658 = vld [vmem:[%s7 + $0x110] sm:$0xff]
      %v659 = vld [vmem:[%s7 + $0x118] sm:$0xff]
      %v660 = vld [vmem:[%s7 + $0x120] sm:$0xff]
      %v661 = vld [vmem:[%s7 + $0x128] sm:$0xff]
      %v662 = vld [vmem:[%s7 + $0x130] sm:$0xff]
      %v663 = vld [vmem:[%s7 + $0x138] sm:$0xff]
      %v664 = vld [vmem:[%s7 + $0x140] sm:$0xff]
      %v665 = vld [vmem:[%s7 + $0x148] sm:$0xff]
      %v666 = vld [vmem:[%s7 + $0x150] sm:$0xff]
      %v667 = vld [vmem:[%s7 + $0x158] sm:$0xff]
      %v668 = vld [vmem:[%s7 + $0x160] sm:$0xff]
      %v669 = vld [vmem:[%s7 + $0x168] sm:$0xff]
      %v670 = vld [vmem:[%s7 + $0x170] sm:$0xff]
      %v671 = vld [vmem:[%s7 + $0x178] sm:$0xff]
      %v672 = vld [vmem:[%s7 + $0x180] sm:$0xff]
      %v673 = vld [vmem:[%s7 + $0x188] sm:$0xff]
      %v674 = vld [vmem:[%s7 + $0x190] sm:$0xff]
      %v675 = vld [vmem:[%s7 + $0x198] sm:$0xff]
      %v676 = vld [vmem:[%s7 + $0x1a0] sm:$0xff]
      %v677 = vld [vmem:[%s7 + $0x1a8] sm:$0xff]
      %v678 = vld [vmem:[%s7 + $0x1b0] sm:$0xff]
      %v679 = vld [vmem:[%s7 + $0x1b8] sm:$0xff]
      %v680 = vld [vmem:[%s7 + $0x1c0] sm:$0xff]
      %v681 = vld [vmem:[%s7 + $0x1c8] sm:$0xff]
      %v682 = vld [vmem:[%s7 + $0x1d0] sm:$0xff]
      %v683 = vld [vmem:[%s7 + $0x1d8] sm:$0xff]
      %v684 = vld [vmem:[%s7 + $0x1e0] sm:$0xff]
      %v685 = vld [vmem:[%s7 + $0x1e8] sm:$0xff]
      %v686 = vld [vmem:[%s7 + $0x1f0] sm:$0xff]
      %v687 = vld [vmem:[%s7 + $0x1f8] sm:$0xff]
      %v688 = vld [vmem:[%s8] sm:$0xff]
      %v690 = vlaneseq
      %v691 = vshrl.u32 %v690, 7
      %v692 = vsub.s32 0, %v691
      %v693 = vrot.slane %v688, %v692
      %v694 = vlaneseq
      %v695 = vshrl.u32 %v694, 7
      %v696 = vsub.s32 1, %v695
      %v697 = vrot.slane %v688, %v696
      %v698 = vlaneseq
      %v699 = vshrl.u32 %v698, 7
      %v700 = vsub.s32 2, %v699
      %v701 = vrot.slane %v688, %v700
      %v702 = vlaneseq
      %v703 = vshrl.u32 %v702, 7
      %v704 = vsub.s32 3, %v703
      %v705 = vrot.slane %v688, %v704
      %v706 = vlaneseq
      %v707 = vshrl.u32 %v706, 7
      %v708 = vsub.s32 4, %v707
      %v709 = vrot.slane %v688, %v708
      %v710 = vlaneseq
      %v711 = vshrl.u32 %v710, 7
      %v712 = vsub.s32 5, %v711
      %v713 = vrot.slane %v688, %v712
      %v714 = vlaneseq
      %v715 = vshrl.u32 %v714, 7
      %v716 = vsub.s32 6, %v715
      %v717 = vrot.slane %v688, %v716
      %v718 = vlaneseq
      %v719 = vshrl.u32 %v718, 7
      %v720 = vsub.s32 7, %v719
      %v721 = vrot.slane %v688, %v720
      %v794 = vunpack.c.l.b16 %v624
      %v795 = vunpack.c.h.b16 %v624
      %v796 = vunpack.c.l.b16 %v625
      %v797 = vunpack.c.h.b16 %v625
      %v798 = vunpack.c.l.b16 %v626
      %v799 = vunpack.c.h.b16 %v626
      %v800 = vunpack.c.l.b16 %v627
      %v801 = vunpack.c.h.b16 %v627
      %v802 = vunpack.c.l.b16 %v628
      %v803 = vunpack.c.h.b16 %v628
      %v804 = vunpack.c.l.b16 %v629
      %v805 = vunpack.c.h.b16 %v629
      %v806 = vunpack.c.l.b16 %v630
      %v807 = vunpack.c.h.b16 %v630
      %v808 = vunpack.c.l.b16 %v631
      %v809 = vunpack.c.h.b16 %v631
      %v810 = vunpack.c.l.b16 %v632
      %v811 = vunpack.c.h.b16 %v632
      %v812 = vunpack.c.l.b16 %v633
      %v813 = vunpack.c.h.b16 %v633
      %v814 = vunpack.c.l.b16 %v634
      %v815 = vunpack.c.h.b16 %v634
      %v816 = vunpack.c.l.b16 %v635
      %v817 = vunpack.c.h.b16 %v635
      %v818 = vunpack.c.l.b16 %v636
      %v819 = vunpack.c.h.b16 %v636
      %v820 = vunpack.c.l.b16 %v637
      %v821 = vunpack.c.h.b16 %v637
      %v822 = vunpack.c.l.b16 %v638
      %v823 = vunpack.c.h.b16 %v638
      %v824 = vunpack.c.l.b16 %v639
      %v825 = vunpack.c.h.b16 %v639
      %v826 = vunpack.c.l.b16 %v640
      %v827 = vunpack.c.h.b16 %v640
      %v828 = vunpack.c.l.b16 %v641
      %v829 = vunpack.c.h.b16 %v641
      %v830 = vunpack.c.l.b16 %v642
      %v831 = vunpack.c.h.b16 %v642
      %v832 = vunpack.c.l.b16 %v643
      %v833 = vunpack.c.h.b16 %v643
      %v834 = vunpack.c.l.b16 %v644
      %v835 = vunpack.c.h.b16 %v644
      %v836 = vunpack.c.l.b16 %v645
      %v837 = vunpack.c.h.b16 %v645
      %v838 = vunpack.c.l.b16 %v646
      %v839 = vunpack.c.h.b16 %v646
      %v840 = vunpack.c.l.b16 %v647
      %v841 = vunpack.c.h.b16 %v647
      %v842 = vunpack.c.l.b16 %v648
      %v843 = vunpack.c.h.b16 %v648
      %v844 = vunpack.c.l.b16 %v649
      %v845 = vunpack.c.h.b16 %v649
      %v846 = vunpack.c.l.b16 %v650
      %v847 = vunpack.c.h.b16 %v650
      %v848 = vunpack.c.l.b16 %v651
      %v849 = vunpack.c.h.b16 %v651
      %v850 = vunpack.c.l.b16 %v652
      %v851 = vunpack.c.h.b16 %v652
      %v852 = vunpack.c.l.b16 %v653
      %v853 = vunpack.c.h.b16 %v653
      %v854 = vunpack.c.l.b16 %v654
      %v855 = vunpack.c.h.b16 %v654
      %v856 = vunpack.c.l.b16 %v655
      %v857 = vunpack.c.h.b16 %v655
      %v858 = vunpack.c.l.b16 %v656
      %v859 = vunpack.c.h.b16 %v656
      %v860 = vunpack.c.l.b16 %v657
      %v861 = vunpack.c.h.b16 %v657
      %v862 = vunpack.c.l.b16 %v658
      %v863 = vunpack.c.h.b16 %v658
      %v864 = vunpack.c.l.b16 %v659
      %v865 = vunpack.c.h.b16 %v659
      %v866 = vunpack.c.l.b16 %v660
      %v867 = vunpack.c.h.b16 %v660
      %v868 = vunpack.c.l.b16 %v661
      %v869 = vunpack.c.h.b16 %v661
      %v870 = vunpack.c.l.b16 %v662
      %v871 = vunpack.c.h.b16 %v662
      %v872 = vunpack.c.l.b16 %v663
      %v873 = vunpack.c.h.b16 %v663
      %v874 = vunpack.c.l.b16 %v664
      %v875 = vunpack.c.h.b16 %v664
      %v876 = vunpack.c.l.b16 %v665
      %v877 = vunpack.c.h.b16 %v665
      %v878 = vunpack.c.l.b16 %v666
      %v879 = vunpack.c.h.b16 %v666
      %v880 = vunpack.c.l.b16 %v667
      %v881 = vunpack.c.h.b16 %v667
      %v882 = vunpack.c.l.b16 %v668
      %v883 = vunpack.c.h.b16 %v668
      %v884 = vunpack.c.l.b16 %v669
      %v885 = vunpack.c.h.b16 %v669
      %v886 = vunpack.c.l.b16 %v670
      %v887 = vunpack.c.h.b16 %v670
      %v888 = vunpack.c.l.b16 %v671
      %v889 = vunpack.c.h.b16 %v671
      %v890 = vunpack.c.l.b16 %v672
      %v891 = vunpack.c.h.b16 %v672
      %v892 = vunpack.c.l.b16 %v673
      %v893 = vunpack.c.h.b16 %v673
      %v894 = vunpack.c.l.b16 %v674
      %v895 = vunpack.c.h.b16 %v674
      %v896 = vunpack.c.l.b16 %v675
      %v897 = vunpack.c.h.b16 %v675
      %v898 = vunpack.c.l.b16 %v676
      %v899 = vunpack.c.h.b16 %v676
      %v900 = vunpack.c.l.b16 %v677
      %v901 = vunpack.c.h.b16 %v677
      %v902 = vunpack.c.l.b16 %v678
      %v903 = vunpack.c.h.b16 %v678
      %v904 = vunpack.c.l.b16 %v679
      %v905 = vunpack.c.h.b16 %v679
      %v906 = vunpack.c.l.b16 %v680
      %v907 = vunpack.c.h.b16 %v680
      %v908 = vunpack.c.l.b16 %v681
      %v909 = vunpack.c.h.b16 %v681
      %v910 = vunpack.c.l.b16 %v682
      %v911 = vunpack.c.h.b16 %v682
      %v912 = vunpack.c.l.b16 %v683
      %v913 = vunpack.c.h.b16 %v683
      %v914 = vunpack.c.l.b16 %v684
      %v915 = vunpack.c.h.b16 %v684
      %v916 = vunpack.c.l.b16 %v685
      %v917 = vunpack.c.h.b16 %v685
      %v918 = vunpack.c.l.b16 %v686
      %v919 = vunpack.c.h.b16 %v686
      %v920 = vunpack.c.l.b16 %v687
      %v921 = vunpack.c.h.b16 %v687
      %v922 = vpack.c.b16 %v802, %v794
      %v923 = vpack.c.b16 %v803, %v795
      %v924 = vpack.c.b16 %v804, %v796
      %v925 = vpack.c.b16 %v805, %v797
      %v926 = vpack.c.b16 %v806, %v798
      %v927 = vpack.c.b16 %v807, %v799
      %v928 = vpack.c.b16 %v808, %v800
      %v929 = vpack.c.b16 %v809, %v801
      %v930 = vpack.c.b16 %v818, %v810
      %v931 = vpack.c.b16 %v819, %v811
      %v932 = vpack.c.b16 %v820, %v812
      %v933 = vpack.c.b16 %v821, %v813
      %v934 = vpack.c.b16 %v822, %v814
      %v935 = vpack.c.b16 %v823, %v815
      %v936 = vpack.c.b16 %v824, %v816
      %v937 = vpack.c.b16 %v825, %v817
      %v938 = vpack.c.b16 %v834, %v826
      %v939 = vpack.c.b16 %v835, %v827
      %v940 = vpack.c.b16 %v836, %v828
      %v941 = vpack.c.b16 %v837, %v829
      %v942 = vpack.c.b16 %v838, %v830
      %v943 = vpack.c.b16 %v839, %v831
      %v944 = vpack.c.b16 %v840, %v832
      %v945 = vpack.c.b16 %v841, %v833
      %v946 = vpack.c.b16 %v850, %v842
      %v947 = vpack.c.b16 %v851, %v843
      %v948 = vpack.c.b16 %v852, %v844
      %v949 = vpack.c.b16 %v853, %v845
      %v950 = vpack.c.b16 %v854, %v846
      %v951 = vpack.c.b16 %v855, %v847
      %v952 = vpack.c.b16 %v856, %v848
      %v953 = vpack.c.b16 %v857, %v849
      %v954 = vpack.c.b16 %v866, %v858
      %v955 = vpack.c.b16 %v867, %v859
      %v956 = vpack.c.b16 %v868, %v860
      %v957 = vpack.c.b16 %v869, %v861
      %v958 = vpack.c.b16 %v870, %v862
      %v959 = vpack.c.b16 %v871, %v863
      %v960 = vpack.c.b16 %v872, %v864
      %v961 = vpack.c.b16 %v873, %v865
      %v962 = vpack.c.b16 %v882, %v874
      %v963 = vpack.c.b16 %v883, %v875
      %v964 = vpack.c.b16 %v884, %v876
      %v965 = vpack.c.b16 %v885, %v877
      %v966 = vpack.c.b16 %v886, %v878
      %v967 = vpack.c.b16 %v887, %v879
      %v968 = vpack.c.b16 %v888, %v880
      %v969 = vpack.c.b16 %v889, %v881
      %v970 = vpack.c.b16 %v898, %v890
      %v971 = vpack.c.b16 %v899, %v891
      %v972 = vpack.c.b16 %v900, %v892
      %v973 = vpack.c.b16 %v901, %v893
      %v974 = vpack.c.b16 %v902, %v894
      %v975 = vpack.c.b16 %v903, %v895
      %v976 = vpack.c.b16 %v904, %v896
      %v977 = vpack.c.b16 %v905, %v897
      %v978 = vpack.c.b16 %v914, %v906
      %v979 = vpack.c.b16 %v915, %v907
      %v980 = vpack.c.b16 %v916, %v908
      %v981 = vpack.c.b16 %v917, %v909
      %v982 = vpack.c.b16 %v918, %v910
      %v983 = vpack.c.b16 %v919, %v911
      %v984 = vpack.c.b16 %v920, %v912
      %v985 = vpack.c.b16 %v921, %v913
      %1050 = vmatprep.subr.bf16.mxu0 %v923
      %1051 = vmatpush1.bf16.msra.mxu0 %v922
      %1052 = vmatprep.subr.bf16.mxu0 %v931
      %1053 = vmatpush1.bf16.msra.mxu0 %v930
      %1054 = vmatprep.subr.bf16.mxu0 %v939
      %1055 = vmatpush1.bf16.msra.mxu0 %v938
      %1056 = vmatprep.subr.bf16.mxu0 %v947
      %1057 = vmatpush1.bf16.msra.mxu0 %v946
      %1058 = vmatprep.subr.bf16.mxu0 %v955
      %1059 = vmatpush1.bf16.msra.mxu0 %v954
      %1060 = vmatprep.subr.bf16.mxu0 %v963
      %1061 = vmatpush1.bf16.msra.mxu0 %v962
      %1062 = vmatprep.subr.bf16.mxu0 %v971
      %1063 = vmatpush1.bf16.msra.mxu0 %v970
      %1064 = vmatprep.subr.bf16.mxu0 %v979
      %1065 = vmatpush1.bf16.msra.mxu0 %v978
      %1066 = vmatprep.subr.bf16.mxu0 0
      %1067 = vmatpush1.bf16.msra.mxu0 0
      %1068 = vmatprep.subr.bf16.mxu0 0
      %1069 = vmatpush1.bf16.msra.mxu0 0
      %1070 = vmatprep.subr.bf16.mxu0 0
      %1071 = vmatpush1.bf16.msra.mxu0 0
      %1072 = vmatprep.subr.bf16.mxu0 0
      %1073 = vmatpush1.bf16.msra.mxu0 0
      %1074 = vmatprep.subr.bf16.mxu0 0
      %1075 = vmatpush1.bf16.msra.mxu0 0
      %1076 = vmatprep.subr.bf16.mxu0 0
      %1077 = vmatpush1.bf16.msra.mxu0 0
      %1078 = vmatprep.subr.bf16.mxu0 0
      %1079 = vmatpush1.bf16.msra.mxu0 0
      %1080 = vmatprep.subr.bf16.mxu0 0
      %1081 = vmatpush1.bf16.msra.mxu0 0
      %1082 = vmatprep.mubr.bf16.mxu0 0
      %1083 = vmatmul.mubr.bf16.gmra.mrb[0].mxu0 %v623
      %v1084 = vpop.f32.mrb[0].mxu0
      %v1085 = vadd.f32 %v693, %v1084
      %v1086 = vpop.f32.mrb[0].mxu0
      %v1087 = vadd.f32 %v697, %v1086
      %v1088 = vpop.f32.mrb[0].mxu0
      %v1089 = vadd.f32 %v693, %v1088
      %v1090 = vpop.f32.mrb[0].mxu0
      %v1091 = vadd.f32 %v697, %v1090
      %1092 = vdwg.mxu0
      %1093 = vmatprep.subr.bf16.mxu0 %v925
      %1094 = vmatpush1.bf16.msra.mxu0 %v924
      %1095 = vmatprep.subr.bf16.mxu0 %v933
      %1096 = vmatpush1.bf16.msra.mxu0 %v932
      %1097 = vmatprep.subr.bf16.mxu0 %v941
      %1098 = vmatpush1.bf16.msra.mxu0 %v940
      %1099 = vmatprep.subr.bf16.mxu0 %v949
      %1100 = vmatpush1.bf16.msra.mxu0 %v948
      %1101 = vmatprep.subr.bf16.mxu0 %v957
      %1102 = vmatpush1.bf16.msra.mxu0 %v956
      %1103 = vmatprep.subr.bf16.mxu0 %v965
      %1104 = vmatpush1.bf16.msra.mxu0 %v964
      %1105 = vmatprep.subr.bf16.mxu0 %v973
      %1106 = vmatpush1.bf16.msra.mxu0 %v972
      %1107 = vmatprep.subr.bf16.mxu0 %v981
      %1108 = vmatpush1.bf16.msra.mxu0 %v980
      %1109 = vmatprep.subr.bf16.mxu0 0
      %1110 = vmatpush1.bf16.msra.mxu0 0
      %1111 = vmatprep.subr.bf16.mxu0 0
      %1112 = vmatpush1.bf16.msra.mxu0 0
      %1113 = vmatprep.subr.bf16.mxu0 0
      %1114 = vmatpush1.bf16.msra.mxu0 0
      %1115 = vmatprep.subr.bf16.mxu0 0
      %1116 = vmatpush1.bf16.msra.mxu0 0
      %1117 = vmatprep.subr.bf16.mxu0 0
      %1118 = vmatpush1.bf16.msra.mxu0 0
      %1119 = vmatprep.subr.bf16.mxu0 0
      %1120 = vmatpush1.bf16.msra.mxu0 0
      %1121 = vmatprep.subr.bf16.mxu0 0
      %1122 = vmatpush1.bf16.msra.mxu0 0
      %1123 = vmatprep.subr.bf16.mxu0 0
      %1124 = vmatpush1.bf16.msra.mxu0 0
      %1125 = vmatprep.mubr.bf16.mxu0 0
      %1126 = vmatmul.mubr.bf16.gmra.mrb[0].mxu0 %v623
      %v1127 = vpop.f32.mrb[0].mxu0
      %v1128 = vadd.f32 %v701, %v1127
      %v1129 = vpop.f32.mrb[0].mxu0
      %v1130 = vadd.f32 %v705, %v1129
      %v1131 = vpop.f32.mrb[0].mxu0
      %v1132 = vadd.f32 %v701, %v1131
      %v1133 = vpop.f32.mrb[0].mxu0
      %v1134 = vadd.f32 %v705, %v1133
      %1135 = vdwg.mxu0
      %1136 = vmatprep.subr.bf16.mxu0 %v927
      %1137 = vmatpush1.bf16.msra.mxu0 %v926
      %1138 = vmatprep.subr.bf16.mxu0 %v935
      %1139 = vmatpush1.bf16.msra.mxu0 %v934
      %1140 = vmatprep.subr.bf16.mxu0 %v943
      %1141 = vmatpush1.bf16.msra.mxu0 %v942
      %1142 = vmatprep.subr.bf16.mxu0 %v951
      %1143 = vmatpush1.bf16.msra.mxu0 %v950
      %1144 = vmatprep.subr.bf16.mxu0 %v959
      %1145 = vmatpush1.bf16.msra.mxu0 %v958
      %1146 = vmatprep.subr.bf16.mxu0 %v967
      %1147 = vmatpush1.bf16.msra.mxu0 %v966
      %1148 = vmatprep.subr.bf16.mxu0 %v975
      %1149 = vmatpush1.bf16.msra.mxu0 %v974
      %1150 = vmatprep.subr.bf16.mxu0 %v983
      %1151 = vmatpush1.bf16.msra.mxu0 %v982
      %1152 = vmatprep.subr.bf16.mxu0 0
      %1153 = vmatpush1.bf16.msra.mxu0 0
      %1154 = vmatprep.subr.bf16.mxu0 0
      %1155 = vmatpush1.bf16.msra.mxu0 0
      %1156 = vmatprep.subr.bf16.mxu0 0
      %1157 = vmatpush1.bf16.msra.mxu0 0
      %1158 = vmatprep.subr.bf16.mxu0 0
      %1159 = vmatpush1.bf16.msra.mxu0 0
      %1160 = vmatprep.subr.bf16.mxu0 0
      %1161 = vmatpush1.bf16.msra.mxu0 0
      %1162 = vmatprep.subr.bf16.mxu0 0
      %1163 = vmatpush1.bf16.msra.mxu0 0
      %1164 = vmatprep.subr.bf16.mxu0 0
      %1165 = vmatpush1.bf16.msra.mxu0 0
      %1166 = vmatprep.subr.bf16.mxu0 0
      %1167 = vmatpush1.bf16.msra.mxu0 0
      %1168 = vmatprep.mubr.bf16.mxu0 0
      %1169 = vmatmul.mubr.bf16.gmra.mrb[0].mxu0 %v623
      %v1170 = vpop.f32.mrb[0].mxu0
      %v1171 = vadd.f32 %v709, %v1170
      %v1172 = vpop.f32.mrb[0].mxu0
      %v1173 = vadd.f32 %v713, %v1172
      %v1174 = vpop.f32.mrb[0].mxu0
      %v1175 = vadd.f32 %v709, %v1174
      %v1176 = vpop.f32.mrb[0].mxu0
      %v1177 = vadd.f32 %v713, %v1176
      %1178 = vdwg.mxu0
      %1179 = vmatprep.subr.bf16.mxu0 %v929
      %1180 = vmatpush1.bf16.msra.mxu0 %v928
      %1181 = vmatprep.subr.bf16.mxu0 %v937
      %1182 = vmatpush1.bf16.msra.mxu0 %v936
      %1183 = vmatprep.subr.bf16.mxu0 %v945
      %1184 = vmatpush1.bf16.msra.mxu0 %v944
      %1185 = vmatprep.subr.bf16.mxu0 %v953
      %1186 = vmatpush1.bf16.msra.mxu0 %v952
      %1187 = vmatprep.subr.bf16.mxu0 %v961
      %1188 = vmatpush1.bf16.msra.mxu0 %v960
      %1189 = vmatprep.subr.bf16.mxu0 %v969
      %1190 = vmatpush1.bf16.msra.mxu0 %v968
      %1191 = vmatprep.subr.bf16.mxu0 %v977
      %1192 = vmatpush1.bf16.msra.mxu0 %v976
      %1193 = vmatprep.subr.bf16.mxu0 %v985
      %1194 = vmatpush1.bf16.msra.mxu0 %v984
      %1195 = vmatprep.subr.bf16.mxu0 0
      %1196 = vmatpush1.bf16.msra.mxu0 0
      %1197 = vmatprep.subr.bf16.mxu0 0
      %1198 = vmatpush1.bf16.msra.mxu0 0
      %1199 = vmatprep.subr.bf16.mxu0 0
      %1200 = vmatpush1.bf16.msra.mxu0 0
      %1201 = vmatprep.subr.bf16.mxu0 0
      %1202 = vmatpush1.bf16.msra.mxu0 0
      %1203 = vmatprep.subr.bf16.mxu0 0
      %1204 = vmatpush1.bf16.msra.mxu0 0
      %1205 = vmatprep.subr.bf16.mxu0 0
      %1206 = vmatpush1.bf16.msra.mxu0 0
      %1207 = vmatprep.subr.bf16.mxu0 0
      %1208 = vmatpush1.bf16.msra.mxu0 0
      %1209 = vmatprep.subr.bf16.mxu0 0
      %1210 = vmatpush1.bf16.msra.mxu0 0
      %1211 = vmatprep.mubr.bf16.mxu0 0
      %1212 = vmatmul.mubr.bf16.gmra.mrb[0].mxu0 %v623
      %v1213 = vpop.f32.mrb[0].mxu0
      %v1214 = vadd.f32 %v717, %v1213
      %v1215 = vpop.f32.mrb[0].mxu0
      %v1216 = vadd.f32 %v721, %v1215
      %v1217 = vpop.f32.mrb[0].mxu0
      %v1218 = vadd.f32 %v717, %v1217
      %v1219 = vpop.f32.mrb[0].mxu0
      %v1220 = vadd.f32 %v721, %v1219
      %1221 = vdwg.mxu0
      %v1222 = vmax.f32 %v1085, 0.0
      %v1223 = vmax.f32 %v1087, 0.0
      %v1224 = vmax.f32 %v1128, 0.0
      %v1225 = vmax.f32 %v1130, 0.0
      %v1226 = vmax.f32 %v1171, 0.0
      %v1227 = vmax.f32 %v1173, 0.0
      %v1228 = vmax.f32 %v1214, 0.0
      %v1229 = vmax.f32 %v1216, 0.0
      %v1230 = vmax.f32 %v1089, 0.0
      %v1231 = vmax.f32 %v1091, 0.0
      %v1232 = vmax.f32 %v1132, 0.0
      %v1233 = vmax.f32 %v1134, 0.0
      %v1234 = vmax.f32 %v1175, 0.0
      %v1235 = vmax.f32 %v1177, 0.0
      %v1236 = vmax.f32 %v1218, 0.0
      %v1237 = vmax.f32 %v1220, 0.0
      %v1238 = vmax.f32 %v1222, %v1230
      %v1239 = vrot.slane %v1238, 4
      %v1240 = vmax.f32 %v1238, %v1239
      %v1241 = vrot.slane %v1240, 2
      %v1242 = vmax.f32 %v1240, %v1241
      %v1243 = vrot.slane %v1242, 1
      %v1244 = vmax.f32 %v1242, %v1243
      %v1245 = vmax.f32 %v1223, %v1231
      %v1246 = vrot.slane %v1245, 4
      %v1247 = vmax.f32 %v1245, %v1246
      %v1248 = vrot.slane %v1247, 2
      %v1249 = vmax.f32 %v1247, %v1248
      %v1250 = vrot.slane %v1249, 1
      %v1251 = vmax.f32 %v1249, %v1250
      %v1252 = vmax.f32 %v1224, %v1232
      %v1253 = vrot.slane %v1252, 4
      %v1254 = vmax.f32 %v1252, %v1253
      %v1255 = vrot.slane %v1254, 2
      %v1256 = vmax.f32 %v1254, %v1255
      %v1257 = vrot.slane %v1256, 1
      %v1258 = vmax.f32 %v1256, %v1257
      %v1259 = vmax.f32 %v1225, %v1233
      %v1260 = vrot.slane %v1259, 4
      %v1261 = vmax.f32 %v1259, %v1260
      %v1262 = vrot.slane %v1261, 2
      %v1263 = vmax.f32 %v1261, %v1262
      %v1264 = vrot.slane %v1263, 1
      %v1265 = vmax.f32 %v1263, %v1264
      %v1266 = vmax.f32 %v1226, %v1234
      %v1267 = vrot.slane %v1266, 4
      %v1268 = vmax.f32 %v1266, %v1267
      %v1269 = vrot.slane %v1268, 2
      %v1270 = vmax.f32 %v1268, %v1269
      %v1271 = vrot.slane %v1270, 1
      %v1272 = vmax.f32 %v1270, %v1271
      %v1273 = vmax.f32 %v1227, %v1235
      %v1274 = vrot.slane %v1273, 4
      %v1275 = vmax.f32 %v1273, %v1274
      %v1276 = vrot.slane %v1275, 2
      %v1277 = vmax.f32 %v1275, %v1276
      %v1278 = vrot.slane %v1277, 1
      %v1279 = vmax.f32 %v1277, %v1278
      %v1280 = vmax.f32 %v1228, %v1236
      %v1281 = vrot.slane %v1280, 4
      %v1282 = vmax.f32 %v1280, %v1281
      %v1283 = vrot.slane %v1282, 2
      %v1284 = vmax.f32 %v1282, %v1283
      %v1285 = vrot.slane %v1284, 1
      %v1286 = vmax.f32 %v1284, %v1285
      %v1287 = vmax.f32 %v1229, %v1237
      %v1288 = vrot.slane %v1287, 4
      %v1289 = vmax.f32 %v1287, %v1288
      %v1290 = vrot.slane %v1289, 2
      %v1291 = vmax.f32 %v1289, %v1290
      %v1292 = vrot.slane %v1291, 1
      %v1293 = vmax.f32 %v1291, %v1292
      %p1294 = scmp.eq.s32.totalorder %s27, 0
      // Predicated region
      $region57: #{pointnetfeat_forward.3} parent=55 // pred_check
        %p1295 = pneg %p1294
      $region58: #{pointnetfeat_forward.3} parent=55 // pred_check_branch
        %1297 = sbr.rel (%p1295) target = $region60
      $region59: #{pointnetfeat_forward.3} parent=55 // pred_region
        %v1306 = vcombine.low %v1244, %v1251
        %v1307 = vcombine.low %v1258, %v1265
        %v1308 = vcombine.low %v1272, %v1279
        %v1309 = vcombine.low %v1286, %v1293
        %v1311 = vunpack.c.l.s4 1966171168
        %v1312 = vunpack.c.0.s8 %v1311
        %v1313 = vlaneseq
        %v1314 = vshrl.u32 %v1313, 7
        %v1315 = vsub.s32 %v1312, %v1314
        %v1316 = vrot.slane %v1306, %v1315
        %v1318 = vunpack.c.l.s4 1966171168
        %v1319 = vunpack.c.0.s8 %v1318
        %v1320 = vlaneseq
        %v1321 = vshrl.u32 %v1320, 7
        %v1322 = vsub.s32 %v1319, %v1321
        %v1323 = vrot.slane %v1307, %v1322
        %v1325 = vunpack.c.l.s4 1966171168
        %v1326 = vunpack.c.0.s8 %v1325
        %v1327 = vlaneseq
        %v1328 = vshrl.u32 %v1327, 7
        %v1329 = vsub.s32 %v1326, %v1328
        %v1330 = vrot.slane %v1308, %v1329
        %v1332 = vunpack.c.l.s4 1966171168
        %v1333 = vunpack.c.0.s8 %v1332
        %v1334 = vlaneseq
        %v1335 = vshrl.u32 %v1334, 7
        %v1336 = vsub.s32 %v1333, %v1335
        %v1337 = vrot.slane %v1309, %v1336
        %v1338 = vcombine.low %v1316, %v1323
        %v1339 = vcombine.low %v1330, %v1337
        %v1341 = vunpack.c.l.s4 1966171168
        %v1342 = vunpack.c.0.s8 %v1341
        %v1343 = vlaneseq
        %v1344 = vshrl.u32 %v1343, 7
        %v1345 = vsub.s32 %v1342, %v1344
        %v1346 = vrot.slane %v1338, %v1345
        %v1348 = vunpack.c.l.s4 1966171168
        %v1349 = vunpack.c.0.s8 %v1348
        %v1350 = vlaneseq
        %v1351 = vshrl.u32 %v1350, 7
        %v1352 = vsub.s32 %v1349, %v1351
        %v1353 = vrot.slane %v1339, %v1352
        %v1354 = vcombine.low %v1346, %v1353
        %1356 = vst [vmem:[%s382] sm:$0xff] %v1354
      $region60: #{pointnetfeat_forward.3} parent=55 // pred_fallthru
        _
      %p1357 = scmp.gt.s32.totalorder %s27, 0
      // Predicated region
      $region61: #{pointnetfeat_forward.3} parent=55 // pred_check
        %p1358 = pneg %p1357
      $region62: #{pointnetfeat_forward.3} parent=55 // pred_check_branch
        %1360 = sbr.rel (%p1358) target = $region64
      $region63: #{pointnetfeat_forward.3} parent=55 // pred_region
        %v1361 = vld [vmem:[%s382] sm:$0xff]
        %v1370 = vcombine.low %v1244, %v1251
        %v1371 = vcombine.low %v1258, %v1265
        %v1372 = vcombine.low %v1272, %v1279
        %v1373 = vcombine.low %v1286, %v1293
        %v1375 = vunpack.c.l.s4 1966171168
        %v1376 = vunpack.c.0.s8 %v1375
        %v1377 = vlaneseq
        %v1378 = vshrl.u32 %v1377, 7
        %v1379 = vsub.s32 %v1376, %v1378
        %v1380 = vrot.slane %v1370, %v1379
        %v1382 = vunpack.c.l.s4 1966171168
        %v1383 = vunpack.c.0.s8 %v1382
        %v1384 = vlaneseq
        %v1385 = vshrl.u32 %v1384, 7
        %v1386 = vsub.s32 %v1383, %v1385
        %v1387 = vrot.slane %v1371, %v1386
        %v1389 = vunpack.c.l.s4 1966171168
        %v1390 = vunpack.c.0.s8 %v1389
        %v1391 = vlaneseq
        %v1392 = vshrl.u32 %v1391, 7
        %v1393 = vsub.s32 %v1390, %v1392
        %v1394 = vrot.slane %v1372, %v1393
        %v1396 = vunpack.c.l.s4 1966171168
        %v1397 = vunpack.c.0.s8 %v1396
        %v1398 = vlaneseq
        %v1399 = vshrl.u32 %v1398, 7
        %v1400 = vsub.s32 %v1397, %v1399
        %v1401 = vrot.slane %v1373, %v1400
        %v1402 = vcombine.low %v1380, %v1387
        %v1403 = vcombine.low %v1394, %v1401
        %v1405 = vunpack.c.l.s4 1966171168
        %v1406 = vunpack.c.0.s8 %v1405
        %v1407 = vlaneseq
        %v1408 = vshrl.u32 %v1407, 7
        %v1409 = vsub.s32 %v1406, %v1408
        %v1410 = vrot.slane %v1402, %v1409
        %v1412 = vunpack.c.l.s4 1966171168
        %v1413 = vunpack.c.0.s8 %v1412
        %v1414 = vlaneseq
        %v1415 = vshrl.u32 %v1414, 7
        %v1416 = vsub.s32 %v1413, %v1415
        %v1417 = vrot.slane %v1403, %v1416
        %v1418 = vcombine.low %v1410, %v1417
        %v1420 = vmax.f32 %v1361, %v1418
        %1421 = vst [vmem:[%s382] sm:$0xff] %v1420
      $region64: #{pointnetfeat_forward.3} parent=55 // pred_fallthru
        _
      %p1422 = scmp.lt.s32.totalorder %s26, 1
      %s1423 = scalar_select %p1422, %s26, 1
      %p1424 = scmp.lt.s32.totalorder %s25, 0
      %s1425 = scalar_select %p1424, %s25, 0
      %s1426 = smul.addr %s1425, 8
      %s1427 = smul.addr %s1423, 8
      %s1428 = sadd.s32 %s1426, %s1427
      %s1429 = scalar_lea.vmem %s9, %s1428
      // Predicated region
      $region65: #{pointnetfeat_forward.3} parent=55 // pred_check
        %p1430 = pneg %p257
      $region66: #{pointnetfeat_forward.3} parent=55 // pred_check_branch
        %1432 = sbr.rel (%p1430) target = $region68
      $region67: #{pointnetfeat_forward.3} parent=55 // pred_region
        _
      $region68: #{pointnetfeat_forward.3} parent=55 // pred_fallthru
        _
    $region56: #{pointnetfeat_forward.3} parent=5 // pred_fallthru
      _
    %p1433 = scmp.le.s32.totalorder 2, %s15
    // Predicated region
    $region69: #{pointnetfeat_forward.3} parent=5 // pred_check
      %p1434 = pneg %p1433
    $region70: #{pointnetfeat_forward.3} parent=5 // pred_check_branch
      %1436 = sbr.rel (%p1434) target = $region72
    $region71: #{pointnetfeat_forward.3} parent=5 // pred_region
      %s1437 = ssub.s32 %s15, 2
      // Predicated region
      $region73: #{pointnetfeat_forward.3} parent=71 // pred_check
        %p1438 = pneg %p263
      $region74: #{pointnetfeat_forward.3} parent=71 // pred_check_branch
        %1440 = sbr.rel (%p1438) target = $region76
      $region75: #{pointnetfeat_forward.3} parent=71 // pred_region
        %p1441 = scmp.lt.s32.totalorder %s29, 1
        %s1442 = scalar_select %p1441, %s29, 1
        %p1443 = scmp.lt.s32.totalorder %s28, 0
        %s1444 = scalar_select %p1443, %s28, 0
        %s1445 = smul.addr %s1444, 8
        %s1446 = smul.addr %s1442, 8
        %s1447 = sadd.s32 %s1445, %s1446
        %s1448 = scalar_lea.vmem %s9, %s1447
      $region76: #{pointnetfeat_forward.3} parent=71 // pred_fallthru
        _
    $region72: #{pointnetfeat_forward.3} parent=5 // pred_fallthru
      _
  $region6: #{pointnetfeat_forward.3} parent=0 // loop_footer
    %s19 = sadd.s32 1, %s15
  $region7: #{pointnetfeat_forward.3} parent=0 // loop_footer_branch
    %14 = sbr.rel target = $region3
  $region8: #{pointnetfeat_forward.3} parent=0 // loop_exit
    _

// kernel: pointnetfeat_forward.4
$region0: #{pointnetfeat_forward.4}
  #allocation0 [shape = 'u32[]', space=smem, size = 0x4, offset = 0x4, fixed_abs, tag = 'smem constant byte address 0x4 - core index']
  #allocation1 [shape = 'u32[144,128]{1,0:T(1,128)}', space=vmem, size = 0x12000, scoped, tag = 'internal scratch']
  %s0 = inlined_call_operand.vmem [shape: bf16[2,16,8], index: 0, kind: input, shape index: {}]
  %s1 = inlined_call_operand.vmem [shape: bf16[2,64,64], index: 1, kind: input, shape index: {}]
  %s2 = inlined_call_operand.vmem [shape: bf16[8,64], index: 2, kind: input, shape index: {}]
  %s3 = inlined_call_operand.vmem [shape: f32[1,64], index: 3, kind: input, shape index: {}]
  %s4 = inlined_call_operand.vmem [shape: bf16[64,128], index: 4, kind: input, shape index: {}]
  %s5 = inlined_call_operand.vmem [shape: f32[1,128], index: 5, kind: input, shape index: {}]
  %s6 = inlined_call_operand.vmem [shape: bf16[128,1024], index: 6, kind: input, shape index: {}]
  %s7 = inlined_call_operand.vmem [shape: f32[1,1024], index: 7, kind: input, shape index: {}]
  %s8 = inlined_call_operand.vmem [shape: f32[2,1,1024], index: 8, kind: output, shape index: {}]
  %s9 = sld [smem:[#allocation0]]
  $region73: #{pointnetfeat_forward.4} parent=0
    _
  %s11 = ssub.s32 1, %s9
  %s12 = scalar_select 0, %s11, %s9
  loop: start=0, step=1, limit=4
  $region2: #{pointnetfeat_forward.4} parent=0 // loop_pre_header
    _
  $region3: #{pointnetfeat_forward.4} parent=0 // loop_header
    %s14 = sphi 0, %s18
    %p15 = scmp.ge.s32.totalorder %s14, 4
    %s21 = sphi 0, %s40
    %s22 = sphi 0, %s36
    %s23 = sphi 0, %s32
    %s24 = sphi 0, %s21
    %s25 = sphi 0, %s22
    %s26 = sphi 0, %s23
    %s27 = sphi 0, %s24
    %s28 = sphi 0, %s25
    %s29 = sphi 0, %s26
    %s47 = sphi 0, %s49
    %s50 = sphi 0, %s47
    %s51 = sphi 0, %s50
    %s67 = sphi 0, %s51
    %s73 = sphi 0, %s75
    %s76 = sphi 0, %s73
    %s77 = sphi 0, %s76
    %s93 = sphi 0, %s77
    %s97 = sphi 0, %s97
    %s99 = sphi 0, %s97
    %s100 = sphi 0, %s99
    %s114 = sphi 0, %s100
    %s118 = sphi 0, %s118
    %s120 = sphi 0, %s118
    %s121 = sphi 0, %s120
    %s135 = sphi 0, %s121
    %s139 = sphi 0, %s139
    %s141 = sphi 0, %s139
    %s142 = sphi 0, %s141
    %s156 = sphi 0, %s142
    %s160 = sphi 0, %s160
    %s162 = sphi 0, %s160
    %s163 = sphi 0, %s162
    %s177 = sphi 0, %s163
    %s181 = sphi 0, %s181
    %s183 = sphi 0, %s181
    %s184 = sphi 0, %s183
    %s198 = sphi 0, %s184
    %s202 = sphi 0, %s202
    %s204 = sphi 0, %s202
    %s205 = sphi 0, %s204
    %s219 = sphi 0, %s205
    %s227 = sphi 0, %s229
    %s230 = sphi 0, %s227
    %s231 = sphi 0, %s230
    %s247 = sphi 0, %s231
  $region4: #{pointnetfeat_forward.4} parent=0 // loop_header_branch
    %17 = sbr.rel (%p15) target = $region8
  $region5: #{pointnetfeat_forward.4} parent=0 // loop_body
    %s19 = ssub.s32 %s14, 1
    %s20 = ssub.s32 %s14, 2
    %s30 = sadd.s32 1, %s23
    %p31 = scmp.ge.s32.totalorder %s30, 1
    %s32 = scalar_select %p31, 0, %s30
    %s33 = sadd.s32 1, %s22
    %s34 = scalar_select %p31, %s33, %s22
    %p35 = scmp.ge.s32.totalorder %s34, 2
    %s36 = scalar_select %p35, 0, %s34
    %s37 = sadd.s32 1, %s21
    %s38 = scalar_select %p35, %s37, %s21
    %p39 = scmp.ge.s32.totalorder %s38, 1
    %s40 = scalar_select %p39, 0, %s38
    %s41 = sadd.s32 %s21, %s23
    %s42 = sadd.s32 %s40, %s32
    %s43 = ssub.s32 %s22, %s36
    %s44 = ssub.s32 %s41, %s42
    %s45 = sor.u32 %s43, %s44
    %p46 = scmp.eq.s32.totalorder %s45, 0
    %s48 = sadd.s32 %s47, 1
    %s49 = scalar_select %p46, %s47, %s48
    %p52 = pneg %p46
    %p53 = scmp.eq.s32.totalorder %s14, 1
    %p54 = por %p52, %p53
    %p55 = scmp.ne.s32.totalorder %s47, %s50
    %p56 = scmp.eq.s32.totalorder %s14, 0
    %p57 = por %p55, %p56
    %p58 = scmp.ne.s32.totalorder %s47, %s50
    %p59 = scmp.eq.s32.totalorder %s19, 1
    %p60 = por %p58, %p59
    %p61 = scmp.ne.s32.totalorder %s50, %s51
    %p62 = scmp.eq.s32.totalorder %s19, 0
    %p63 = por %p61, %p62
    %p64 = scmp.ne.s32.totalorder %s50, %s51
    %p65 = scmp.eq.s32.totalorder %s20, 1
    %p66 = por %p64, %p65
    %p68 = scmp.ne.s32.totalorder %s51, %s67
    %p69 = scmp.eq.s32.totalorder %s20, 0
    %p70 = por %p68, %p69
    %s71 = ssub.s32 %s22, %s36
    %p72 = scmp.eq.s32.totalorder %s71, 0
    %s74 = sadd.s32 %s73, 1
    %s75 = scalar_select %p72, %s73, %s74
    %p78 = pneg %p72
    %p79 = scmp.eq.s32.totalorder %s14, 1
    %p80 = por %p78, %p79
    %p81 = scmp.ne.s32.totalorder %s73, %s76
    %p82 = scmp.eq.s32.totalorder %s14, 0
    %p83 = por %p81, %p82
    %p84 = scmp.ne.s32.totalorder %s73, %s76
    %p85 = scmp.eq.s32.totalorder %s19, 1
    %p86 = por %p84, %p85
    %p87 = scmp.ne.s32.totalorder %s76, %s77
    %p88 = scmp.eq.s32.totalorder %s19, 0
    %p89 = por %p87, %p88
    %p90 = scmp.ne.s32.totalorder %s76, %s77
    %p91 = scmp.eq.s32.totalorder %s20, 1
    %p92 = por %p90, %p91
    %p94 = scmp.ne.s32.totalorder %s77, %s93
    %p95 = scmp.eq.s32.totalorder %s20, 0
    %p96 = por %p94, %p95
    %s98 = sadd.s32 %s97, 1
    %p101 = scmp.eq.s32.totalorder %s14, 1
    %p102 = scmp.ne.s32.totalorder %s97, %s99
    %p103 = scmp.eq.s32.totalorder %s14, 0
    %p104 = por %p102, %p103
    %p105 = scmp.ne.s32.totalorder %s97, %s99
    %p106 = scmp.eq.s32.totalorder %s19, 1
    %p107 = por %p105, %p106
    %p108 = scmp.ne.s32.totalorder %s99, %s100
    %p109 = scmp.eq.s32.totalorder %s19, 0
    %p110 = por %p108, %p109
    %p111 = scmp.ne.s32.totalorder %s99, %s100
    %p112 = scmp.eq.s32.totalorder %s20, 1
    %p113 = por %p111, %p112
    %p115 = scmp.ne.s32.totalorder %s100, %s114
    %p116 = scmp.eq.s32.totalorder %s20, 0
    %p117 = por %p115, %p116
    %s119 = sadd.s32 %s118, 1
    %p122 = scmp.eq.s32.totalorder %s14, 1
    %p123 = scmp.ne.s32.totalorder %s118, %s120
    %p124 = scmp.eq.s32.totalorder %s14, 0
    %p125 = por %p123, %p124
    %p126 = scmp.ne.s32.totalorder %s118, %s120
    %p127 = scmp.eq.s32.totalorder %s19, 1
    %p128 = por %p126, %p127
    %p129 = scmp.ne.s32.totalorder %s120, %s121
    %p130 = scmp.eq.s32.totalorder %s19, 0
    %p131 = por %p129, %p130
    %p132 = scmp.ne.s32.totalorder %s120, %s121
    %p133 = scmp.eq.s32.totalorder %s20, 1
    %p134 = por %p132, %p133
    %p136 = scmp.ne.s32.totalorder %s121, %s135
    %p137 = scmp.eq.s32.totalorder %s20, 0
    %p138 = por %p136, %p137
    %s140 = sadd.s32 %s139, 1
    %p143 = scmp.eq.s32.totalorder %s14, 1
    %p144 = scmp.ne.s32.totalorder %s139, %s141
    %p145 = scmp.eq.s32.totalorder %s14, 0
    %p146 = por %p144, %p145
    %p147 = scmp.ne.s32.totalorder %s139, %s141
    %p148 = scmp.eq.s32.totalorder %s19, 1
    %p149 = por %p147, %p148
    %p150 = scmp.ne.s32.totalorder %s141, %s142
    %p151 = scmp.eq.s32.totalorder %s19, 0
    %p152 = por %p150, %p151
    %p153 = scmp.ne.s32.totalorder %s141, %s142
    %p154 = scmp.eq.s32.totalorder %s20, 1
    %p155 = por %p153, %p154
    %p157 = scmp.ne.s32.totalorder %s142, %s156
    %p158 = scmp.eq.s32.totalorder %s20, 0
    %p159 = por %p157, %p158
    %s161 = sadd.s32 %s160, 1
    %p164 = scmp.eq.s32.totalorder %s14, 1
    %p165 = scmp.ne.s32.totalorder %s160, %s162
    %p166 = scmp.eq.s32.totalorder %s14, 0
    %p167 = por %p165, %p166
    %p168 = scmp.ne.s32.totalorder %s160, %s162
    %p169 = scmp.eq.s32.totalorder %s19, 1
    %p170 = por %p168, %p169
    %p171 = scmp.ne.s32.totalorder %s162, %s163
    %p172 = scmp.eq.s32.totalorder %s19, 0
    %p173 = por %p171, %p172
    %p174 = scmp.ne.s32.totalorder %s162, %s163
    %p175 = scmp.eq.s32.totalorder %s20, 1
    %p176 = por %p174, %p175
    %p178 = scmp.ne.s32.totalorder %s163, %s177
    %p179 = scmp.eq.s32.totalorder %s20, 0
    %p180 = por %p178, %p179
    %s182 = sadd.s32 %s181, 1
    %p185 = scmp.eq.s32.totalorder %s14, 1
    %p186 = scmp.ne.s32.totalorder %s181, %s183
    %p187 = scmp.eq.s32.totalorder %s14, 0
    %p188 = por %p186, %p187
    %p189 = scmp.ne.s32.totalorder %s181, %s183
    %p190 = scmp.eq.s32.totalorder %s19, 1
    %p191 = por %p189, %p190
    %p192 = scmp.ne.s32.totalorder %s183, %s184
    %p193 = scmp.eq.s32.totalorder %s19, 0
    %p194 = por %p192, %p193
    %p195 = scmp.ne.s32.totalorder %s183, %s184
    %p196 = scmp.eq.s32.totalorder %s20, 1
    %p197 = por %p195, %p196
    %p199 = scmp.ne.s32.totalorder %s184, %s198
    %p200 = scmp.eq.s32.totalorder %s20, 0
    %p201 = por %p199, %p200
    %s203 = sadd.s32 %s202, 1
    %p206 = scmp.eq.s32.totalorder %s14, 1
    %p207 = scmp.ne.s32.totalorder %s202, %s204
    %p208 = scmp.eq.s32.totalorder %s14, 0
    %p209 = por %p207, %p208
    %p210 = scmp.ne.s32.totalorder %s202, %s204
    %p211 = scmp.eq.s32.totalorder %s19, 1
    %p212 = por %p210, %p211
    %p213 = scmp.ne.s32.totalorder %s204, %s205
    %p214 = scmp.eq.s32.totalorder %s19, 0
    %p215 = por %p213, %p214
    %p216 = scmp.ne.s32.totalorder %s204, %s205
    %p217 = scmp.eq.s32.totalorder %s20, 1
    %p218 = por %p216, %p217
    %p220 = scmp.ne.s32.totalorder %s205, %s219
    %p221 = scmp.eq.s32.totalorder %s20, 0
    %p222 = por %p220, %p221
    %s223 = ssub.s32 %s22, %s36
    %s224 = ssub.s32 %s21, %s40
    %s225 = sor.u32 %s223, %s224
    %p226 = scmp.eq.s32.totalorder %s225, 0
    %s228 = sadd.s32 %s227, 1
    %s229 = scalar_select %p226, %s227, %s228
    %p232 = pneg %p226
    %p233 = scmp.eq.s32.totalorder %s14, 1
    %p234 = por %p232, %p233
    %p235 = scmp.ne.s32.totalorder %s227, %s230
    %p236 = scmp.eq.s32.totalorder %s14, 0
    %p237 = por %p235, %p236
    %p238 = scmp.ne.s32.totalorder %s227, %s230
    %p239 = scmp.eq.s32.totalorder %s19, 1
    %p240 = por %p238, %p239
    %p241 = scmp.ne.s32.totalorder %s230, %s231
    %p242 = scmp.eq.s32.totalorder %s19, 0
    %p243 = por %p241, %p242
    %p244 = scmp.ne.s32.totalorder %s230, %s231
    %p245 = scmp.eq.s32.totalorder %s20, 1
    %p246 = por %p244, %p245
    %p248 = scmp.ne.s32.totalorder %s231, %s247
    %p249 = scmp.eq.s32.totalorder %s20, 0
    %p250 = por %p248, %p249
    %p251 = scmp.le.s32.totalorder 1, %s14
    %p252 = scmp.lt.s32.totalorder %s14, 3
    %p253 = pnand %p251, %p252
    %p254 = pneg %p253
    // Predicated region
    $region9: #{pointnetfeat_forward.4} parent=5 // pred_check
      _
    $region10: #{pointnetfeat_forward.4} parent=5 // pred_check_branch
      %256 = sbr.rel (%p253) target = $region12
    $region11: #{pointnetfeat_forward.4} parent=5 // pred_region
      %s257 = ssub.s32 %s14, 1
      // Predicated region
      $region13: #{pointnetfeat_forward.4} parent=11 // pred_check
        %p258 = pneg %p110
      $region14: #{pointnetfeat_forward.4} parent=11 // pred_check_branch
        %260 = sbr.rel (%p258) target = $region16
      $region15: #{pointnetfeat_forward.4} parent=11 // pred_region
        _
      $region16: #{pointnetfeat_forward.4} parent=11 // pred_fallthru
        _
      // Predicated region
      $region17: #{pointnetfeat_forward.4} parent=11 // pred_check
        %p261 = pneg %p131
      $region18: #{pointnetfeat_forward.4} parent=11 // pred_check_branch
        %263 = sbr.rel (%p261) target = $region20
      $region19: #{pointnetfeat_forward.4} parent=11 // pred_region
        _
      $region20: #{pointnetfeat_forward.4} parent=11 // pred_fallthru
        _
      // Predicated region
      $region21: #{pointnetfeat_forward.4} parent=11 // pred_check
        %p264 = pneg %p152
      $region22: #{pointnetfeat_forward.4} parent=11 // pred_check_branch
        %266 = sbr.rel (%p264) target = $region24
      $region23: #{pointnetfeat_forward.4} parent=11 // pred_region
        _
      $region24: #{pointnetfeat_forward.4} parent=11 // pred_fallthru
        _
      // Predicated region
      $region25: #{pointnetfeat_forward.4} parent=11 // pred_check
        %p267 = pneg %p173
      $region26: #{pointnetfeat_forward.4} parent=11 // pred_check_branch
        %269 = sbr.rel (%p267) target = $region28
      $region27: #{pointnetfeat_forward.4} parent=11 // pred_region
        _
      $region28: #{pointnetfeat_forward.4} parent=11 // pred_fallthru
        _
      // Predicated region
      $region29: #{pointnetfeat_forward.4} parent=11 // pred_check
        %p270 = pneg %p194
      $region30: #{pointnetfeat_forward.4} parent=11 // pred_check_branch
        %272 = sbr.rel (%p270) target = $region32
      $region31: #{pointnetfeat_forward.4} parent=11 // pred_region
        _
      $region32: #{pointnetfeat_forward.4} parent=11 // pred_fallthru
        _
      // Predicated region
      $region33: #{pointnetfeat_forward.4} parent=11 // pred_check
        %p273 = pneg %p215
      $region34: #{pointnetfeat_forward.4} parent=11 // pred_check_branch
        %275 = sbr.rel (%p273) target = $region36
      $region35: #{pointnetfeat_forward.4} parent=11 // pred_region
        _
      $region36: #{pointnetfeat_forward.4} parent=11 // pred_fallthru
        _
    $region12: #{pointnetfeat_forward.4} parent=5 // pred_fallthru
      _
    %p276 = scmp.lt.s32.totalorder %s14, 2
    // Predicated region
    $region37: #{pointnetfeat_forward.4} parent=5 // pred_check
      %p277 = pneg %p276
    $region38: #{pointnetfeat_forward.4} parent=5 // pred_check_branch
      %279 = sbr.rel (%p277) target = $region40
    $region39: #{pointnetfeat_forward.4} parent=5 // pred_region
      // Predicated region
      $region41: #{pointnetfeat_forward.4} parent=39 // pred_check
        %p280 = pneg %p57
      $region42: #{pointnetfeat_forward.4} parent=39 // pred_check_branch
        %282 = sbr.rel (%p280) target = $region44
      $region43: #{pointnetfeat_forward.4} parent=39 // pred_region
        %s283 = sadd.s32 %s21, %s23
        %s284 = smul.u32 2, %s283
        %p285 = scmp.lt.s32.totalorder %s22, 1
        %s286 = scalar_select %p285, %s22, 1
        %p287 = scmp.lt.s32.totalorder %s284, 1
        %s288 = scalar_select %p287, %s284, 1
        %s289 = smul.addr %s286, 2
        %s290 = sadd.s32 %s288, %s289
        %s291 = smul.addr %s290, 4
        %s292 = scalar_lea.vmem %s0, %s291
        %s293 = sadd.s32 %s21, %s23
        %s294 = smul.u32 2, %s293
      $region44: #{pointnetfeat_forward.4} parent=39 // pred_fallthru
        _
      // Predicated region
      $region45: #{pointnetfeat_forward.4} parent=39 // pred_check
        %p295 = pneg %p83
      $region46: #{pointnetfeat_forward.4} parent=39 // pred_check_branch
        %297 = sbr.rel (%p295) target = $region48
      $region47: #{pointnetfeat_forward.4} parent=39 // pred_region
        %p298 = scmp.lt.s32.totalorder %s22, 1
        %s299 = scalar_select %p298, %s22, 1
        %s300 = smul.addr %s299, 8
        %s301 = smul.addr %s300, 4
        %s302 = scalar_lea.vmem %s1, %s301
      $region48: #{pointnetfeat_forward.4} parent=39 // pred_fallthru
        _
    $region40: #{pointnetfeat_forward.4} parent=5 // pred_fallthru
      _
    %p303 = scmp.le.s32.totalorder 1, %s14
    %p304 = scmp.lt.s32.totalorder %s14, 3
    %p305 = pnand %p303, %p304
    %p306 = pneg %p305
    // Predicated region
    $region49: #{pointnetfeat_forward.4} parent=5 // pred_check
      _
    $region50: #{pointnetfeat_forward.4} parent=5 // pred_check_branch
      %308 = sbr.rel (%p305) target = $region52
    $region51: #{pointnetfeat_forward.4} parent=5 // pred_region
      %s309 = ssub.s32 %s14, 1
      %s310 = sadd.s32 %s24, %s26
      %s311 = smul.u32 2, %s310
      %p312 = scmp.lt.s32.totalorder %s25, 1
      %s313 = scalar_select %p312, %s25, 1
      %p314 = scmp.lt.s32.totalorder %s311, 1
      %s315 = scalar_select %p314, %s311, 1
      %s316 = smul.addr %s313, 2
      %s317 = sadd.s32 %s315, %s316
      %s318 = smul.addr %s317, 4
      %s319 = scalar_lea.vmem %s0, %s318
      %p320 = pneg %p63
      %p321 = pneg %p60
      %p322 = scmp.lt.s32.totalorder %s25, 1
      %s323 = scalar_select %p322, %s25, 1
      %s324 = smul.addr %s323, 8
      %s325 = smul.addr %s324, 4
      %s326 = scalar_lea.vmem %s1, %s325
      %p327 = pneg %p89
      %p328 = pneg %p86
      %p329 = pneg %p110
      %p330 = pneg %p107
      %p331 = pneg %p131
      %p332 = pneg %p128
      %p333 = pneg %p152
      %p334 = pneg %p149
      %p335 = pneg %p173
      %p336 = pneg %p170
      %p337 = pneg %p194
      %p338 = pneg %p191
      %p339 = pneg %p215
      %p340 = pneg %p212
      %p341 = pneg %p243
      %p342 = pneg %p240
      %p343 = scmp.lt.s32.totalorder %s25, 1
      %s344 = scalar_select %p343, %s25, 1
      %p345 = scmp.lt.s32.totalorder %s24, 0
      %s346 = scalar_select %p345, %s24, 0
      %s347 = smul.addr %s346, 8
      %s348 = smul.addr %s344, 8
      %s349 = sadd.s32 %s347, %s348
      %s350 = scalar_lea.vmem %s8, %s349
      %s351 = sadd.s32 %s24, %s26
      %s352 = smul.u32 2, %s351
      %p353 = scmp.lt.s32.totalorder %s25, 1
      %s354 = scalar_select %p353, %s25, 1
      %p355 = scmp.lt.s32.totalorder %s352, 1
      %s356 = scalar_select %p355, %s352, 1
      %s357 = smul.addr %s354, 2
      %s358 = sadd.s32 %s356, %s357
      %s359 = smul.addr %s358, 4
      %s360 = scalar_lea.vmem %s0, %s359
      %s361 = sadd.s32 %s24, %s26
      %s362 = smul.u32 2, %s361
      %p363 = scmp.lt.s32.totalorder %s25, 1
      %s364 = scalar_select %p363, %s25, 1
      %s365 = smul.addr %s364, 8
      %s366 = smul.addr %s365, 4
      %s367 = scalar_lea.vmem %s1, %s366
      %p368 = scmp.lt.s32.totalorder %s25, 1
      %s369 = scalar_select %p368, %s25, 1
      %p370 = scmp.lt.s32.totalorder %s24, 0
      %s371 = scalar_select %p370, %s24, 0
      %s372 = smul.addr %s371, 8
      %s373 = smul.addr %s369, 8
      %s374 = sadd.s32 %s372, %s373
      %s375 = scalar_lea.vmem %s8, %s374
      %v377 = vld [vmem:[%s360] sm:$0xf]
      %v378 = vld [vmem:[%s360 + $0x4] sm:$0xf]
      %v379 = vld [vmem:[%s2] sm:$0xf]
      %v380 = vld [vmem:[%s3] sm:$0x1]
      %v382 = vlaneseq
      %v383 = vshrl.u32 %v382, 7
      %v384 = vsub.s32 0, %v383
      %v385 = vrot.slane %v380, %v384
      %v389 = vunpack.c.l.b16 %v377
      %v390 = vunpack.c.l.b16 %v378
      %v391 = vpack.c.b16 %v390, %v389
      %vm392 = vcmask 64512
      %v394 = vsel %vm392, %v391, 0
      %vm396 = vcmask 1043456
      %v398 = vsel %vm396, %v379, 0
      %400 = vmatprep.subr.bf16.mxu0 0
      %401 = vmatpush1.bf16.msra.mxu0 %v398
      %402 = vmatprep.subr.bf16.mxu0 0
      %403 = vmatpush1.bf16.msra.mxu0 0
      %404 = vmatprep.subr.bf16.mxu0 0
      %405 = vmatpush1.bf16.msra.mxu0 0
      %406 = vmatprep.subr.bf16.mxu0 0
      %407 = vmatpush1.bf16.msra.mxu0 0
      %408 = vmatprep.subr.bf16.mxu0 0
      %409 = vmatpush1.bf16.msra.mxu0 0
      %410 = vmatprep.subr.bf16.mxu0 0
      %411 = vmatpush1.bf16.msra.mxu0 0
      %412 = vmatprep.subr.bf16.mxu0 0
      %413 = vmatpush1.bf16.msra.mxu0 0
      %414 = vmatprep.subr.bf16.mxu0 0
      %415 = vmatpush1.bf16.msra.mxu0 0
      %416 = vmatprep.subr.bf16.mxu0 0
      %417 = vmatpush1.bf16.msra.mxu0 0
      %418 = vmatprep.subr.bf16.mxu0 0
      %419 = vmatpush1.bf16.msra.mxu0 0
      %420 = vmatprep.subr.bf16.mxu0 0
      %421 = vmatpush1.bf16.msra.mxu0 0
      %422 = vmatprep.subr.bf16.mxu0 0
      %423 = vmatpush1.bf16.msra.mxu0 0
      %424 = vmatprep.subr.bf16.mxu0 0
      %425 = vmatpush1.bf16.msra.mxu0 0
      %426 = vmatprep.subr.bf16.mxu0 0
      %427 = vmatpush1.bf16.msra.mxu0 0
      %428 = vmatprep.subr.bf16.mxu0 0
      %429 = vmatpush1.bf16.msra.mxu0 0
      %430 = vmatprep.subr.bf16.mxu0 0
      %431 = vmatpush1.bf16.msra.mxu0 0
      %432 = vmatprep.mubr.bf16.mxu0 0
      %433 = vmatmul.mubr.bf16.gmra.mrb[0].mxu0 %v394
      %v434 = vpop.f32.mrb[0].mxu0
      %v435 = vadd.f32 %v385, %v434
      %v436 = vpop.f32.mrb[0].mxu0
      %v437 = vpop.f32.mrb[0].mxu0
      %v438 = vadd.f32 %v385, %v437
      %v439 = vpop.f32.mrb[0].mxu0
      %440 = vdwg.mxu0
      %v441 = vmax.f32 %v435, 0.0
      %v442 = vmax.f32 %v438, 0.0
      %v443 = vpack.c.bf16 %v442, %v441
      %v444 = vld [vmem:[%s367] sm:$0xf]
      %v445 = vld [vmem:[%s367 + $0x4] sm:$0xf]
      %v446 = vld [vmem:[%s367 + $0x8] sm:$0xf]
      %v447 = vld [vmem:[%s367 + $0xc] sm:$0xf]
      %v448 = vld [vmem:[%s367 + $0x10] sm:$0xf]
      %v449 = vld [vmem:[%s367 + $0x14] sm:$0xf]
      %v450 = vld [vmem:[%s367 + $0x18] sm:$0xf]
      %v451 = vld [vmem:[%s367 + $0x1c] sm:$0xf]
      %v460 = vunpack.c.l.b16 %v444
      %v461 = vunpack.c.l.b16 %v445
      %v462 = vunpack.c.l.b16 %v446
      %v463 = vunpack.c.l.b16 %v447
      %v464 = vunpack.c.l.b16 %v448
      %v465 = vunpack.c.l.b16 %v449
      %v466 = vunpack.c.l.b16 %v450
      %v467 = vunpack.c.l.b16 %v451
      %v468 = vpack.c.b16 %v461, %v460
      %v469 = vpack.c.b16 %v463, %v462
      %v470 = vpack.c.b16 %v465, %v464
      %v471 = vpack.c.b16 %v467, %v466
      %vm476 = vcmask 523264
      %v478 = vsel %vm476, %v443, 0
      %480 = vmatprep.subr.bf16.mxu0 0
      %481 = vmatpush1.bf16.msra.mxu0 %v468
      %482 = vmatprep.subr.bf16.mxu0 0
      %483 = vmatpush1.bf16.msra.mxu0 %v469
      %484 = vmatprep.subr.bf16.mxu0 0
      %485 = vmatpush1.bf16.msra.mxu0 %v470
      %486 = vmatprep.subr.bf16.mxu0 0
      %487 = vmatpush1.bf16.msra.mxu0 %v471
      %488 = vmatprep.subr.bf16.mxu0 0
      %489 = vmatpush1.bf16.msra.mxu0 0
      %490 = vmatprep.subr.bf16.mxu0 0
      %491 = vmatpush1.bf16.msra.mxu0 0
      %492 = vmatprep.subr.bf16.mxu0 0
      %493 = vmatpush1.bf16.msra.mxu0 0
      %494 = vmatprep.subr.bf16.mxu0 0
      %495 = vmatpush1.bf16.msra.mxu0 0
      %496 = vmatprep.subr.bf16.mxu0 0
      %497 = vmatpush1.bf16.msra.mxu0 0
      %498 = vmatprep.subr.bf16.mxu0 0
      %499 = vmatpush1.bf16.msra.mxu0 0
      %500 = vmatprep.subr.bf16.mxu0 0
      %501 = vmatpush1.bf16.msra.mxu0 0
      %502 = vmatprep.subr.bf16.mxu0 0
      %503 = vmatpush1.bf16.msra.mxu0 0
      %504 = vmatprep.subr.bf16.mxu0 0
      %505 = vmatpush1.bf16.msra.mxu0 0
      %506 = vmatprep.subr.bf16.mxu0 0
      %507 = vmatpush1.bf16.msra.mxu0 0
      %508 = vmatprep.subr.bf16.mxu0 0
      %509 = vmatpush1.bf16.msra.mxu0 0
      %510 = vmatprep.subr.bf16.mxu0 0
      %511 = vmatpush1.bf16.msra.mxu0 0
      %512 = vmatprep.mubr.bf16.mxu0 0
      %513 = vmatmul.mubr.bf16.gmra.mrb[0].mxu0 %v478
      %v514 = vpop.f32.mrb[0].mxu0
      %v515 = vadd.f32 0.0, %v514
      %v516 = vpop.f32.mrb[0].mxu0
      %v517 = vpop.f32.mrb[0].mxu0
      %v518 = vadd.f32 0.0, %v517
      %v519 = vpop.f32.mrb[0].mxu0
      %520 = vdwg.mxu0
      %v521 = vpack.c.bf16 %v518, %v515
      %v522 = vld [vmem:[%s4] sm:$0xf]
      %v523 = vld [vmem:[%s4 + $0x4] sm:$0xf]
      %v524 = vld [vmem:[%s4 + $0x8] sm:$0xf]
      %v525 = vld [vmem:[%s4 + $0xc] sm:$0xf]
      %v526 = vld [vmem:[%s4 + $0x10] sm:$0xf]
      %v527 = vld [vmem:[%s4 + $0x14] sm:$0xf]
      %v528 = vld [vmem:[%s4 + $0x18] sm:$0xf]
      %v529 = vld [vmem:[%s4 + $0x1c] sm:$0xf]
      %v530 = vld [vmem:[%s5] sm:$0x1]
      %v532 = vlaneseq
      %v533 = vshrl.u32 %v532, 7
      %v534 = vsub.s32 0, %v533
      %v535 = vrot.slane %v530, %v534
      %v545 = vunpack.c.l.b16 %v522
      %v546 = vunpack.c.l.b16 %v523
      %v547 = vunpack.c.l.b16 %v524
      %v548 = vunpack.c.l.b16 %v525
      %v549 = vunpack.c.l.b16 %v526
      %v550 = vunpack.c.l.b16 %v527
      %v551 = vunpack.c.l.b16 %v528
      %v552 = vunpack.c.l.b16 %v529
      %v553 = vpack.c.b16 %v546, %v545
      %v554 = vpack.c.b16 %v548, %v547
      %v555 = vpack.c.b16 %v550, %v549
      %v556 = vpack.c.b16 %v552, %v551
      %v562 = vsel %vm476, %v521, 0
      %564 = vmatprep.subr.bf16.mxu0 0
      %565 = vmatpush1.bf16.msra.mxu0 %v553
      %566 = vmatprep.subr.bf16.mxu0 0
      %567 = vmatpush1.bf16.msra.mxu0 %v554
      %568 = vmatprep.subr.bf16.mxu0 0
      %569 = vmatpush1.bf16.msra.mxu0 %v555
      %570 = vmatprep.subr.bf16.mxu0 0
      %571 = vmatpush1.bf16.msra.mxu0 %v556
      %572 = vmatprep.subr.bf16.mxu0 0
      %573 = vmatpush1.bf16.msra.mxu0 0
      %574 = vmatprep.subr.bf16.mxu0 0
      %575 = vmatpush1.bf16.msra.mxu0 0
      %576 = vmatprep.subr.bf16.mxu0 0
      %577 = vmatpush1.bf16.msra.mxu0 0
      %578 = vmatprep.subr.bf16.mxu0 0
      %579 = vmatpush1.bf16.msra.mxu0 0
      %580 = vmatprep.subr.bf16.mxu0 0
      %581 = vmatpush1.bf16.msra.mxu0 0
      %582 = vmatprep.subr.bf16.mxu0 0
      %583 = vmatpush1.bf16.msra.mxu0 0
      %584 = vmatprep.subr.bf16.mxu0 0
      %585 = vmatpush1.bf16.msra.mxu0 0
      %586 = vmatprep.subr.bf16.mxu0 0
      %587 = vmatpush1.bf16.msra.mxu0 0
      %588 = vmatprep.subr.bf16.mxu0 0
      %589 = vmatpush1.bf16.msra.mxu0 0
      %590 = vmatprep.subr.bf16.mxu0 0
      %591 = vmatpush1.bf16.msra.mxu0 0
      %592 = vmatprep.subr.bf16.mxu0 0
      %593 = vmatpush1.bf16.msra.mxu0 0
      %594 = vmatprep.subr.bf16.mxu0 0
      %595 = vmatpush1.bf16.msra.mxu0 0
      %596 = vmatprep.mubr.bf16.mxu0 0
      %597 = vmatmul.mubr.bf16.gmra.mrb[0].mxu0 %v562
      %v598 = vpop.f32.mrb[0].mxu0
      %v599 = vadd.f32 %v535, %v598
      %v600 = vpop.f32.mrb[0].mxu0
      %v601 = vpop.f32.mrb[0].mxu0
      %v602 = vadd.f32 %v535, %v601
      %v603 = vpop.f32.mrb[0].mxu0
      %604 = vdwg.mxu0
      %v605 = vmax.f32 %v599, 0.0
      %v606 = vmax.f32 %v602, 0.0
      %v607 = vpack.c.bf16 %v606, %v605
      %v608 = vld [vmem:[%s6] sm:$0xff]
      %v609 = vld [vmem:[%s6 + $0x8] sm:$0xff]
      %v610 = vld [vmem:[%s6 + $0x10] sm:$0xff]
      %v611 = vld [vmem:[%s6 + $0x18] sm:$0xff]
      %v612 = vld [vmem:[%s6 + $0x20] sm:$0xff]
      %v613 = vld [vmem:[%s6 + $0x28] sm:$0xff]
      %v614 = vld [vmem:[%s6 + $0x30] sm:$0xff]
      %v615 = vld [vmem:[%s6 + $0x38] sm:$0xff]
      %v616 = vld [vmem:[%s6 + $0x40] sm:$0xff]
      %v617 = vld [vmem:[%s6 + $0x48] sm:$0xff]
      %v618 = vld [vmem:[%s6 + $0x50] sm:$0xff]
      %v619 = vld [vmem:[%s6 + $0x58] sm:$0xff]
      %v620 = vld [vmem:[%s6 + $0x60] sm:$0xff]
      %v621 = vld [vmem:[%s6 + $0x68] sm:$0xff]
      %v622 = vld [vmem:[%s6 + $0x70] sm:$0xff]
      %v623 = vld [vmem:[%s6 + $0x78] sm:$0xff]
      %v624 = vld [vmem:[%s6 + $0x80] sm:$0xff]
      %v625 = vld [vmem:[%s6 + $0x88] sm:$0xff]
      %v626 = vld [vmem:[%s6 + $0x90] sm:$0xff]
      %v627 = vld [vmem:[%s6 + $0x98] sm:$0xff]
      %v628 = vld [vmem:[%s6 + $0xa0] sm:$0xff]
      %v629 = vld [vmem:[%s6 + $0xa8] sm:$0xff]
      %v630 = vld [vmem:[%s6 + $0xb0] sm:$0xff]
      %v631 = vld [vmem:[%s6 + $0xb8] sm:$0xff]
      %v632 = vld [vmem:[%s6 + $0xc0] sm:$0xff]
      %v633 = vld [vmem:[%s6 + $0xc8] sm:$0xff]
      %v634 = vld [vmem:[%s6 + $0xd0] sm:$0xff]
      %v635 = vld [vmem:[%s6 + $0xd8] sm:$0xff]
      %v636 = vld [vmem:[%s6 + $0xe0] sm:$0xff]
      %v637 = vld [vmem:[%s6 + $0xe8] sm:$0xff]
      %v638 = vld [vmem:[%s6 + $0xf0] sm:$0xff]
      %v639 = vld [vmem:[%s6 + $0xf8] sm:$0xff]
      %v640 = vld [vmem:[%s6 + $0x100] sm:$0xff]
      %v641 = vld [vmem:[%s6 + $0x108] sm:$0xff]
      %v642 = vld [vmem:[%s6 + $0x110] sm:$0xff]
      %v643 = vld [vmem:[%s6 + $0x118] sm:$0xff]
      %v644 = vld [vmem:[%s6 + $0x120] sm:$0xff]
      %v645 = vld [vmem:[%s6 + $0x128] sm:$0xff]
      %v646 = vld [vmem:[%s6 + $0x130] sm:$0xff]
      %v647 = vld [vmem:[%s6 + $0x138] sm:$0xff]
      %v648 = vld [vmem:[%s6 + $0x140] sm:$0xff]
      %v649 = vld [vmem:[%s6 + $0x148] sm:$0xff]
      %v650 = vld [vmem:[%s6 + $0x150] sm:$0xff]
      %v651 = vld [vmem:[%s6 + $0x158] sm:$0xff]
      %v652 = vld [vmem:[%s6 + $0x160] sm:$0xff]
      %v653 = vld [vmem:[%s6 + $0x168] sm:$0xff]
      %v654 = vld [vmem:[%s6 + $0x170] sm:$0xff]
      %v655 = vld [vmem:[%s6 + $0x178] sm:$0xff]
      %v656 = vld [vmem:[%s6 + $0x180] sm:$0xff]
      %v657 = vld [vmem:[%s6 + $0x188] sm:$0xff]
      %v658 = vld [vmem:[%s6 + $0x190] sm:$0xff]
      %v659 = vld [vmem:[%s6 + $0x198] sm:$0xff]
      %v660 = vld [vmem:[%s6 + $0x1a0] sm:$0xff]
      %v661 = vld [vmem:[%s6 + $0x1a8] sm:$0xff]
      %v662 = vld [vmem:[%s6 + $0x1b0] sm:$0xff]
      %v663 = vld [vmem:[%s6 + $0x1b8] sm:$0xff]
      %v664 = vld [vmem:[%s6 + $0x1c0] sm:$0xff]
      %v665 = vld [vmem:[%s6 + $0x1c8] sm:$0xff]
      %v666 = vld [vmem:[%s6 + $0x1d0] sm:$0xff]
      %v667 = vld [vmem:[%s6 + $0x1d8] sm:$0xff]
      %v668 = vld [vmem:[%s6 + $0x1e0] sm:$0xff]
      %v669 = vld [vmem:[%s6 + $0x1e8] sm:$0xff]
      %v670 = vld [vmem:[%s6 + $0x1f0] sm:$0xff]
      %v671 = vld [vmem:[%s6 + $0x1f8] sm:$0xff]
      %v672 = vld [vmem:[%s7] sm:$0xff]
      %v674 = vlaneseq
      %v675 = vshrl.u32 %v674, 7
      %v676 = vsub.s32 0, %v675
      %v677 = vrot.slane %v672, %v676
      %v678 = vlaneseq
      %v679 = vshrl.u32 %v678, 7
      %v680 = vsub.s32 1, %v679
      %v681 = vrot.slane %v672, %v680
      %v682 = vlaneseq
      %v683 = vshrl.u32 %v682, 7
      %v684 = vsub.s32 2, %v683
      %v685 = vrot.slane %v672, %v684
      %v686 = vlaneseq
      %v687 = vshrl.u32 %v686, 7
      %v688 = vsub.s32 3, %v687
      %v689 = vrot.slane %v672, %v688
      %v690 = vlaneseq
      %v691 = vshrl.u32 %v690, 7
      %v692 = vsub.s32 4, %v691
      %v693 = vrot.slane %v672, %v692
      %v694 = vlaneseq
      %v695 = vshrl.u32 %v694, 7
      %v696 = vsub.s32 5, %v695
      %v697 = vrot.slane %v672, %v696
      %v698 = vlaneseq
      %v699 = vshrl.u32 %v698, 7
      %v700 = vsub.s32 6, %v699
      %v701 = vrot.slane %v672, %v700
      %v702 = vlaneseq
      %v703 = vshrl.u32 %v702, 7
      %v704 = vsub.s32 7, %v703
      %v705 = vrot.slane %v672, %v704
      %v778 = vunpack.c.l.b16 %v608
      %v779 = vunpack.c.h.b16 %v608
      %v780 = vunpack.c.l.b16 %v609
      %v781 = vunpack.c.h.b16 %v609
      %v782 = vunpack.c.l.b16 %v610
      %v783 = vunpack.c.h.b16 %v610
      %v784 = vunpack.c.l.b16 %v611
      %v785 = vunpack.c.h.b16 %v611
      %v786 = vunpack.c.l.b16 %v612
      %v787 = vunpack.c.h.b16 %v612
      %v788 = vunpack.c.l.b16 %v613
      %v789 = vunpack.c.h.b16 %v613
      %v790 = vunpack.c.l.b16 %v614
      %v791 = vunpack.c.h.b16 %v614
      %v792 = vunpack.c.l.b16 %v615
      %v793 = vunpack.c.h.b16 %v615
      %v794 = vunpack.c.l.b16 %v616
      %v795 = vunpack.c.h.b16 %v616
      %v796 = vunpack.c.l.b16 %v617
      %v797 = vunpack.c.h.b16 %v617
      %v798 = vunpack.c.l.b16 %v618
      %v799 = vunpack.c.h.b16 %v618
      %v800 = vunpack.c.l.b16 %v619
      %v801 = vunpack.c.h.b16 %v619
      %v802 = vunpack.c.l.b16 %v620
      %v803 = vunpack.c.h.b16 %v620
      %v804 = vunpack.c.l.b16 %v621
      %v805 = vunpack.c.h.b16 %v621
      %v806 = vunpack.c.l.b16 %v622
      %v807 = vunpack.c.h.b16 %v622
      %v808 = vunpack.c.l.b16 %v623
      %v809 = vunpack.c.h.b16 %v623
      %v810 = vunpack.c.l.b16 %v624
      %v811 = vunpack.c.h.b16 %v624
      %v812 = vunpack.c.l.b16 %v625
      %v813 = vunpack.c.h.b16 %v625
      %v814 = vunpack.c.l.b16 %v626
      %v815 = vunpack.c.h.b16 %v626
      %v816 = vunpack.c.l.b16 %v627
      %v817 = vunpack.c.h.b16 %v627
      %v818 = vunpack.c.l.b16 %v628
      %v819 = vunpack.c.h.b16 %v628
      %v820 = vunpack.c.l.b16 %v629
      %v821 = vunpack.c.h.b16 %v629
      %v822 = vunpack.c.l.b16 %v630
      %v823 = vunpack.c.h.b16 %v630
      %v824 = vunpack.c.l.b16 %v631
      %v825 = vunpack.c.h.b16 %v631
      %v826 = vunpack.c.l.b16 %v632
      %v827 = vunpack.c.h.b16 %v632
      %v828 = vunpack.c.l.b16 %v633
      %v829 = vunpack.c.h.b16 %v633
      %v830 = vunpack.c.l.b16 %v634
      %v831 = vunpack.c.h.b16 %v634
      %v832 = vunpack.c.l.b16 %v635
      %v833 = vunpack.c.h.b16 %v635
      %v834 = vunpack.c.l.b16 %v636
      %v835 = vunpack.c.h.b16 %v636
      %v836 = vunpack.c.l.b16 %v637
      %v837 = vunpack.c.h.b16 %v637
      %v838 = vunpack.c.l.b16 %v638
      %v839 = vunpack.c.h.b16 %v638
      %v840 = vunpack.c.l.b16 %v639
      %v841 = vunpack.c.h.b16 %v639
      %v842 = vunpack.c.l.b16 %v640
      %v843 = vunpack.c.h.b16 %v640
      %v844 = vunpack.c.l.b16 %v641
      %v845 = vunpack.c.h.b16 %v641
      %v846 = vunpack.c.l.b16 %v642
      %v847 = vunpack.c.h.b16 %v642
      %v848 = vunpack.c.l.b16 %v643
      %v849 = vunpack.c.h.b16 %v643
      %v850 = vunpack.c.l.b16 %v644
      %v851 = vunpack.c.h.b16 %v644
      %v852 = vunpack.c.l.b16 %v645
      %v853 = vunpack.c.h.b16 %v645
      %v854 = vunpack.c.l.b16 %v646
      %v855 = vunpack.c.h.b16 %v646
      %v856 = vunpack.c.l.b16 %v647
      %v857 = vunpack.c.h.b16 %v647
      %v858 = vunpack.c.l.b16 %v648
      %v859 = vunpack.c.h.b16 %v648
      %v860 = vunpack.c.l.b16 %v649
      %v861 = vunpack.c.h.b16 %v649
      %v862 = vunpack.c.l.b16 %v650
      %v863 = vunpack.c.h.b16 %v650
      %v864 = vunpack.c.l.b16 %v651
      %v865 = vunpack.c.h.b16 %v651
      %v866 = vunpack.c.l.b16 %v652
      %v867 = vunpack.c.h.b16 %v652
      %v868 = vunpack.c.l.b16 %v653
      %v869 = vunpack.c.h.b16 %v653
      %v870 = vunpack.c.l.b16 %v654
      %v871 = vunpack.c.h.b16 %v654
      %v872 = vunpack.c.l.b16 %v655
      %v873 = vunpack.c.h.b16 %v655
      %v874 = vunpack.c.l.b16 %v656
      %v875 = vunpack.c.h.b16 %v656
      %v876 = vunpack.c.l.b16 %v657
      %v877 = vunpack.c.h.b16 %v657
      %v878 = vunpack.c.l.b16 %v658
      %v879 = vunpack.c.h.b16 %v658
      %v880 = vunpack.c.l.b16 %v659
      %v881 = vunpack.c.h.b16 %v659
      %v882 = vunpack.c.l.b16 %v660
      %v883 = vunpack.c.h.b16 %v660
      %v884 = vunpack.c.l.b16 %v661
      %v885 = vunpack.c.h.b16 %v661
      %v886 = vunpack.c.l.b16 %v662
      %v887 = vunpack.c.h.b16 %v662
      %v888 = vunpack.c.l.b16 %v663
      %v889 = vunpack.c.h.b16 %v663
      %v890 = vunpack.c.l.b16 %v664
      %v891 = vunpack.c.h.b16 %v664
      %v892 = vunpack.c.l.b16 %v665
      %v893 = vunpack.c.h.b16 %v665
      %v894 = vunpack.c.l.b16 %v666
      %v895 = vunpack.c.h.b16 %v666
      %v896 = vunpack.c.l.b16 %v667
      %v897 = vunpack.c.h.b16 %v667
      %v898 = vunpack.c.l.b16 %v668
      %v899 = vunpack.c.h.b16 %v668
      %v900 = vunpack.c.l.b16 %v669
      %v901 = vunpack.c.h.b16 %v669
      %v902 = vunpack.c.l.b16 %v670
      %v903 = vunpack.c.h.b16 %v670
      %v904 = vunpack.c.l.b16 %v671
      %v905 = vunpack.c.h.b16 %v671
      %v906 = vpack.c.b16 %v786, %v778
      %v907 = vpack.c.b16 %v787, %v779
      %v908 = vpack.c.b16 %v788, %v780
      %v909 = vpack.c.b16 %v789, %v781
      %v910 = vpack.c.b16 %v790, %v782
      %v911 = vpack.c.b16 %v791, %v783
      %v912 = vpack.c.b16 %v792, %v784
      %v913 = vpack.c.b16 %v793, %v785
      %v914 = vpack.c.b16 %v802, %v794
      %v915 = vpack.c.b16 %v803, %v795
      %v916 = vpack.c.b16 %v804, %v796
      %v917 = vpack.c.b16 %v805, %v797
      %v918 = vpack.c.b16 %v806, %v798
      %v919 = vpack.c.b16 %v807, %v799
      %v920 = vpack.c.b16 %v808, %v800
      %v921 = vpack.c.b16 %v809, %v801
      %v922 = vpack.c.b16 %v818, %v810
      %v923 = vpack.c.b16 %v819, %v811
      %v924 = vpack.c.b16 %v820, %v812
      %v925 = vpack.c.b16 %v821, %v813
      %v926 = vpack.c.b16 %v822, %v814
      %v927 = vpack.c.b16 %v823, %v815
      %v928 = vpack.c.b16 %v824, %v816
      %v929 = vpack.c.b16 %v825, %v817
      %v930 = vpack.c.b16 %v834, %v826
      %v931 = vpack.c.b16 %v835, %v827
      %v932 = vpack.c.b16 %v836, %v828
      %v933 = vpack.c.b16 %v837, %v829
      %v934 = vpack.c.b16 %v838, %v830
      %v935 = vpack.c.b16 %v839, %v831
      %v936 = vpack.c.b16 %v840, %v832
      %v937 = vpack.c.b16 %v841, %v833
      %v938 = vpack.c.b16 %v850, %v842
      %v939 = vpack.c.b16 %v851, %v843
      %v940 = vpack.c.b16 %v852, %v844
      %v941 = vpack.c.b16 %v853, %v845
      %v942 = vpack.c.b16 %v854, %v846
      %v943 = vpack.c.b16 %v855, %v847
      %v944 = vpack.c.b16 %v856, %v848
      %v945 = vpack.c.b16 %v857, %v849
      %v946 = vpack.c.b16 %v866, %v858
      %v947 = vpack.c.b16 %v867, %v859
      %v948 = vpack.c.b16 %v868, %v860
      %v949 = vpack.c.b16 %v869, %v861
      %v950 = vpack.c.b16 %v870, %v862
      %v951 = vpack.c.b16 %v871, %v863
      %v952 = vpack.c.b16 %v872, %v864
      %v953 = vpack.c.b16 %v873, %v865
      %v954 = vpack.c.b16 %v882, %v874
      %v955 = vpack.c.b16 %v883, %v875
      %v956 = vpack.c.b16 %v884, %v876
      %v957 = vpack.c.b16 %v885, %v877
      %v958 = vpack.c.b16 %v886, %v878
      %v959 = vpack.c.b16 %v887, %v879
      %v960 = vpack.c.b16 %v888, %v880
      %v961 = vpack.c.b16 %v889, %v881
      %v962 = vpack.c.b16 %v898, %v890
      %v963 = vpack.c.b16 %v899, %v891
      %v964 = vpack.c.b16 %v900, %v892
      %v965 = vpack.c.b16 %v901, %v893
      %v966 = vpack.c.b16 %v902, %v894
      %v967 = vpack.c.b16 %v903, %v895
      %v968 = vpack.c.b16 %v904, %v896
      %v969 = vpack.c.b16 %v905, %v897
      %1034 = vmatprep.subr.bf16.mxu0 %v907
      %1035 = vmatpush1.bf16.msra.mxu0 %v906
      %1036 = vmatprep.subr.bf16.mxu0 %v915
      %1037 = vmatpush1.bf16.msra.mxu0 %v914
      %1038 = vmatprep.subr.bf16.mxu0 %v923
      %1039 = vmatpush1.bf16.msra.mxu0 %v922
      %1040 = vmatprep.subr.bf16.mxu0 %v931
      %1041 = vmatpush1.bf16.msra.mxu0 %v930
      %1042 = vmatprep.subr.bf16.mxu0 %v939
      %1043 = vmatpush1.bf16.msra.mxu0 %v938
      %1044 = vmatprep.subr.bf16.mxu0 %v947
      %1045 = vmatpush1.bf16.msra.mxu0 %v946
      %1046 = vmatprep.subr.bf16.mxu0 %v955
      %1047 = vmatpush1.bf16.msra.mxu0 %v954
      %1048 = vmatprep.subr.bf16.mxu0 %v963
      %1049 = vmatpush1.bf16.msra.mxu0 %v962
      %1050 = vmatprep.subr.bf16.mxu0 0
      %1051 = vmatpush1.bf16.msra.mxu0 0
      %1052 = vmatprep.subr.bf16.mxu0 0
      %1053 = vmatpush1.bf16.msra.mxu0 0
      %1054 = vmatprep.subr.bf16.mxu0 0
      %1055 = vmatpush1.bf16.msra.mxu0 0
      %1056 = vmatprep.subr.bf16.mxu0 0
      %1057 = vmatpush1.bf16.msra.mxu0 0
      %1058 = vmatprep.subr.bf16.mxu0 0
      %1059 = vmatpush1.bf16.msra.mxu0 0
      %1060 = vmatprep.subr.bf16.mxu0 0
      %1061 = vmatpush1.bf16.msra.mxu0 0
      %1062 = vmatprep.subr.bf16.mxu0 0
      %1063 = vmatpush1.bf16.msra.mxu0 0
      %1064 = vmatprep.subr.bf16.mxu0 0
      %1065 = vmatpush1.bf16.msra.mxu0 0
      %1066 = vmatprep.mubr.bf16.mxu0 0
      %1067 = vmatmul.mubr.bf16.gmra.mrb[0].mxu0 %v607
      %v1068 = vpop.f32.mrb[0].mxu0
      %v1069 = vadd.f32 %v677, %v1068
      %v1070 = vpop.f32.mrb[0].mxu0
      %v1071 = vadd.f32 %v681, %v1070
      %v1072 = vpop.f32.mrb[0].mxu0
      %v1073 = vadd.f32 %v677, %v1072
      %v1074 = vpop.f32.mrb[0].mxu0
      %v1075 = vadd.f32 %v681, %v1074
      %1076 = vdwg.mxu0
      %1077 = vmatprep.subr.bf16.mxu0 %v909
      %1078 = vmatpush1.bf16.msra.mxu0 %v908
      %1079 = vmatprep.subr.bf16.mxu0 %v917
      %1080 = vmatpush1.bf16.msra.mxu0 %v916
      %1081 = vmatprep.subr.bf16.mxu0 %v925
      %1082 = vmatpush1.bf16.msra.mxu0 %v924
      %1083 = vmatprep.subr.bf16.mxu0 %v933
      %1084 = vmatpush1.bf16.msra.mxu0 %v932
      %1085 = vmatprep.subr.bf16.mxu0 %v941
      %1086 = vmatpush1.bf16.msra.mxu0 %v940
      %1087 = vmatprep.subr.bf16.mxu0 %v949
      %1088 = vmatpush1.bf16.msra.mxu0 %v948
      %1089 = vmatprep.subr.bf16.mxu0 %v957
      %1090 = vmatpush1.bf16.msra.mxu0 %v956
      %1091 = vmatprep.subr.bf16.mxu0 %v965
      %1092 = vmatpush1.bf16.msra.mxu0 %v964
      %1093 = vmatprep.subr.bf16.mxu0 0
      %1094 = vmatpush1.bf16.msra.mxu0 0
      %1095 = vmatprep.subr.bf16.mxu0 0
      %1096 = vmatpush1.bf16.msra.mxu0 0
      %1097 = vmatprep.subr.bf16.mxu0 0
      %1098 = vmatpush1.bf16.msra.mxu0 0
      %1099 = vmatprep.subr.bf16.mxu0 0
      %1100 = vmatpush1.bf16.msra.mxu0 0
      %1101 = vmatprep.subr.bf16.mxu0 0
      %1102 = vmatpush1.bf16.msra.mxu0 0
      %1103 = vmatprep.subr.bf16.mxu0 0
      %1104 = vmatpush1.bf16.msra.mxu0 0
      %1105 = vmatprep.subr.bf16.mxu0 0
      %1106 = vmatpush1.bf16.msra.mxu0 0
      %1107 = vmatprep.subr.bf16.mxu0 0
      %1108 = vmatpush1.bf16.msra.mxu0 0
      %1109 = vmatprep.mubr.bf16.mxu0 0
      %1110 = vmatmul.mubr.bf16.gmra.mrb[0].mxu0 %v607
      %v1111 = vpop.f32.mrb[0].mxu0
      %v1112 = vadd.f32 %v685, %v1111
      %v1113 = vpop.f32.mrb[0].mxu0
      %v1114 = vadd.f32 %v689, %v1113
      %v1115 = vpop.f32.mrb[0].mxu0
      %v1116 = vadd.f32 %v685, %v1115
      %v1117 = vpop.f32.mrb[0].mxu0
      %v1118 = vadd.f32 %v689, %v1117
      %1119 = vdwg.mxu0
      %1120 = vmatprep.subr.bf16.mxu0 %v911
      %1121 = vmatpush1.bf16.msra.mxu0 %v910
      %1122 = vmatprep.subr.bf16.mxu0 %v919
      %1123 = vmatpush1.bf16.msra.mxu0 %v918
      %1124 = vmatprep.subr.bf16.mxu0 %v927
      %1125 = vmatpush1.bf16.msra.mxu0 %v926
      %1126 = vmatprep.subr.bf16.mxu0 %v935
      %1127 = vmatpush1.bf16.msra.mxu0 %v934
      %1128 = vmatprep.subr.bf16.mxu0 %v943
      %1129 = vmatpush1.bf16.msra.mxu0 %v942
      %1130 = vmatprep.subr.bf16.mxu0 %v951
      %1131 = vmatpush1.bf16.msra.mxu0 %v950
      %1132 = vmatprep.subr.bf16.mxu0 %v959
      %1133 = vmatpush1.bf16.msra.mxu0 %v958
      %1134 = vmatprep.subr.bf16.mxu0 %v967
      %1135 = vmatpush1.bf16.msra.mxu0 %v966
      %1136 = vmatprep.subr.bf16.mxu0 0
      %1137 = vmatpush1.bf16.msra.mxu0 0
      %1138 = vmatprep.subr.bf16.mxu0 0
      %1139 = vmatpush1.bf16.msra.mxu0 0
      %1140 = vmatprep.subr.bf16.mxu0 0
      %1141 = vmatpush1.bf16.msra.mxu0 0
      %1142 = vmatprep.subr.bf16.mxu0 0
      %1143 = vmatpush1.bf16.msra.mxu0 0
      %1144 = vmatprep.subr.bf16.mxu0 0
      %1145 = vmatpush1.bf16.msra.mxu0 0
      %1146 = vmatprep.subr.bf16.mxu0 0
      %1147 = vmatpush1.bf16.msra.mxu0 0
      %1148 = vmatprep.subr.bf16.mxu0 0
      %1149 = vmatpush1.bf16.msra.mxu0 0
      %1150 = vmatprep.subr.bf16.mxu0 0
      %1151 = vmatpush1.bf16.msra.mxu0 0
      %1152 = vmatprep.mubr.bf16.mxu0 0
      %1153 = vmatmul.mubr.bf16.gmra.mrb[0].mxu0 %v607
      %v1154 = vpop.f32.mrb[0].mxu0
      %v1155 = vadd.f32 %v693, %v1154
      %v1156 = vpop.f32.mrb[0].mxu0
      %v1157 = vadd.f32 %v697, %v1156
      %v1158 = vpop.f32.mrb[0].mxu0
      %v1159 = vadd.f32 %v693, %v1158
      %v1160 = vpop.f32.mrb[0].mxu0
      %v1161 = vadd.f32 %v697, %v1160
      %1162 = vdwg.mxu0
      %1163 = vmatprep.subr.bf16.mxu0 %v913
      %1164 = vmatpush1.bf16.msra.mxu0 %v912
      %1165 = vmatprep.subr.bf16.mxu0 %v921
      %1166 = vmatpush1.bf16.msra.mxu0 %v920
      %1167 = vmatprep.subr.bf16.mxu0 %v929
      %1168 = vmatpush1.bf16.msra.mxu0 %v928
      %1169 = vmatprep.subr.bf16.mxu0 %v937
      %1170 = vmatpush1.bf16.msra.mxu0 %v936
      %1171 = vmatprep.subr.bf16.mxu0 %v945
      %1172 = vmatpush1.bf16.msra.mxu0 %v944
      %1173 = vmatprep.subr.bf16.mxu0 %v953
      %1174 = vmatpush1.bf16.msra.mxu0 %v952
      %1175 = vmatprep.subr.bf16.mxu0 %v961
      %1176 = vmatpush1.bf16.msra.mxu0 %v960
      %1177 = vmatprep.subr.bf16.mxu0 %v969
      %1178 = vmatpush1.bf16.msra.mxu0 %v968
      %1179 = vmatprep.subr.bf16.mxu0 0
      %1180 = vmatpush1.bf16.msra.mxu0 0
      %1181 = vmatprep.subr.bf16.mxu0 0
      %1182 = vmatpush1.bf16.msra.mxu0 0
      %1183 = vmatprep.subr.bf16.mxu0 0
      %1184 = vmatpush1.bf16.msra.mxu0 0
      %1185 = vmatprep.subr.bf16.mxu0 0
      %1186 = vmatpush1.bf16.msra.mxu0 0
      %1187 = vmatprep.subr.bf16.mxu0 0
      %1188 = vmatpush1.bf16.msra.mxu0 0
      %1189 = vmatprep.subr.bf16.mxu0 0
      %1190 = vmatpush1.bf16.msra.mxu0 0
      %1191 = vmatprep.subr.bf16.mxu0 0
      %1192 = vmatpush1.bf16.msra.mxu0 0
      %1193 = vmatprep.subr.bf16.mxu0 0
      %1194 = vmatpush1.bf16.msra.mxu0 0
      %1195 = vmatprep.mubr.bf16.mxu0 0
      %1196 = vmatmul.mubr.bf16.gmra.mrb[0].mxu0 %v607
      %v1197 = vpop.f32.mrb[0].mxu0
      %v1198 = vadd.f32 %v701, %v1197
      %v1199 = vpop.f32.mrb[0].mxu0
      %v1200 = vadd.f32 %v705, %v1199
      %v1201 = vpop.f32.mrb[0].mxu0
      %v1202 = vadd.f32 %v701, %v1201
      %v1203 = vpop.f32.mrb[0].mxu0
      %v1204 = vadd.f32 %v705, %v1203
      %1205 = vdwg.mxu0
      %v1206 = vmax.f32 %v1069, %v1073
      %v1207 = vrot.slane %v1206, 4
      %v1208 = vmax.f32 %v1206, %v1207
      %v1209 = vrot.slane %v1208, 2
      %v1210 = vmax.f32 %v1208, %v1209
      %v1211 = vrot.slane %v1210, 1
      %v1212 = vmax.f32 %v1210, %v1211
      %v1213 = vmax.f32 %v1071, %v1075
      %v1214 = vrot.slane %v1213, 4
      %v1215 = vmax.f32 %v1213, %v1214
      %v1216 = vrot.slane %v1215, 2
      %v1217 = vmax.f32 %v1215, %v1216
      %v1218 = vrot.slane %v1217, 1
      %v1219 = vmax.f32 %v1217, %v1218
      %v1220 = vmax.f32 %v1112, %v1116
      %v1221 = vrot.slane %v1220, 4
      %v1222 = vmax.f32 %v1220, %v1221
      %v1223 = vrot.slane %v1222, 2
      %v1224 = vmax.f32 %v1222, %v1223
      %v1225 = vrot.slane %v1224, 1
      %v1226 = vmax.f32 %v1224, %v1225
      %v1227 = vmax.f32 %v1114, %v1118
      %v1228 = vrot.slane %v1227, 4
      %v1229 = vmax.f32 %v1227, %v1228
      %v1230 = vrot.slane %v1229, 2
      %v1231 = vmax.f32 %v1229, %v1230
      %v1232 = vrot.slane %v1231, 1
      %v1233 = vmax.f32 %v1231, %v1232
      %v1234 = vmax.f32 %v1155, %v1159
      %v1235 = vrot.slane %v1234, 4
      %v1236 = vmax.f32 %v1234, %v1235
      %v1237 = vrot.slane %v1236, 2
      %v1238 = vmax.f32 %v1236, %v1237
      %v1239 = vrot.slane %v1238, 1
      %v1240 = vmax.f32 %v1238, %v1239
      %v1241 = vmax.f32 %v1157, %v1161
      %v1242 = vrot.slane %v1241, 4
      %v1243 = vmax.f32 %v1241, %v1242
      %v1244 = vrot.slane %v1243, 2
      %v1245 = vmax.f32 %v1243, %v1244
      %v1246 = vrot.slane %v1245, 1
      %v1247 = vmax.f32 %v1245, %v1246
      %v1248 = vmax.f32 %v1198, %v1202
      %v1249 = vrot.slane %v1248, 4
      %v1250 = vmax.f32 %v1248, %v1249
      %v1251 = vrot.slane %v1250, 2
      %v1252 = vmax.f32 %v1250, %v1251
      %v1253 = vrot.slane %v1252, 1
      %v1254 = vmax.f32 %v1252, %v1253
      %v1255 = vmax.f32 %v1200, %v1204
      %v1256 = vrot.slane %v1255, 4
      %v1257 = vmax.f32 %v1255, %v1256
      %v1258 = vrot.slane %v1257, 2
      %v1259 = vmax.f32 %v1257, %v1258
      %v1260 = vrot.slane %v1259, 1
      %v1261 = vmax.f32 %v1259, %v1260
      %p1262 = scmp.eq.s32.totalorder %s26, 0
      // Predicated region
      $region53: #{pointnetfeat_forward.4} parent=51 // pred_check
        %p1263 = pneg %p1262
      $region54: #{pointnetfeat_forward.4} parent=51 // pred_check_branch
        %1265 = sbr.rel (%p1263) target = $region56
      $region55: #{pointnetfeat_forward.4} parent=51 // pred_region
        %v1274 = vcombine.low %v1212, %v1219
        %v1275 = vcombine.low %v1226, %v1233
        %v1276 = vcombine.low %v1240, %v1247
        %v1277 = vcombine.low %v1254, %v1261
        %v1279 = vunpack.c.l.s4 1966171168
        %v1280 = vunpack.c.0.s8 %v1279
        %v1281 = vlaneseq
        %v1282 = vshrl.u32 %v1281, 7
        %v1283 = vsub.s32 %v1280, %v1282
        %v1284 = vrot.slane %v1274, %v1283
        %v1286 = vunpack.c.l.s4 1966171168
        %v1287 = vunpack.c.0.s8 %v1286
        %v1288 = vlaneseq
        %v1289 = vshrl.u32 %v1288, 7
        %v1290 = vsub.s32 %v1287, %v1289
        %v1291 = vrot.slane %v1275, %v1290
        %v1293 = vunpack.c.l.s4 1966171168
        %v1294 = vunpack.c.0.s8 %v1293
        %v1295 = vlaneseq
        %v1296 = vshrl.u32 %v1295, 7
        %v1297 = vsub.s32 %v1294, %v1296
        %v1298 = vrot.slane %v1276, %v1297
        %v1300 = vunpack.c.l.s4 1966171168
        %v1301 = vunpack.c.0.s8 %v1300
        %v1302 = vlaneseq
        %v1303 = vshrl.u32 %v1302, 7
        %v1304 = vsub.s32 %v1301, %v1303
        %v1305 = vrot.slane %v1277, %v1304
        %v1306 = vcombine.low %v1284, %v1291
        %v1307 = vcombine.low %v1298, %v1305
        %v1309 = vunpack.c.l.s4 1966171168
        %v1310 = vunpack.c.0.s8 %v1309
        %v1311 = vlaneseq
        %v1312 = vshrl.u32 %v1311, 7
        %v1313 = vsub.s32 %v1310, %v1312
        %v1314 = vrot.slane %v1306, %v1313
        %v1316 = vunpack.c.l.s4 1966171168
        %v1317 = vunpack.c.0.s8 %v1316
        %v1318 = vlaneseq
        %v1319 = vshrl.u32 %v1318, 7
        %v1320 = vsub.s32 %v1317, %v1319
        %v1321 = vrot.slane %v1307, %v1320
        %v1322 = vcombine.low %v1314, %v1321
        %1324 = vst [vmem:[%s375] sm:$0xff] %v1322
      $region56: #{pointnetfeat_forward.4} parent=51 // pred_fallthru
        _
      %p1325 = scmp.gt.s32.totalorder %s26, 0
      // Predicated region
      $region57: #{pointnetfeat_forward.4} parent=51 // pred_check
        %p1326 = pneg %p1325
      $region58: #{pointnetfeat_forward.4} parent=51 // pred_check_branch
        %1328 = sbr.rel (%p1326) target = $region60
      $region59: #{pointnetfeat_forward.4} parent=51 // pred_region
        %v1329 = vld [vmem:[%s375] sm:$0xff]
        %v1338 = vcombine.low %v1212, %v1219
        %v1339 = vcombine.low %v1226, %v1233
        %v1340 = vcombine.low %v1240, %v1247
        %v1341 = vcombine.low %v1254, %v1261
        %v1343 = vunpack.c.l.s4 1966171168
        %v1344 = vunpack.c.0.s8 %v1343
        %v1345 = vlaneseq
        %v1346 = vshrl.u32 %v1345, 7
        %v1347 = vsub.s32 %v1344, %v1346
        %v1348 = vrot.slane %v1338, %v1347
        %v1350 = vunpack.c.l.s4 1966171168
        %v1351 = vunpack.c.0.s8 %v1350
        %v1352 = vlaneseq
        %v1353 = vshrl.u32 %v1352, 7
        %v1354 = vsub.s32 %v1351, %v1353
        %v1355 = vrot.slane %v1339, %v1354
        %v1357 = vunpack.c.l.s4 1966171168
        %v1358 = vunpack.c.0.s8 %v1357
        %v1359 = vlaneseq
        %v1360 = vshrl.u32 %v1359, 7
        %v1361 = vsub.s32 %v1358, %v1360
        %v1362 = vrot.slane %v1340, %v1361
        %v1364 = vunpack.c.l.s4 1966171168
        %v1365 = vunpack.c.0.s8 %v1364
        %v1366 = vlaneseq
        %v1367 = vshrl.u32 %v1366, 7
        %v1368 = vsub.s32 %v1365, %v1367
        %v1369 = vrot.slane %v1341, %v1368
        %v1370 = vcombine.low %v1348, %v1355
        %v1371 = vcombine.low %v1362, %v1369
        %v1373 = vunpack.c.l.s4 1966171168
        %v1374 = vunpack.c.0.s8 %v1373
        %v1375 = vlaneseq
        %v1376 = vshrl.u32 %v1375, 7
        %v1377 = vsub.s32 %v1374, %v1376
        %v1378 = vrot.slane %v1370, %v1377
        %v1380 = vunpack.c.l.s4 1966171168
        %v1381 = vunpack.c.0.s8 %v1380
        %v1382 = vlaneseq
        %v1383 = vshrl.u32 %v1382, 7
        %v1384 = vsub.s32 %v1381, %v1383
        %v1385 = vrot.slane %v1371, %v1384
        %v1386 = vcombine.low %v1378, %v1385
        %v1388 = vmax.f32 %v1329, %v1386
        %1389 = vst [vmem:[%s375] sm:$0xff] %v1388
      $region60: #{pointnetfeat_forward.4} parent=51 // pred_fallthru
        _
      %p1390 = scmp.lt.s32.totalorder %s25, 1
      %s1391 = scalar_select %p1390, %s25, 1
      %p1392 = scmp.lt.s32.totalorder %s24, 0
      %s1393 = scalar_select %p1392, %s24, 0
      %s1394 = smul.addr %s1393, 8
      %s1395 = smul.addr %s1391, 8
      %s1396 = sadd.s32 %s1394, %s1395
      %s1397 = scalar_lea.vmem %s8, %s1396
      // Predicated region
      $region61: #{pointnetfeat_forward.4} parent=51 // pred_check
        %p1398 = pneg %p240
      $region62: #{pointnetfeat_forward.4} parent=51 // pred_check_branch
        %1400 = sbr.rel (%p1398) target = $region64
      $region63: #{pointnetfeat_forward.4} parent=51 // pred_region
        _
      $region64: #{pointnetfeat_forward.4} parent=51 // pred_fallthru
        _
    $region52: #{pointnetfeat_forward.4} parent=5 // pred_fallthru
      _
    %p1401 = scmp.le.s32.totalorder 2, %s14
    // Predicated region
    $region65: #{pointnetfeat_forward.4} parent=5 // pred_check
      %p1402 = pneg %p1401
    $region66: #{pointnetfeat_forward.4} parent=5 // pred_check_branch
      %1404 = sbr.rel (%p1402) target = $region68
    $region67: #{pointnetfeat_forward.4} parent=5 // pred_region
      %s1405 = ssub.s32 %s14, 2
      // Predicated region
      $region69: #{pointnetfeat_forward.4} parent=67 // pred_check
        %p1406 = pneg %p246
      $region70: #{pointnetfeat_forward.4} parent=67 // pred_check_branch
        %1408 = sbr.rel (%p1406) target = $region72
      $region71: #{pointnetfeat_forward.4} parent=67 // pred_region
        %p1409 = scmp.lt.s32.totalorder %s28, 1
        %s1410 = scalar_select %p1409, %s28, 1
        %p1411 = scmp.lt.s32.totalorder %s27, 0
        %s1412 = scalar_select %p1411, %s27, 0
        %s1413 = smul.addr %s1412, 8
        %s1414 = smul.addr %s1410, 8
        %s1415 = sadd.s32 %s1413, %s1414
        %s1416 = scalar_lea.vmem %s8, %s1415
      $region72: #{pointnetfeat_forward.4} parent=67 // pred_fallthru
        _
    $region68: #{pointnetfeat_forward.4} parent=5 // pred_fallthru
      _
  $region6: #{pointnetfeat_forward.4} parent=0 // loop_footer
    %s18 = sadd.s32 1, %s14
  $region7: #{pointnetfeat_forward.4} parent=0 // loop_footer_branch
    %13 = sbr.rel target = $region3
  $region8: #{pointnetfeat_forward.4} parent=0 // loop_exit
    _

// kernel: pointnetfeat_forward.5
$region0: #{pointnetfeat_forward.5}
  #allocation0 [shape = 'u32[]', space=smem, size = 0x4, offset = 0x4, fixed_abs, tag = 'smem constant byte address 0x4 - core index']
  #allocation1 [shape = 'u32[144,128]{1,0:T(1,128)}', space=vmem, size = 0x12000, scoped, tag = 'internal scratch']
  %s0 = inlined_call_operand.vmem [shape: bf16[2,16,8], index: 0, kind: input, shape index: {}]
  %s1 = inlined_call_operand.vmem [shape: bf16[2,64,64], index: 1, kind: input, shape index: {}]
  %s2 = inlined_call_operand.vmem [shape: f32[2,1,1024], index: 2, kind: input, shape index: {}]
  %s3 = inlined_call_operand.vmem [shape: bf16[8,64], index: 3, kind: input, shape index: {}]
  %s4 = inlined_call_operand.vmem [shape: f32[1,64], index: 4, kind: input, shape index: {}]
  %s5 = inlined_call_operand.vmem [shape: bf16[64,1024], index: 5, kind: input, shape index: {}]
  %s6 = inlined_call_operand.vmem [shape: bf16[1024,512], index: 6, kind: input, shape index: {}]
  %s7 = inlined_call_operand.vmem [shape: f32[1,512], index: 7, kind: input, shape index: {}]
  %s8 = inlined_call_operand.vmem [shape: bf16[512,128], index: 8, kind: input, shape index: {}]
  %s9 = inlined_call_operand.vmem [shape: f32[1,128], index: 9, kind: input, shape index: {}]
  %s10 = inlined_call_operand.vmem [shape: bf16[2,16,128], index: 10, kind: output, shape index: {}]
  %s11 = sld [smem:[#allocation0]]
  $region73: #{pointnetfeat_forward.5} parent=0
    _
  %s13 = ssub.s32 1, %s11
  %s14 = scalar_select 0, %s13, %s11
  loop: start=0, step=1, limit=4
  $region2: #{pointnetfeat_forward.5} parent=0 // loop_pre_header
    _
  $region3: #{pointnetfeat_forward.5} parent=0 // loop_header
    %s16 = sphi 0, %s20
    %p17 = scmp.ge.s32.totalorder %s16, 4
    %s23 = sphi 0, %s35
    %s24 = sphi 0, %s31
    %s25 = sphi 0, %s23
    %s26 = sphi 0, %s24
    %s27 = sphi 0, %s25
    %s28 = sphi 0, %s26
    %s40 = sphi 0, %s42
    %s43 = sphi 0, %s40
    %s44 = sphi 0, %s43
    %s60 = sphi 0, %s44
    %s66 = sphi 0, %s68
    %s69 = sphi 0, %s66
    %s70 = sphi 0, %s69
    %s86 = sphi 0, %s70
    %s92 = sphi 0, %s94
    %s95 = sphi 0, %s92
    %s96 = sphi 0, %s95
    %s112 = sphi 0, %s96
    %s116 = sphi 0, %s116
    %s118 = sphi 0, %s116
    %s119 = sphi 0, %s118
    %s133 = sphi 0, %s119
    %s137 = sphi 0, %s137
    %s139 = sphi 0, %s137
    %s140 = sphi 0, %s139
    %s154 = sphi 0, %s140
    %s158 = sphi 0, %s158
    %s160 = sphi 0, %s158
    %s161 = sphi 0, %s160
    %s175 = sphi 0, %s161
    %s179 = sphi 0, %s179
    %s181 = sphi 0, %s179
    %s182 = sphi 0, %s181
    %s196 = sphi 0, %s182
    %s200 = sphi 0, %s200
    %s202 = sphi 0, %s200
    %s203 = sphi 0, %s202
    %s217 = sphi 0, %s203
    %s221 = sphi 0, %s221
    %s223 = sphi 0, %s221
    %s224 = sphi 0, %s223
    %s238 = sphi 0, %s224
    %s242 = sphi 0, %s242
    %s244 = sphi 0, %s242
    %s245 = sphi 0, %s244
    %s259 = sphi 0, %s245
    %s267 = sphi 0, %s269
    %s270 = sphi 0, %s267
    %s271 = sphi 0, %s270
    %s287 = sphi 0, %s271
  $region4: #{pointnetfeat_forward.5} parent=0 // loop_header_branch
    %19 = sbr.rel (%p17) target = $region8
  $region5: #{pointnetfeat_forward.5} parent=0 // loop_body
    %s21 = ssub.s32 %s16, 1
    %s22 = ssub.s32 %s16, 2
    %s29 = sadd.s32 1, %s24
    %p30 = scmp.ge.s32.totalorder %s29, 1
    %s31 = scalar_select %p30, 0, %s29
    %s32 = sadd.s32 1, %s23
    %s33 = scalar_select %p30, %s32, %s23
    %p34 = scmp.ge.s32.totalorder %s33, 2
    %s35 = scalar_select %p34, 0, %s33
    %s36 = ssub.s32 %s23, %s35
    %s37 = ssub.s32 %s24, %s31
    %s38 = sor.u32 %s36, %s37
    %p39 = scmp.eq.s32.totalorder %s38, 0
    %s41 = sadd.s32 %s40, 1
    %s42 = scalar_select %p39, %s40, %s41
    %p45 = pneg %p39
    %p46 = scmp.eq.s32.totalorder %s16, 1
    %p47 = por %p45, %p46
    %p48 = scmp.ne.s32.totalorder %s40, %s43
    %p49 = scmp.eq.s32.totalorder %s16, 0
    %p50 = por %p48, %p49
    %p51 = scmp.ne.s32.totalorder %s40, %s43
    %p52 = scmp.eq.s32.totalorder %s21, 1
    %p53 = por %p51, %p52
    %p54 = scmp.ne.s32.totalorder %s43, %s44
    %p55 = scmp.eq.s32.totalorder %s21, 0
    %p56 = por %p54, %p55
    %p57 = scmp.ne.s32.totalorder %s43, %s44
    %p58 = scmp.eq.s32.totalorder %s22, 1
    %p59 = por %p57, %p58
    %p61 = scmp.ne.s32.totalorder %s44, %s60
    %p62 = scmp.eq.s32.totalorder %s22, 0
    %p63 = por %p61, %p62
    %s64 = ssub.s32 %s23, %s35
    %p65 = scmp.eq.s32.totalorder %s64, 0
    %s67 = sadd.s32 %s66, 1
    %s68 = scalar_select %p65, %s66, %s67
    %p71 = pneg %p65
    %p72 = scmp.eq.s32.totalorder %s16, 1
    %p73 = por %p71, %p72
    %p74 = scmp.ne.s32.totalorder %s66, %s69
    %p75 = scmp.eq.s32.totalorder %s16, 0
    %p76 = por %p74, %p75
    %p77 = scmp.ne.s32.totalorder %s66, %s69
    %p78 = scmp.eq.s32.totalorder %s21, 1
    %p79 = por %p77, %p78
    %p80 = scmp.ne.s32.totalorder %s69, %s70
    %p81 = scmp.eq.s32.totalorder %s21, 0
    %p82 = por %p80, %p81
    %p83 = scmp.ne.s32.totalorder %s69, %s70
    %p84 = scmp.eq.s32.totalorder %s22, 1
    %p85 = por %p83, %p84
    %p87 = scmp.ne.s32.totalorder %s70, %s86
    %p88 = scmp.eq.s32.totalorder %s22, 0
    %p89 = por %p87, %p88
    %s90 = ssub.s32 %s23, %s35
    %p91 = scmp.eq.s32.totalorder %s90, 0
    %s93 = sadd.s32 %s92, 1
    %s94 = scalar_select %p91, %s92, %s93
    %p97 = pneg %p91
    %p98 = scmp.eq.s32.totalorder %s16, 1
    %p99 = por %p97, %p98
    %p100 = scmp.ne.s32.totalorder %s92, %s95
    %p101 = scmp.eq.s32.totalorder %s16, 0
    %p102 = por %p100, %p101
    %p103 = scmp.ne.s32.totalorder %s92, %s95
    %p104 = scmp.eq.s32.totalorder %s21, 1
    %p105 = por %p103, %p104
    %p106 = scmp.ne.s32.totalorder %s95, %s96
    %p107 = scmp.eq.s32.totalorder %s21, 0
    %p108 = por %p106, %p107
    %p109 = scmp.ne.s32.totalorder %s95, %s96
    %p110 = scmp.eq.s32.totalorder %s22, 1
    %p111 = por %p109, %p110
    %p113 = scmp.ne.s32.totalorder %s96, %s112
    %p114 = scmp.eq.s32.totalorder %s22, 0
    %p115 = por %p113, %p114
    %s117 = sadd.s32 %s116, 1
    %p120 = scmp.eq.s32.totalorder %s16, 1
    %p121 = scmp.ne.s32.totalorder %s116, %s118
    %p122 = scmp.eq.s32.totalorder %s16, 0
    %p123 = por %p121, %p122
    %p124 = scmp.ne.s32.totalorder %s116, %s118
    %p125 = scmp.eq.s32.totalorder %s21, 1
    %p126 = por %p124, %p125
    %p127 = scmp.ne.s32.totalorder %s118, %s119
    %p128 = scmp.eq.s32.totalorder %s21, 0
    %p129 = por %p127, %p128
    %p130 = scmp.ne.s32.totalorder %s118, %s119
    %p131 = scmp.eq.s32.totalorder %s22, 1
    %p132 = por %p130, %p131
    %p134 = scmp.ne.s32.totalorder %s119, %s133
    %p135 = scmp.eq.s32.totalorder %s22, 0
    %p136 = por %p134, %p135
    %s138 = sadd.s32 %s137, 1
    %p141 = scmp.eq.s32.totalorder %s16, 1
    %p142 = scmp.ne.s32.totalorder %s137, %s139
    %p143 = scmp.eq.s32.totalorder %s16, 0
    %p144 = por %p142, %p143
    %p145 = scmp.ne.s32.totalorder %s137, %s139
    %p146 = scmp.eq.s32.totalorder %s21, 1
    %p147 = por %p145, %p146
    %p148 = scmp.ne.s32.totalorder %s139, %s140
    %p149 = scmp.eq.s32.totalorder %s21, 0
    %p150 = por %p148, %p149
    %p151 = scmp.ne.s32.totalorder %s139, %s140
    %p152 = scmp.eq.s32.totalorder %s22, 1
    %p153 = por %p151, %p152
    %p155 = scmp.ne.s32.totalorder %s140, %s154
    %p156 = scmp.eq.s32.totalorder %s22, 0
    %p157 = por %p155, %p156
    %s159 = sadd.s32 %s158, 1
    %p162 = scmp.eq.s32.totalorder %s16, 1
    %p163 = scmp.ne.s32.totalorder %s158, %s160
    %p164 = scmp.eq.s32.totalorder %s16, 0
    %p165 = por %p163, %p164
    %p166 = scmp.ne.s32.totalorder %s158, %s160
    %p167 = scmp.eq.s32.totalorder %s21, 1
    %p168 = por %p166, %p167
    %p169 = scmp.ne.s32.totalorder %s160, %s161
    %p170 = scmp.eq.s32.totalorder %s21, 0
    %p171 = por %p169, %p170
    %p172 = scmp.ne.s32.totalorder %s160, %s161
    %p173 = scmp.eq.s32.totalorder %s22, 1
    %p174 = por %p172, %p173
    %p176 = scmp.ne.s32.totalorder %s161, %s175
    %p177 = scmp.eq.s32.totalorder %s22, 0
    %p178 = por %p176, %p177
    %s180 = sadd.s32 %s179, 1
    %p183 = scmp.eq.s32.totalorder %s16, 1
    %p184 = scmp.ne.s32.totalorder %s179, %s181
    %p185 = scmp.eq.s32.totalorder %s16, 0
    %p186 = por %p184, %p185
    %p187 = scmp.ne.s32.totalorder %s179, %s181
    %p188 = scmp.eq.s32.totalorder %s21, 1
    %p189 = por %p187, %p188
    %p190 = scmp.ne.s32.totalorder %s181, %s182
    %p191 = scmp.eq.s32.totalorder %s21, 0
    %p192 = por %p190, %p191
    %p193 = scmp.ne.s32.totalorder %s181, %s182
    %p194 = scmp.eq.s32.totalorder %s22, 1
    %p195 = por %p193, %p194
    %p197 = scmp.ne.s32.totalorder %s182, %s196
    %p198 = scmp.eq.s32.totalorder %s22, 0
    %p199 = por %p197, %p198
    %s201 = sadd.s32 %s200, 1
    %p204 = scmp.eq.s32.totalorder %s16, 1
    %p205 = scmp.ne.s32.totalorder %s200, %s202
    %p206 = scmp.eq.s32.totalorder %s16, 0
    %p207 = por %p205, %p206
    %p208 = scmp.ne.s32.totalorder %s200, %s202
    %p209 = scmp.eq.s32.totalorder %s21, 1
    %p210 = por %p208, %p209
    %p211 = scmp.ne.s32.totalorder %s202, %s203
    %p212 = scmp.eq.s32.totalorder %s21, 0
    %p213 = por %p211, %p212
    %p214 = scmp.ne.s32.totalorder %s202, %s203
    %p215 = scmp.eq.s32.totalorder %s22, 1
    %p216 = por %p214, %p215
    %p218 = scmp.ne.s32.totalorder %s203, %s217
    %p219 = scmp.eq.s32.totalorder %s22, 0
    %p220 = por %p218, %p219
    %s222 = sadd.s32 %s221, 1
    %p225 = scmp.eq.s32.totalorder %s16, 1
    %p226 = scmp.ne.s32.totalorder %s221, %s223
    %p227 = scmp.eq.s32.totalorder %s16, 0
    %p228 = por %p226, %p227
    %p229 = scmp.ne.s32.totalorder %s221, %s223
    %p230 = scmp.eq.s32.totalorder %s21, 1
    %p231 = por %p229, %p230
    %p232 = scmp.ne.s32.totalorder %s223, %s224
    %p233 = scmp.eq.s32.totalorder %s21, 0
    %p234 = por %p232, %p233
    %p235 = scmp.ne.s32.totalorder %s223, %s224
    %p236 = scmp.eq.s32.totalorder %s22, 1
    %p237 = por %p235, %p236
    %p239 = scmp.ne.s32.totalorder %s224, %s238
    %p240 = scmp.eq.s32.totalorder %s22, 0
    %p241 = por %p239, %p240
    %s243 = sadd.s32 %s242, 1
    %p246 = scmp.eq.s32.totalorder %s16, 1
    %p247 = scmp.ne.s32.totalorder %s242, %s244
    %p248 = scmp.eq.s32.totalorder %s16, 0
    %p249 = por %p247, %p248
    %p250 = scmp.ne.s32.totalorder %s242, %s244
    %p251 = scmp.eq.s32.totalorder %s21, 1
    %p252 = por %p250, %p251
    %p253 = scmp.ne.s32.totalorder %s244, %s245
    %p254 = scmp.eq.s32.totalorder %s21, 0
    %p255 = por %p253, %p254
    %p256 = scmp.ne.s32.totalorder %s244, %s245
    %p257 = scmp.eq.s32.totalorder %s22, 1
    %p258 = por %p256, %p257
    %p260 = scmp.ne.s32.totalorder %s245, %s259
    %p261 = scmp.eq.s32.totalorder %s22, 0
    %p262 = por %p260, %p261
    %s263 = ssub.s32 %s23, %s35
    %s264 = ssub.s32 %s24, %s31
    %s265 = sor.u32 %s263, %s264
    %p266 = scmp.eq.s32.totalorder %s265, 0
    %s268 = sadd.s32 %s267, 1
    %s269 = scalar_select %p266, %s267, %s268
    %p272 = pneg %p266
    %p273 = scmp.eq.s32.totalorder %s16, 1
    %p274 = por %p272, %p273
    %p275 = scmp.ne.s32.totalorder %s267, %s270
    %p276 = scmp.eq.s32.totalorder %s16, 0
    %p277 = por %p275, %p276
    %p278 = scmp.ne.s32.totalorder %s267, %s270
    %p279 = scmp.eq.s32.totalorder %s21, 1
    %p280 = por %p278, %p279
    %p281 = scmp.ne.s32.totalorder %s270, %s271
    %p282 = scmp.eq.s32.totalorder %s21, 0
    %p283 = por %p281, %p282
    %p284 = scmp.ne.s32.totalorder %s270, %s271
    %p285 = scmp.eq.s32.totalorder %s22, 1
    %p286 = por %p284, %p285
    %p288 = scmp.ne.s32.totalorder %s271, %s287
    %p289 = scmp.eq.s32.totalorder %s22, 0
    %p290 = por %p288, %p289
    %p291 = scmp.le.s32.totalorder 1, %s16
    %p292 = scmp.lt.s32.totalorder %s16, 3
    %p293 = pnand %p291, %p292
    %p294 = pneg %p293
    // Predicated region
    $region9: #{pointnetfeat_forward.5} parent=5 // pred_check
      _
    $region10: #{pointnetfeat_forward.5} parent=5 // pred_check_branch
      %296 = sbr.rel (%p293) target = $region12
    $region11: #{pointnetfeat_forward.5} parent=5 // pred_region
      %s297 = ssub.s32 %s16, 1
      // Predicated region
      $region13: #{pointnetfeat_forward.5} parent=11 // pred_check
        %p298 = pneg %p129
      $region14: #{pointnetfeat_forward.5} parent=11 // pred_check_branch
        %300 = sbr.rel (%p298) target = $region16
      $region15: #{pointnetfeat_forward.5} parent=11 // pred_region
        _
      $region16: #{pointnetfeat_forward.5} parent=11 // pred_fallthru
        _
      // Predicated region
      $region17: #{pointnetfeat_forward.5} parent=11 // pred_check
        %p301 = pneg %p150
      $region18: #{pointnetfeat_forward.5} parent=11 // pred_check_branch
        %303 = sbr.rel (%p301) target = $region20
      $region19: #{pointnetfeat_forward.5} parent=11 // pred_region
        _
      $region20: #{pointnetfeat_forward.5} parent=11 // pred_fallthru
        _
      // Predicated region
      $region21: #{pointnetfeat_forward.5} parent=11 // pred_check
        %p304 = pneg %p171
      $region22: #{pointnetfeat_forward.5} parent=11 // pred_check_branch
        %306 = sbr.rel (%p304) target = $region24
      $region23: #{pointnetfeat_forward.5} parent=11 // pred_region
        _
      $region24: #{pointnetfeat_forward.5} parent=11 // pred_fallthru
        _
      // Predicated region
      $region25: #{pointnetfeat_forward.5} parent=11 // pred_check
        %p307 = pneg %p192
      $region26: #{pointnetfeat_forward.5} parent=11 // pred_check_branch
        %309 = sbr.rel (%p307) target = $region28
      $region27: #{pointnetfeat_forward.5} parent=11 // pred_region
        _
      $region28: #{pointnetfeat_forward.5} parent=11 // pred_fallthru
        _
      // Predicated region
      $region29: #{pointnetfeat_forward.5} parent=11 // pred_check
        %p310 = pneg %p213
      $region30: #{pointnetfeat_forward.5} parent=11 // pred_check_branch
        %312 = sbr.rel (%p310) target = $region32
      $region31: #{pointnetfeat_forward.5} parent=11 // pred_region
        _
      $region32: #{pointnetfeat_forward.5} parent=11 // pred_fallthru
        _
      // Predicated region
      $region33: #{pointnetfeat_forward.5} parent=11 // pred_check
        %p313 = pneg %p234
      $region34: #{pointnetfeat_forward.5} parent=11 // pred_check_branch
        %315 = sbr.rel (%p313) target = $region36
      $region35: #{pointnetfeat_forward.5} parent=11 // pred_region
        _
      $region36: #{pointnetfeat_forward.5} parent=11 // pred_fallthru
        _
      // Predicated region
      $region37: #{pointnetfeat_forward.5} parent=11 // pred_check
        %p316 = pneg %p255
      $region38: #{pointnetfeat_forward.5} parent=11 // pred_check_branch
        %318 = sbr.rel (%p316) target = $region40
      $region39: #{pointnetfeat_forward.5} parent=11 // pred_region
        _
      $region40: #{pointnetfeat_forward.5} parent=11 // pred_fallthru
        _
    $region12: #{pointnetfeat_forward.5} parent=5 // pred_fallthru
      _
    %p319 = scmp.lt.s32.totalorder %s16, 2
    // Predicated region
    $region41: #{pointnetfeat_forward.5} parent=5 // pred_check
      %p320 = pneg %p319
    $region42: #{pointnetfeat_forward.5} parent=5 // pred_check_branch
      %322 = sbr.rel (%p320) target = $region44
    $region43: #{pointnetfeat_forward.5} parent=5 // pred_region
      // Predicated region
      $region45: #{pointnetfeat_forward.5} parent=43 // pred_check
        %p323 = pneg %p50
      $region46: #{pointnetfeat_forward.5} parent=43 // pred_check_branch
        %325 = sbr.rel (%p323) target = $region48
      $region47: #{pointnetfeat_forward.5} parent=43 // pred_region
        %s326 = smul.u32 2, %s24
        %p327 = scmp.lt.s32.totalorder %s23, 1
        %s328 = scalar_select %p327, %s23, 1
        %p329 = scmp.lt.s32.totalorder %s326, 1
        %s330 = scalar_select %p329, %s326, 1
        %s331 = smul.addr %s328, 2
        %s332 = sadd.s32 %s330, %s331
        %s333 = smul.addr %s332, 4
        %s334 = scalar_lea.vmem %s0, %s333
        %s335 = smul.u32 2, %s24
      $region48: #{pointnetfeat_forward.5} parent=43 // pred_fallthru
        _
      // Predicated region
      $region49: #{pointnetfeat_forward.5} parent=43 // pred_check
        %p336 = pneg %p76
      $region50: #{pointnetfeat_forward.5} parent=43 // pred_check_branch
        %338 = sbr.rel (%p336) target = $region52
      $region51: #{pointnetfeat_forward.5} parent=43 // pred_region
        %p339 = scmp.lt.s32.totalorder %s23, 1
        %s340 = scalar_select %p339, %s23, 1
        %s341 = smul.addr %s340, 8
        %s342 = smul.addr %s341, 4
        %s343 = scalar_lea.vmem %s1, %s342
      $region52: #{pointnetfeat_forward.5} parent=43 // pred_fallthru
        _
      // Predicated region
      $region53: #{pointnetfeat_forward.5} parent=43 // pred_check
        %p344 = pneg %p102
      $region54: #{pointnetfeat_forward.5} parent=43 // pred_check_branch
        %346 = sbr.rel (%p344) target = $region56
      $region55: #{pointnetfeat_forward.5} parent=43 // pred_region
        %p347 = scmp.lt.s32.totalorder %s23, 1
        %s348 = scalar_select %p347, %s23, 1
        %s349 = smul.addr %s348, 8
        %s350 = scalar_lea.vmem %s2, %s349
      $region56: #{pointnetfeat_forward.5} parent=43 // pred_fallthru
        _
    $region44: #{pointnetfeat_forward.5} parent=5 // pred_fallthru
      _
    %p351 = scmp.le.s32.totalorder 1, %s16
    %p352 = scmp.lt.s32.totalorder %s16, 3
    %p353 = pnand %p351, %p352
    %p354 = pneg %p353
    // Predicated region
    $region57: #{pointnetfeat_forward.5} parent=5 // pred_check
      _
    $region58: #{pointnetfeat_forward.5} parent=5 // pred_check_branch
      %356 = sbr.rel (%p353) target = $region60
    $region59: #{pointnetfeat_forward.5} parent=5 // pred_region
      %s357 = ssub.s32 %s16, 1
      %s358 = smul.u32 2, %s26
      %p359 = scmp.lt.s32.totalorder %s25, 1
      %s360 = scalar_select %p359, %s25, 1
      %p361 = scmp.lt.s32.totalorder %s358, 1
      %s362 = scalar_select %p361, %s358, 1
      %s363 = smul.addr %s360, 2
      %s364 = sadd.s32 %s362, %s363
      %s365 = smul.addr %s364, 4
      %s366 = scalar_lea.vmem %s0, %s365
      %p367 = pneg %p56
      %p368 = pneg %p53
      %p369 = scmp.lt.s32.totalorder %s25, 1
      %s370 = scalar_select %p369, %s25, 1
      %s371 = smul.addr %s370, 8
      %s372 = smul.addr %s371, 4
      %s373 = scalar_lea.vmem %s1, %s372
      %p374 = pneg %p82
      %p375 = pneg %p79
      %p376 = scmp.lt.s32.totalorder %s25, 1
      %s377 = scalar_select %p376, %s25, 1
      %s378 = smul.addr %s377, 8
      %s379 = scalar_lea.vmem %s2, %s378
      %p380 = pneg %p108
      %p381 = pneg %p105
      %p382 = pneg %p129
      %p383 = pneg %p126
      %p384 = pneg %p150
      %p385 = pneg %p147
      %p386 = pneg %p171
      %p387 = pneg %p168
      %p388 = pneg %p192
      %p389 = pneg %p189
      %p390 = pneg %p213
      %p391 = pneg %p210
      %p392 = pneg %p234
      %p393 = pneg %p231
      %p394 = pneg %p255
      %p395 = pneg %p252
      %p396 = pneg %p283
      %p397 = pneg %p280
      %s398 = smul.u32 2, %s26
      %p399 = scmp.lt.s32.totalorder %s25, 1
      %s400 = scalar_select %p399, %s25, 1
      %p401 = scmp.lt.s32.totalorder %s398, 1
      %s402 = scalar_select %p401, %s398, 1
      %s403 = smul.addr %s400, 2
      %s404 = sadd.s32 %s402, %s403
      %s405 = smul.addr %s404, 4
      %s406 = scalar_lea.vmem %s10, %s405
      %s407 = smul.u32 2, %s26
      %p408 = scmp.lt.s32.totalorder %s25, 1
      %s409 = scalar_select %p408, %s25, 1
      %p410 = scmp.lt.s32.totalorder %s407, 1
      %s411 = scalar_select %p410, %s407, 1
      %s412 = smul.addr %s409, 2
      %s413 = sadd.s32 %s411, %s412
      %s414 = smul.addr %s413, 4
      %s415 = scalar_lea.vmem %s0, %s414
      %s416 = smul.u32 2, %s26
      %p417 = scmp.lt.s32.totalorder %s25, 1
      %s418 = scalar_select %p417, %s25, 1
      %s419 = smul.addr %s418, 8
      %s420 = smul.addr %s419, 4
      %s421 = scalar_lea.vmem %s1, %s420
      %p422 = scmp.lt.s32.totalorder %s25, 1
      %s423 = scalar_select %p422, %s25, 1
      %s424 = smul.addr %s423, 8
      %s425 = scalar_lea.vmem %s2, %s424
      %s426 = smul.u32 2, %s26
      %p427 = scmp.lt.s32.totalorder %s25, 1
      %s428 = scalar_select %p427, %s25, 1
      %p429 = scmp.lt.s32.totalorder %s426, 1
      %s430 = scalar_select %p429, %s426, 1
      %s431 = smul.addr %s428, 2
      %s432 = sadd.s32 %s430, %s431
      %s433 = smul.addr %s432, 4
      %s434 = scalar_lea.vmem %s10, %s433
      %s435 = smul.u32 2, %s26
      %v437 = vld [vmem:[%s415] sm:$0xf]
      %v438 = vld [vmem:[%s415 + $0x4] sm:$0xf]
      %v439 = vld [vmem:[%s3] sm:$0xf]
      %v440 = vld [vmem:[%s4] sm:$0x1]
      %v442 = vlaneseq
      %v443 = vshrl.u32 %v442, 7
      %v444 = vsub.s32 0, %v443
      %v445 = vrot.slane %v440, %v444
      %v449 = vunpack.c.l.b16 %v437
      %v450 = vunpack.c.l.b16 %v438
      %v451 = vpack.c.b16 %v450, %v449
      %vm452 = vcmask 64512
      %v454 = vsel %vm452, %v451, 0
      %vm456 = vcmask 1043456
      %v458 = vsel %vm456, %v439, 0
      %460 = vmatprep.subr.bf16.mxu0 0
      %461 = vmatpush1.bf16.msra.mxu0 %v458
      %462 = vmatprep.subr.bf16.mxu0 0
      %463 = vmatpush1.bf16.msra.mxu0 0
      %464 = vmatprep.subr.bf16.mxu0 0
      %465 = vmatpush1.bf16.msra.mxu0 0
      %466 = vmatprep.subr.bf16.mxu0 0
      %467 = vmatpush1.bf16.msra.mxu0 0
      %468 = vmatprep.subr.bf16.mxu0 0
      %469 = vmatpush1.bf16.msra.mxu0 0
      %470 = vmatprep.subr.bf16.mxu0 0
      %471 = vmatpush1.bf16.msra.mxu0 0
      %472 = vmatprep.subr.bf16.mxu0 0
      %473 = vmatpush1.bf16.msra.mxu0 0
      %474 = vmatprep.subr.bf16.mxu0 0
      %475 = vmatpush1.bf16.msra.mxu0 0
      %476 = vmatprep.subr.bf16.mxu0 0
      %477 = vmatpush1.bf16.msra.mxu0 0
      %478 = vmatprep.subr.bf16.mxu0 0
      %479 = vmatpush1.bf16.msra.mxu0 0
      %480 = vmatprep.subr.bf16.mxu0 0
      %481 = vmatpush1.bf16.msra.mxu0 0
      %482 = vmatprep.subr.bf16.mxu0 0
      %483 = vmatpush1.bf16.msra.mxu0 0
      %484 = vmatprep.subr.bf16.mxu0 0
      %485 = vmatpush1.bf16.msra.mxu0 0
      %486 = vmatprep.subr.bf16.mxu0 0
      %487 = vmatpush1.bf16.msra.mxu0 0
      %488 = vmatprep.subr.bf16.mxu0 0
      %489 = vmatpush1.bf16.msra.mxu0 0
      %490 = vmatprep.subr.bf16.mxu0 0
      %491 = vmatpush1.bf16.msra.mxu0 0
      %492 = vmatprep.mubr.bf16.mxu0 0
      %493 = vmatmul.mubr.bf16.gmra.mrb[0].mxu0 %v454
      %v494 = vpop.f32.mrb[0].mxu0
      %v495 = vadd.f32 %v445, %v494
      %v496 = vpop.f32.mrb[0].mxu0
      %v497 = vpop.f32.mrb[0].mxu0
      %v498 = vadd.f32 %v445, %v497
      %v499 = vpop.f32.mrb[0].mxu0
      %500 = vdwg.mxu0
      %v501 = vmax.f32 %v495, 0.0
      %v502 = vmax.f32 %v498, 0.0
      %v503 = vpack.c.bf16 %v502, %v501
      %v504 = vld [vmem:[%s421] sm:$0xf]
      %v505 = vld [vmem:[%s421 + $0x4] sm:$0xf]
      %v506 = vld [vmem:[%s421 + $0x8] sm:$0xf]
      %v507 = vld [vmem:[%s421 + $0xc] sm:$0xf]
      %v508 = vld [vmem:[%s421 + $0x10] sm:$0xf]
      %v509 = vld [vmem:[%s421 + $0x14] sm:$0xf]
      %v510 = vld [vmem:[%s421 + $0x18] sm:$0xf]
      %v511 = vld [vmem:[%s421 + $0x1c] sm:$0xf]
      %v520 = vunpack.c.l.b16 %v504
      %v521 = vunpack.c.l.b16 %v505
      %v522 = vunpack.c.l.b16 %v506
      %v523 = vunpack.c.l.b16 %v507
      %v524 = vunpack.c.l.b16 %v508
      %v525 = vunpack.c.l.b16 %v509
      %v526 = vunpack.c.l.b16 %v510
      %v527 = vunpack.c.l.b16 %v511
      %v528 = vpack.c.b16 %v521, %v520
      %v529 = vpack.c.b16 %v523, %v522
      %v530 = vpack.c.b16 %v525, %v524
      %v531 = vpack.c.b16 %v527, %v526
      %vm536 = vcmask 523264
      %v538 = vsel %vm536, %v503, 0
      %540 = vmatprep.subr.bf16.mxu0 0
      %541 = vmatpush1.bf16.msra.mxu0 %v528
      %542 = vmatprep.subr.bf16.mxu0 0
      %543 = vmatpush1.bf16.msra.mxu0 %v529
      %544 = vmatprep.subr.bf16.mxu0 0
      %545 = vmatpush1.bf16.msra.mxu0 %v530
      %546 = vmatprep.subr.bf16.mxu0 0
      %547 = vmatpush1.bf16.msra.mxu0 %v531
      %548 = vmatprep.subr.bf16.mxu0 0
      %549 = vmatpush1.bf16.msra.mxu0 0
      %550 = vmatprep.subr.bf16.mxu0 0
      %551 = vmatpush1.bf16.msra.mxu0 0
      %552 = vmatprep.subr.bf16.mxu0 0
      %553 = vmatpush1.bf16.msra.mxu0 0
      %554 = vmatprep.subr.bf16.mxu0 0
      %555 = vmatpush1.bf16.msra.mxu0 0
      %556 = vmatprep.subr.bf16.mxu0 0
      %557 = vmatpush1.bf16.msra.mxu0 0
      %558 = vmatprep.subr.bf16.mxu0 0
      %559 = vmatpush1.bf16.msra.mxu0 0
      %560 = vmatprep.subr.bf16.mxu0 0
      %561 = vmatpush1.bf16.msra.mxu0 0
      %562 = vmatprep.subr.bf16.mxu0 0
      %563 = vmatpush1.bf16.msra.mxu0 0
      %564 = vmatprep.subr.bf16.mxu0 0
      %565 = vmatpush1.bf16.msra.mxu0 0
      %566 = vmatprep.subr.bf16.mxu0 0
      %567 = vmatpush1.bf16.msra.mxu0 0
      %568 = vmatprep.subr.bf16.mxu0 0
      %569 = vmatpush1.bf16.msra.mxu0 0
      %570 = vmatprep.subr.bf16.mxu0 0
      %571 = vmatpush1.bf16.msra.mxu0 0
      %572 = vmatprep.mubr.bf16.mxu0 0
      %573 = vmatmul.mubr.bf16.gmra.mrb[0].mxu0 %v538
      %v574 = vpop.f32.mrb[0].mxu0
      %v575 = vadd.f32 0.0, %v574
      %v576 = vpop.f32.mrb[0].mxu0
      %v577 = vpop.f32.mrb[0].mxu0
      %v578 = vadd.f32 0.0, %v577
      %v579 = vpop.f32.mrb[0].mxu0
      %580 = vdwg.mxu0
      %v581 = vpack.c.bf16 %v578, %v575
      %v582 = vld [vmem:[%s5] sm:$0xff]
      %v583 = vld [vmem:[%s5 + $0x8] sm:$0xff]
      %v584 = vld [vmem:[%s5 + $0x10] sm:$0xff]
      %v585 = vld [vmem:[%s5 + $0x18] sm:$0xff]
      %v586 = vld [vmem:[%s5 + $0x20] sm:$0xff]
      %v587 = vld [vmem:[%s5 + $0x28] sm:$0xff]
      %v588 = vld [vmem:[%s5 + $0x30] sm:$0xff]
      %v589 = vld [vmem:[%s5 + $0x38] sm:$0xff]
      %v590 = vld [vmem:[%s5 + $0x40] sm:$0xff]
      %v591 = vld [vmem:[%s5 + $0x48] sm:$0xff]
      %v592 = vld [vmem:[%s5 + $0x50] sm:$0xff]
      %v593 = vld [vmem:[%s5 + $0x58] sm:$0xff]
      %v594 = vld [vmem:[%s5 + $0x60] sm:$0xff]
      %v595 = vld [vmem:[%s5 + $0x68] sm:$0xff]
      %v596 = vld [vmem:[%s5 + $0x70] sm:$0xff]
      %v597 = vld [vmem:[%s5 + $0x78] sm:$0xff]
      %v598 = vld [vmem:[%s5 + $0x80] sm:$0xff]
      %v599 = vld [vmem:[%s5 + $0x88] sm:$0xff]
      %v600 = vld [vmem:[%s5 + $0x90] sm:$0xff]
      %v601 = vld [vmem:[%s5 + $0x98] sm:$0xff]
      %v602 = vld [vmem:[%s5 + $0xa0] sm:$0xff]
      %v603 = vld [vmem:[%s5 + $0xa8] sm:$0xff]
      %v604 = vld [vmem:[%s5 + $0xb0] sm:$0xff]
      %v605 = vld [vmem:[%s5 + $0xb8] sm:$0xff]
      %v606 = vld [vmem:[%s5 + $0xc0] sm:$0xff]
      %v607 = vld [vmem:[%s5 + $0xc8] sm:$0xff]
      %v608 = vld [vmem:[%s5 + $0xd0] sm:$0xff]
      %v609 = vld [vmem:[%s5 + $0xd8] sm:$0xff]
      %v610 = vld [vmem:[%s5 + $0xe0] sm:$0xff]
      %v611 = vld [vmem:[%s5 + $0xe8] sm:$0xff]
      %v612 = vld [vmem:[%s5 + $0xf0] sm:$0xff]
      %v613 = vld [vmem:[%s5 + $0xf8] sm:$0xff]
      %v614 = vld [vmem:[%s425] sm:$0xff]
      %v616 = vlaneseq
      %v617 = vshrl.u32 %v616, 7
      %v618 = vsub.s32 0, %v617
      %v619 = vrot.slane %v614, %v618
      %v620 = vlaneseq
      %v621 = vshrl.u32 %v620, 7
      %v622 = vsub.s32 1, %v621
      %v623 = vrot.slane %v614, %v622
      %v624 = vlaneseq
      %v625 = vshrl.u32 %v624, 7
      %v626 = vsub.s32 2, %v625
      %v627 = vrot.slane %v614, %v626
      %v628 = vlaneseq
      %v629 = vshrl.u32 %v628, 7
      %v630 = vsub.s32 3, %v629
      %v631 = vrot.slane %v614, %v630
      %v632 = vlaneseq
      %v633 = vshrl.u32 %v632, 7
      %v634 = vsub.s32 4, %v633
      %v635 = vrot.slane %v614, %v634
      %v636 = vlaneseq
      %v637 = vshrl.u32 %v636, 7
      %v638 = vsub.s32 5, %v637
      %v639 = vrot.slane %v614, %v638
      %v640 = vlaneseq
      %v641 = vshrl.u32 %v640, 7
      %v642 = vsub.s32 6, %v641
      %v643 = vrot.slane %v614, %v642
      %v644 = vlaneseq
      %v645 = vshrl.u32 %v644, 7
      %v646 = vsub.s32 7, %v645
      %v647 = vrot.slane %v614, %v646
      %v688 = vunpack.c.l.b16 %v582
      %v689 = vunpack.c.h.b16 %v582
      %v690 = vunpack.c.l.b16 %v583
      %v691 = vunpack.c.h.b16 %v583
      %v692 = vunpack.c.l.b16 %v584
      %v693 = vunpack.c.h.b16 %v584
      %v694 = vunpack.c.l.b16 %v585
      %v695 = vunpack.c.h.b16 %v585
      %v696 = vunpack.c.l.b16 %v586
      %v697 = vunpack.c.h.b16 %v586
      %v698 = vunpack.c.l.b16 %v587
      %v699 = vunpack.c.h.b16 %v587
      %v700 = vunpack.c.l.b16 %v588
      %v701 = vunpack.c.h.b16 %v588
      %v702 = vunpack.c.l.b16 %v589
      %v703 = vunpack.c.h.b16 %v589
      %v704 = vunpack.c.l.b16 %v590
      %v705 = vunpack.c.h.b16 %v590
      %v706 = vunpack.c.l.b16 %v591
      %v707 = vunpack.c.h.b16 %v591
      %v708 = vunpack.c.l.b16 %v592
      %v709 = vunpack.c.h.b16 %v592
      %v710 = vunpack.c.l.b16 %v593
      %v711 = vunpack.c.h.b16 %v593
      %v712 = vunpack.c.l.b16 %v594
      %v713 = vunpack.c.h.b16 %v594
      %v714 = vunpack.c.l.b16 %v595
      %v715 = vunpack.c.h.b16 %v595
      %v716 = vunpack.c.l.b16 %v596
      %v717 = vunpack.c.h.b16 %v596
      %v718 = vunpack.c.l.b16 %v597
      %v719 = vunpack.c.h.b16 %v597
      %v720 = vunpack.c.l.b16 %v598
      %v721 = vunpack.c.h.b16 %v598
      %v722 = vunpack.c.l.b16 %v599
      %v723 = vunpack.c.h.b16 %v599
      %v724 = vunpack.c.l.b16 %v600
      %v725 = vunpack.c.h.b16 %v600
      %v726 = vunpack.c.l.b16 %v601
      %v727 = vunpack.c.h.b16 %v601
      %v728 = vunpack.c.l.b16 %v602
      %v729 = vunpack.c.h.b16 %v602
      %v730 = vunpack.c.l.b16 %v603
      %v731 = vunpack.c.h.b16 %v603
      %v732 = vunpack.c.l.b16 %v604
      %v733 = vunpack.c.h.b16 %v604
      %v734 = vunpack.c.l.b16 %v605
      %v735 = vunpack.c.h.b16 %v605
      %v736 = vunpack.c.l.b16 %v606
      %v737 = vunpack.c.h.b16 %v606
      %v738 = vunpack.c.l.b16 %v607
      %v739 = vunpack.c.h.b16 %v607
      %v740 = vunpack.c.l.b16 %v608
      %v741 = vunpack.c.h.b16 %v608
      %v742 = vunpack.c.l.b16 %v609
      %v743 = vunpack.c.h.b16 %v609
      %v744 = vunpack.c.l.b16 %v610
      %v745 = vunpack.c.h.b16 %v610
      %v746 = vunpack.c.l.b16 %v611
      %v747 = vunpack.c.h.b16 %v611
      %v748 = vunpack.c.l.b16 %v612
      %v749 = vunpack.c.h.b16 %v612
      %v750 = vunpack.c.l.b16 %v613
      %v751 = vunpack.c.h.b16 %v613
      %v752 = vpack.c.b16 %v696, %v688
      %v753 = vpack.c.b16 %v697, %v689
      %v754 = vpack.c.b16 %v698, %v690
      %v755 = vpack.c.b16 %v699, %v691
      %v756 = vpack.c.b16 %v700, %v692
      %v757 = vpack.c.b16 %v701, %v693
      %v758 = vpack.c.b16 %v702, %v694
      %v759 = vpack.c.b16 %v703, %v695
      %v760 = vpack.c.b16 %v712, %v704
      %v761 = vpack.c.b16 %v713, %v705
      %v762 = vpack.c.b16 %v714, %v706
      %v763 = vpack.c.b16 %v715, %v707
      %v764 = vpack.c.b16 %v716, %v708
      %v765 = vpack.c.b16 %v717, %v709
      %v766 = vpack.c.b16 %v718, %v710
      %v767 = vpack.c.b16 %v719, %v711
      %v768 = vpack.c.b16 %v728, %v720
      %v769 = vpack.c.b16 %v729, %v721
      %v770 = vpack.c.b16 %v730, %v722
      %v771 = vpack.c.b16 %v731, %v723
      %v772 = vpack.c.b16 %v732, %v724
      %v773 = vpack.c.b16 %v733, %v725
      %v774 = vpack.c.b16 %v734, %v726
      %v775 = vpack.c.b16 %v735, %v727
      %v776 = vpack.c.b16 %v744, %v736
      %v777 = vpack.c.b16 %v745, %v737
      %v778 = vpack.c.b16 %v746, %v738
      %v779 = vpack.c.b16 %v747, %v739
      %v780 = vpack.c.b16 %v748, %v740
      %v781 = vpack.c.b16 %v749, %v741
      %v782 = vpack.c.b16 %v750, %v742
      %v783 = vpack.c.b16 %v751, %v743
      %v817 = vsel %vm536, %v581, 0
      %819 = vmatprep.subr.bf16.mxu0 %v753
      %820 = vmatpush1.bf16.msra.mxu0 %v752
      %821 = vmatprep.subr.bf16.mxu0 %v761
      %822 = vmatpush1.bf16.msra.mxu0 %v760
      %823 = vmatprep.subr.bf16.mxu0 %v769
      %824 = vmatpush1.bf16.msra.mxu0 %v768
      %825 = vmatprep.subr.bf16.mxu0 %v777
      %826 = vmatpush1.bf16.msra.mxu0 %v776
      %827 = vmatprep.subr.bf16.mxu0 0
      %828 = vmatpush1.bf16.msra.mxu0 0
      %829 = vmatprep.subr.bf16.mxu0 0
      %830 = vmatpush1.bf16.msra.mxu0 0
      %831 = vmatprep.subr.bf16.mxu0 0
      %832 = vmatpush1.bf16.msra.mxu0 0
      %833 = vmatprep.subr.bf16.mxu0 0
      %834 = vmatpush1.bf16.msra.mxu0 0
      %835 = vmatprep.subr.bf16.mxu0 0
      %836 = vmatpush1.bf16.msra.mxu0 0
      %837 = vmatprep.subr.bf16.mxu0 0
      %838 = vmatpush1.bf16.msra.mxu0 0
      %839 = vmatprep.subr.bf16.mxu0 0
      %840 = vmatpush1.bf16.msra.mxu0 0
      %841 = vmatprep.subr.bf16.mxu0 0
      %842 = vmatpush1.bf16.msra.mxu0 0
      %843 = vmatprep.subr.bf16.mxu0 0
      %844 = vmatpush1.bf16.msra.mxu0 0
      %845 = vmatprep.subr.bf16.mxu0 0
      %846 = vmatpush1.bf16.msra.mxu0 0
      %847 = vmatprep.subr.bf16.mxu0 0
      %848 = vmatpush1.bf16.msra.mxu0 0
      %849 = vmatprep.subr.bf16.mxu0 0
      %850 = vmatpush1.bf16.msra.mxu0 0
      %851 = vmatprep.mubr.bf16.mxu0 0
      %852 = vmatmul.mubr.bf16.gmra.mrb[0].mxu0 %v817
      %v853 = vpop.f32.mrb[0].mxu0
      %v854 = vadd.f32 %v619, %v853
      %v855 = vpop.f32.mrb[0].mxu0
      %v856 = vadd.f32 %v623, %v855
      %v857 = vpop.f32.mrb[0].mxu0
      %v858 = vadd.f32 %v619, %v857
      %v859 = vpop.f32.mrb[0].mxu0
      %v860 = vadd.f32 %v623, %v859
      %861 = vdwg.mxu0
      %862 = vmatprep.subr.bf16.mxu0 %v755
      %863 = vmatpush1.bf16.msra.mxu0 %v754
      %864 = vmatprep.subr.bf16.mxu0 %v763
      %865 = vmatpush1.bf16.msra.mxu0 %v762
      %866 = vmatprep.subr.bf16.mxu0 %v771
      %867 = vmatpush1.bf16.msra.mxu0 %v770
      %868 = vmatprep.subr.bf16.mxu0 %v779
      %869 = vmatpush1.bf16.msra.mxu0 %v778
      %870 = vmatprep.subr.bf16.mxu0 0
      %871 = vmatpush1.bf16.msra.mxu0 0
      %872 = vmatprep.subr.bf16.mxu0 0
      %873 = vmatpush1.bf16.msra.mxu0 0
      %874 = vmatprep.subr.bf16.mxu0 0
      %875 = vmatpush1.bf16.msra.mxu0 0
      %876 = vmatprep.subr.bf16.mxu0 0
      %877 = vmatpush1.bf16.msra.mxu0 0
      %878 = vmatprep.subr.bf16.mxu0 0
      %879 = vmatpush1.bf16.msra.mxu0 0
      %880 = vmatprep.subr.bf16.mxu0 0
      %881 = vmatpush1.bf16.msra.mxu0 0
      %882 = vmatprep.subr.bf16.mxu0 0
      %883 = vmatpush1.bf16.msra.mxu0 0
      %884 = vmatprep.subr.bf16.mxu0 0
      %885 = vmatpush1.bf16.msra.mxu0 0
      %886 = vmatprep.subr.bf16.mxu0 0
      %887 = vmatpush1.bf16.msra.mxu0 0
      %888 = vmatprep.subr.bf16.mxu0 0
      %889 = vmatpush1.bf16.msra.mxu0 0
      %890 = vmatprep.subr.bf16.mxu0 0
      %891 = vmatpush1.bf16.msra.mxu0 0
      %892 = vmatprep.subr.bf16.mxu0 0
      %893 = vmatpush1.bf16.msra.mxu0 0
      %894 = vmatprep.mubr.bf16.mxu0 0
      %895 = vmatmul.mubr.bf16.gmra.mrb[0].mxu0 %v817
      %v896 = vpop.f32.mrb[0].mxu0
      %v897 = vadd.f32 %v627, %v896
      %v898 = vpop.f32.mrb[0].mxu0
      %v899 = vadd.f32 %v631, %v898
      %v900 = vpop.f32.mrb[0].mxu0
      %v901 = vadd.f32 %v627, %v900
      %v902 = vpop.f32.mrb[0].mxu0
      %v903 = vadd.f32 %v631, %v902
      %904 = vdwg.mxu0
      %905 = vmatprep.subr.bf16.mxu0 %v757
      %906 = vmatpush1.bf16.msra.mxu0 %v756
      %907 = vmatprep.subr.bf16.mxu0 %v765
      %908 = vmatpush1.bf16.msra.mxu0 %v764
      %909 = vmatprep.subr.bf16.mxu0 %v773
      %910 = vmatpush1.bf16.msra.mxu0 %v772
      %911 = vmatprep.subr.bf16.mxu0 %v781
      %912 = vmatpush1.bf16.msra.mxu0 %v780
      %913 = vmatprep.subr.bf16.mxu0 0
      %914 = vmatpush1.bf16.msra.mxu0 0
      %915 = vmatprep.subr.bf16.mxu0 0
      %916 = vmatpush1.bf16.msra.mxu0 0
      %917 = vmatprep.subr.bf16.mxu0 0
      %918 = vmatpush1.bf16.msra.mxu0 0
      %919 = vmatprep.subr.bf16.mxu0 0
      %920 = vmatpush1.bf16.msra.mxu0 0
      %921 = vmatprep.subr.bf16.mxu0 0
      %922 = vmatpush1.bf16.msra.mxu0 0
      %923 = vmatprep.subr.bf16.mxu0 0
      %924 = vmatpush1.bf16.msra.mxu0 0
      %925 = vmatprep.subr.bf16.mxu0 0
      %926 = vmatpush1.bf16.msra.mxu0 0
      %927 = vmatprep.subr.bf16.mxu0 0
      %928 = vmatpush1.bf16.msra.mxu0 0
      %929 = vmatprep.subr.bf16.mxu0 0
      %930 = vmatpush1.bf16.msra.mxu0 0
      %931 = vmatprep.subr.bf16.mxu0 0
      %932 = vmatpush1.bf16.msra.mxu0 0
      %933 = vmatprep.subr.bf16.mxu0 0
      %934 = vmatpush1.bf16.msra.mxu0 0
      %935 = vmatprep.subr.bf16.mxu0 0
      %936 = vmatpush1.bf16.msra.mxu0 0
      %937 = vmatprep.mubr.bf16.mxu0 0
      %938 = vmatmul.mubr.bf16.gmra.mrb[0].mxu0 %v817
      %v939 = vpop.f32.mrb[0].mxu0
      %v940 = vadd.f32 %v635, %v939
      %v941 = vpop.f32.mrb[0].mxu0
      %v942 = vadd.f32 %v639, %v941
      %v943 = vpop.f32.mrb[0].mxu0
      %v944 = vadd.f32 %v635, %v943
      %v945 = vpop.f32.mrb[0].mxu0
      %v946 = vadd.f32 %v639, %v945
      %947 = vdwg.mxu0
      %948 = vmatprep.subr.bf16.mxu0 %v759
      %949 = vmatpush1.bf16.msra.mxu0 %v758
      %950 = vmatprep.subr.bf16.mxu0 %v767
      %951 = vmatpush1.bf16.msra.mxu0 %v766
      %952 = vmatprep.subr.bf16.mxu0 %v775
      %953 = vmatpush1.bf16.msra.mxu0 %v774
      %954 = vmatprep.subr.bf16.mxu0 %v783
      %955 = vmatpush1.bf16.msra.mxu0 %v782
      %956 = vmatprep.subr.bf16.mxu0 0
      %957 = vmatpush1.bf16.msra.mxu0 0
      %958 = vmatprep.subr.bf16.mxu0 0
      %959 = vmatpush1.bf16.msra.mxu0 0
      %960 = vmatprep.subr.bf16.mxu0 0
      %961 = vmatpush1.bf16.msra.mxu0 0
      %962 = vmatprep.subr.bf16.mxu0 0
      %963 = vmatpush1.bf16.msra.mxu0 0
      %964 = vmatprep.subr.bf16.mxu0 0
      %965 = vmatpush1.bf16.msra.mxu0 0
      %966 = vmatprep.subr.bf16.mxu0 0
      %967 = vmatpush1.bf16.msra.mxu0 0
      %968 = vmatprep.subr.bf16.mxu0 0
      %969 = vmatpush1.bf16.msra.mxu0 0
      %970 = vmatprep.subr.bf16.mxu0 0
      %971 = vmatpush1.bf16.msra.mxu0 0
      %972 = vmatprep.subr.bf16.mxu0 0
      %973 = vmatpush1.bf16.msra.mxu0 0
      %974 = vmatprep.subr.bf16.mxu0 0
      %975 = vmatpush1.bf16.msra.mxu0 0
      %976 = vmatprep.subr.bf16.mxu0 0
      %977 = vmatpush1.bf16.msra.mxu0 0
      %978 = vmatprep.subr.bf16.mxu0 0
      %979 = vmatpush1.bf16.msra.mxu0 0
      %980 = vmatprep.mubr.bf16.mxu0 0
      %981 = vmatmul.mubr.bf16.gmra.mrb[0].mxu0 %v817
      %v982 = vpop.f32.mrb[0].mxu0
      %v983 = vadd.f32 %v643, %v982
      %v984 = vpop.f32.mrb[0].mxu0
      %v985 = vadd.f32 %v647, %v984
      %v986 = vpop.f32.mrb[0].mxu0
      %v987 = vadd.f32 %v643, %v986
      %v988 = vpop.f32.mrb[0].mxu0
      %v989 = vadd.f32 %v647, %v988
      %990 = vdwg.mxu0
      %v991 = vmax.f32 %v854, 0.0
      %v992 = vmax.f32 %v856, 0.0
      %v993 = vmax.f32 %v897, 0.0
      %v994 = vmax.f32 %v899, 0.0
      %v995 = vmax.f32 %v940, 0.0
      %v996 = vmax.f32 %v942, 0.0
      %v997 = vmax.f32 %v983, 0.0
      %v998 = vmax.f32 %v985, 0.0
      %v999 = vmax.f32 %v858, 0.0
      %v1000 = vmax.f32 %v860, 0.0
      %v1001 = vmax.f32 %v901, 0.0
      %v1002 = vmax.f32 %v903, 0.0
      %v1003 = vmax.f32 %v944, 0.0
      %v1004 = vmax.f32 %v946, 0.0
      %v1005 = vmax.f32 %v987, 0.0
      %v1006 = vmax.f32 %v989, 0.0
      %v1007 = vpack.c.bf16 %v999, %v991
      %v1008 = vpack.c.bf16 %v1000, %v992
      %v1009 = vpack.c.bf16 %v1001, %v993
      %v1010 = vpack.c.bf16 %v1002, %v994
      %v1011 = vpack.c.bf16 %v1003, %v995
      %v1012 = vpack.c.bf16 %v1004, %v996
      %v1013 = vpack.c.bf16 %v1005, %v997
      %v1014 = vpack.c.bf16 %v1006, %v998
      %v1015 = vld [vmem:[%s6] sm:$0xff]
      %v1016 = vld [vmem:[%s6 + $0x8] sm:$0xff]
      %v1017 = vld [vmem:[%s6 + $0x10] sm:$0xff]
      %v1018 = vld [vmem:[%s6 + $0x18] sm:$0xff]
      %v1019 = vld [vmem:[%s6 + $0x20] sm:$0xff]
      %v1020 = vld [vmem:[%s6 + $0x28] sm:$0xff]
      %v1021 = vld [vmem:[%s6 + $0x30] sm:$0xff]
      %v1022 = vld [vmem:[%s6 + $0x38] sm:$0xff]
      %v1023 = vld [vmem:[%s6 + $0x40] sm:$0xff]
      %v1024 = vld [vmem:[%s6 + $0x48] sm:$0xff]
      %v1025 = vld [vmem:[%s6 + $0x50] sm:$0xff]
      %v1026 = vld [vmem:[%s6 + $0x58] sm:$0xff]
      %v1027 = vld [vmem:[%s6 + $0x60] sm:$0xff]
      %v1028 = vld [vmem:[%s6 + $0x68] sm:$0xff]
      %v1029 = vld [vmem:[%s6 + $0x70] sm:$0xff]
      %v1030 = vld [vmem:[%s6 + $0x78] sm:$0xff]
      %v1031 = vld [vmem:[%s6 + $0x80] sm:$0xff]
      %v1032 = vld [vmem:[%s6 + $0x88] sm:$0xff]
      %v1033 = vld [vmem:[%s6 + $0x90] sm:$0xff]
      %v1034 = vld [vmem:[%s6 + $0x98] sm:$0xff]
      %v1035 = vld [vmem:[%s6 + $0xa0] sm:$0xff]
      %v1036 = vld [vmem:[%s6 + $0xa8] sm:$0xff]
      %v1037 = vld [vmem:[%s6 + $0xb0] sm:$0xff]
      %v1038 = vld [vmem:[%s6 + $0xb8] sm:$0xff]
      %v1039 = vld [vmem:[%s6 + $0xc0] sm:$0xff]
      %v1040 = vld [vmem:[%s6 + $0xc8] sm:$0xff]
      %v1041 = vld [vmem:[%s6 + $0xd0] sm:$0xff]
      %v1042 = vld [vmem:[%s6 + $0xd8] sm:$0xff]
      %v1043 = vld [vmem:[%s6 + $0xe0] sm:$0xff]
      %v1044 = vld [vmem:[%s6 + $0xe8] sm:$0xff]
      %v1045 = vld [vmem:[%s6 + $0xf0] sm:$0xff]
      %v1046 = vld [vmem:[%s6 + $0xf8] sm:$0xff]
      %v1047 = vld [vmem:[%s6 + $0x100] sm:$0xff]
      %v1048 = vld [vmem:[%s6 + $0x108] sm:$0xff]
      %v1049 = vld [vmem:[%s6 + $0x110] sm:$0xff]
      %v1050 = vld [vmem:[%s6 + $0x118] sm:$0xff]
      %v1051 = vld [vmem:[%s6 + $0x120] sm:$0xff]
      %v1052 = vld [vmem:[%s6 + $0x128] sm:$0xff]
      %v1053 = vld [vmem:[%s6 + $0x130] sm:$0xff]
      %v1054 = vld [vmem:[%s6 + $0x138] sm:$0xff]
      %v1055 = vld [vmem:[%s6 + $0x140] sm:$0xff]
      %v1056 = vld [vmem:[%s6 + $0x148] sm:$0xff]
      %v1057 = vld [vmem:[%s6 + $0x150] sm:$0xff]
      %v1058 = vld [vmem:[%s6 + $0x158] sm:$0xff]
      %v1059 = vld [vmem:[%s6 + $0x160] sm:$0xff]
      %v1060 = vld [vmem:[%s6 + $0x168] sm:$0xff]
      %v1061 = vld [vmem:[%s6 + $0x170] sm:$0xff]
      %v1062 = vld [vmem:[%s6 + $0x178] sm:$0xff]
      %v1063 = vld [vmem:[%s6 + $0x180] sm:$0xff]
      %v1064 = vld [vmem:[%s6 + $0x188] sm:$0xff]
      %v1065 = vld [vmem:[%s6 + $0x190] sm:$0xff]
      %v1066 = vld [vmem:[%s6 + $0x198] sm:$0xff]
      %v1067 = vld [vmem:[%s6 + $0x1a0] sm:$0xff]
      %v1068 = vld [vmem:[%s6 + $0x1a8] sm:$0xff]
      %v1069 = vld [vmem:[%s6 + $0x1b0] sm:$0xff]
      %v1070 = vld [vmem:[%s6 + $0x1b8] sm:$0xff]
      %v1071 = vld [vmem:[%s6 + $0x1c0] sm:$0xff]
      %v1072 = vld [vmem:[%s6 + $0x1c8] sm:$0xff]
      %v1073 = vld [vmem:[%s6 + $0x1d0] sm:$0xff]
      %v1074 = vld [vmem:[%s6 + $0x1d8] sm:$0xff]
      %v1075 = vld [vmem:[%s6 + $0x1e0] sm:$0xff]
      %v1076 = vld [vmem:[%s6 + $0x1e8] sm:$0xff]
      %v1077 = vld [vmem:[%s6 + $0x1f0] sm:$0xff]
      %v1078 = vld [vmem:[%s6 + $0x1f8] sm:$0xff]
      %v1079 = vld [vmem:[%s6 + $0x200] sm:$0xff]
      %v1080 = vld [vmem:[%s6 + $0x208] sm:$0xff]
      %v1081 = vld [vmem:[%s6 + $0x210] sm:$0xff]
      %v1082 = vld [vmem:[%s6 + $0x218] sm:$0xff]
      %v1083 = vld [vmem:[%s6 + $0x220] sm:$0xff]
      %v1084 = vld [vmem:[%s6 + $0x228] sm:$0xff]
      %v1085 = vld [vmem:[%s6 + $0x230] sm:$0xff]
      %v1086 = vld [vmem:[%s6 + $0x238] sm:$0xff]
      %v1087 = vld [vmem:[%s6 + $0x240] sm:$0xff]
      %v1088 = vld [vmem:[%s6 + $0x248] sm:$0xff]
      %v1089 = vld [vmem:[%s6 + $0x250] sm:$0xff]
      %v1090 = vld [vmem:[%s6 + $0x258] sm:$0xff]
      %v1091 = vld [vmem:[%s6 + $0x260] sm:$0xff]
      %v1092 = vld [vmem:[%s6 + $0x268] sm:$0xff]
      %v1093 = vld [vmem:[%s6 + $0x270] sm:$0xff]
      %v1094 = vld [vmem:[%s6 + $0x278] sm:$0xff]
      %v1095 = vld [vmem:[%s6 + $0x280] sm:$0xff]
      %v1096 = vld [vmem:[%s6 + $0x288] sm:$0xff]
      %v1097 = vld [vmem:[%s6 + $0x290] sm:$0xff]
      %v1098 = vld [vmem:[%s6 + $0x298] sm:$0xff]
      %v1099 = vld [vmem:[%s6 + $0x2a0] sm:$0xff]
      %v1100 = vld [vmem:[%s6 + $0x2a8] sm:$0xff]
      %v1101 = vld [vmem:[%s6 + $0x2b0] sm:$0xff]
      %v1102 = vld [vmem:[%s6 + $0x2b8] sm:$0xff]
      %v1103 = vld [vmem:[%s6 + $0x2c0] sm:$0xff]
      %v1104 = vld [vmem:[%s6 + $0x2c8] sm:$0xff]
      %v1105 = vld [vmem:[%s6 + $0x2d0] sm:$0xff]
      %v1106 = vld [vmem:[%s6 + $0x2d8] sm:$0xff]
      %v1107 = vld [vmem:[%s6 + $0x2e0] sm:$0xff]
      %v1108 = vld [vmem:[%s6 + $0x2e8] sm:$0xff]
      %v1109 = vld [vmem:[%s6 + $0x2f0] sm:$0xff]
      %v1110 = vld [vmem:[%s6 + $0x2f8] sm:$0xff]
      %v1111 = vld [vmem:[%s6 + $0x300] sm:$0xff]
      %v1112 = vld [vmem:[%s6 + $0x308] sm:$0xff]
      %v1113 = vld [vmem:[%s6 + $0x310] sm:$0xff]
      %v1114 = vld [vmem:[%s6 + $0x318] sm:$0xff]
      %v1115 = vld [vmem:[%s6 + $0x320] sm:$0xff]
      %v1116 = vld [vmem:[%s6 + $0x328] sm:$0xff]
      %v1117 = vld [vmem:[%s6 + $0x330] sm:$0xff]
      %v1118 = vld [vmem:[%s6 + $0x338] sm:$0xff]
      %v1119 = vld [vmem:[%s6 + $0x340] sm:$0xff]
      %v1120 = vld [vmem:[%s6 + $0x348] sm:$0xff]
      %v1121 = vld [vmem:[%s6 + $0x350] sm:$0xff]
      %v1122 = vld [vmem:[%s6 + $0x358] sm:$0xff]
      %v1123 = vld [vmem:[%s6 + $0x360] sm:$0xff]
      %v1124 = vld [vmem:[%s6 + $0x368] sm:$0xff]
      %v1125 = vld [vmem:[%s6 + $0x370] sm:$0xff]
      %v1126 = vld [vmem:[%s6 + $0x378] sm:$0xff]
      %v1127 = vld [vmem:[%s6 + $0x380] sm:$0xff]
      %v1128 = vld [vmem:[%s6 + $0x388] sm:$0xff]
      %v1129 = vld [vmem:[%s6 + $0x390] sm:$0xff]
      %v1130 = vld [vmem:[%s6 + $0x398] sm:$0xff]
      %v1131 = vld [vmem:[%s6 + $0x3a0] sm:$0xff]
      %v1132 = vld [vmem:[%s6 + $0x3a8] sm:$0xff]
      %v1133 = vld [vmem:[%s6 + $0x3b0] sm:$0xff]
      %v1134 = vld [vmem:[%s6 + $0x3b8] sm:$0xff]
      %v1135 = vld [vmem:[%s6 + $0x3c0] sm:$0xff]
      %v1136 = vld [vmem:[%s6 + $0x3c8] sm:$0xff]
      %v1137 = vld [vmem:[%s6 + $0x3d0] sm:$0xff]
      %v1138 = vld [vmem:[%s6 + $0x3d8] sm:$0xff]
      %v1139 = vld [vmem:[%s6 + $0x3e0] sm:$0xff]
      %v1140 = vld [vmem:[%s6 + $0x3e8] sm:$0xff]
      %v1141 = vld [vmem:[%s6 + $0x3f0] sm:$0xff]
      %v1142 = vld [vmem:[%s6 + $0x3f8] sm:$0xff]
      %v1143 = vld [vmem:[%s6 + $0x400] sm:$0xff]
      %v1144 = vld [vmem:[%s6 + $0x408] sm:$0xff]
      %v1145 = vld [vmem:[%s6 + $0x410] sm:$0xff]
      %v1146 = vld [vmem:[%s6 + $0x418] sm:$0xff]
      %v1147 = vld [vmem:[%s6 + $0x420] sm:$0xff]
      %v1148 = vld [vmem:[%s6 + $0x428] sm:$0xff]
      %v1149 = vld [vmem:[%s6 + $0x430] sm:$0xff]
      %v1150 = vld [vmem:[%s6 + $0x438] sm:$0xff]
      %v1151 = vld [vmem:[%s6 + $0x440] sm:$0xff]
      %v1152 = vld [vmem:[%s6 + $0x448] sm:$0xff]
      %v1153 = vld [vmem:[%s6 + $0x450] sm:$0xff]
      %v1154 = vld [vmem:[%s6 + $0x458] sm:$0xff]
      %v1155 = vld [vmem:[%s6 + $0x460] sm:$0xff]
      %v1156 = vld [vmem:[%s6 + $0x468] sm:$0xff]
      %v1157 = vld [vmem:[%s6 + $0x470] sm:$0xff]
      %v1158 = vld [vmem:[%s6 + $0x478] sm:$0xff]
      %v1159 = vld [vmem:[%s6 + $0x480] sm:$0xff]
      %v1160 = vld [vmem:[%s6 + $0x488] sm:$0xff]
      %v1161 = vld [vmem:[%s6 + $0x490] sm:$0xff]
      %v1162 = vld [vmem:[%s6 + $0x498] sm:$0xff]
      %v1163 = vld [vmem:[%s6 + $0x4a0] sm:$0xff]
      %v1164 = vld [vmem:[%s6 + $0x4a8] sm:$0xff]
      %v1165 = vld [vmem:[%s6 + $0x4b0] sm:$0xff]
      %v1166 = vld [vmem:[%s6 + $0x4b8] sm:$0xff]
      %v1167 = vld [vmem:[%s6 + $0x4c0] sm:$0xff]
      %v1168 = vld [vmem:[%s6 + $0x4c8] sm:$0xff]
      %v1169 = vld [vmem:[%s6 + $0x4d0] sm:$0xff]
      %v1170 = vld [vmem:[%s6 + $0x4d8] sm:$0xff]
      %v1171 = vld [vmem:[%s6 + $0x4e0] sm:$0xff]
      %v1172 = vld [vmem:[%s6 + $0x4e8] sm:$0xff]
      %v1173 = vld [vmem:[%s6 + $0x4f0] sm:$0xff]
      %v1174 = vld [vmem:[%s6 + $0x4f8] sm:$0xff]
      %v1175 = vld [vmem:[%s6 + $0x500] sm:$0xff]
      %v1176 = vld [vmem:[%s6 + $0x508] sm:$0xff]
      %v1177 = vld [vmem:[%s6 + $0x510] sm:$0xff]
      %v1178 = vld [vmem:[%s6 + $0x518] sm:$0xff]
      %v1179 = vld [vmem:[%s6 + $0x520] sm:$0xff]
      %v1180 = vld [vmem:[%s6 + $0x528] sm:$0xff]
      %v1181 = vld [vmem:[%s6 + $0x530] sm:$0xff]
      %v1182 = vld [vmem:[%s6 + $0x538] sm:$0xff]
      %v1183 = vld [vmem:[%s6 + $0x540] sm:$0xff]
      %v1184 = vld [vmem:[%s6 + $0x548] sm:$0xff]
      %v1185 = vld [vmem:[%s6 + $0x550] sm:$0xff]
      %v1186 = vld [vmem:[%s6 + $0x558] sm:$0xff]
      %v1187 = vld [vmem:[%s6 + $0x560] sm:$0xff]
      %v1188 = vld [vmem:[%s6 + $0x568] sm:$0xff]
      %v1189 = vld [vmem:[%s6 + $0x570] sm:$0xff]
      %v1190 = vld [vmem:[%s6 + $0x578] sm:$0xff]
      %v1191 = vld [vmem:[%s6 + $0x580] sm:$0xff]
      %v1192 = vld [vmem:[%s6 + $0x588] sm:$0xff]
      %v1193 = vld [vmem:[%s6 + $0x590] sm:$0xff]
      %v1194 = vld [vmem:[%s6 + $0x598] sm:$0xff]
      %v1195 = vld [vmem:[%s6 + $0x5a0] sm:$0xff]
      %v1196 = vld [vmem:[%s6 + $0x5a8] sm:$0xff]
      %v1197 = vld [vmem:[%s6 + $0x5b0] sm:$0xff]
      %v1198 = vld [vmem:[%s6 + $0x5b8] sm:$0xff]
      %v1199 = vld [vmem:[%s6 + $0x5c0] sm:$0xff]
      %v1200 = vld [vmem:[%s6 + $0x5c8] sm:$0xff]
      %v1201 = vld [vmem:[%s6 + $0x5d0] sm:$0xff]
      %v1202 = vld [vmem:[%s6 + $0x5d8] sm:$0xff]
      %v1203 = vld [vmem:[%s6 + $0x5e0] sm:$0xff]
      %v1204 = vld [vmem:[%s6 + $0x5e8] sm:$0xff]
      %v1205 = vld [vmem:[%s6 + $0x5f0] sm:$0xff]
      %v1206 = vld [vmem:[%s6 + $0x5f8] sm:$0xff]
      %v1207 = vld [vmem:[%s6 + $0x600] sm:$0xff]
      %v1208 = vld [vmem:[%s6 + $0x608] sm:$0xff]
      %v1209 = vld [vmem:[%s6 + $0x610] sm:$0xff]
      %v1210 = vld [vmem:[%s6 + $0x618] sm:$0xff]
      %v1211 = vld [vmem:[%s6 + $0x620] sm:$0xff]
      %v1212 = vld [vmem:[%s6 + $0x628] sm:$0xff]
      %v1213 = vld [vmem:[%s6 + $0x630] sm:$0xff]
      %v1214 = vld [vmem:[%s6 + $0x638] sm:$0xff]
      %v1215 = vld [vmem:[%s6 + $0x640] sm:$0xff]
      %v1216 = vld [vmem:[%s6 + $0x648] sm:$0xff]
      %v1217 = vld [vmem:[%s6 + $0x650] sm:$0xff]
      %v1218 = vld [vmem:[%s6 + $0x658] sm:$0xff]
      %v1219 = vld [vmem:[%s6 + $0x660] sm:$0xff]
      %v1220 = vld [vmem:[%s6 + $0x668] sm:$0xff]
      %v1221 = vld [vmem:[%s6 + $0x670] sm:$0xff]
      %v1222 = vld [vmem:[%s6 + $0x678] sm:$0xff]
      %v1223 = vld [vmem:[%s6 + $0x680] sm:$0xff]
      %v1224 = vld [vmem:[%s6 + $0x688] sm:$0xff]
      %v1225 = vld [vmem:[%s6 + $0x690] sm:$0xff]
      %v1226 = vld [vmem:[%s6 + $0x698] sm:$0xff]
      %v1227 = vld [vmem:[%s6 + $0x6a0] sm:$0xff]
      %v1228 = vld [vmem:[%s6 + $0x6a8] sm:$0xff]
      %v1229 = vld [vmem:[%s6 + $0x6b0] sm:$0xff]
      %v1230 = vld [vmem:[%s6 + $0x6b8] sm:$0xff]
      %v1231 = vld [vmem:[%s6 + $0x6c0] sm:$0xff]
      %v1232 = vld [vmem:[%s6 + $0x6c8] sm:$0xff]
      %v1233 = vld [vmem:[%s6 + $0x6d0] sm:$0xff]
      %v1234 = vld [vmem:[%s6 + $0x6d8] sm:$0xff]
      %v1235 = vld [vmem:[%s6 + $0x6e0] sm:$0xff]
      %v1236 = vld [vmem:[%s6 + $0x6e8] sm:$0xff]
      %v1237 = vld [vmem:[%s6 + $0x6f0] sm:$0xff]
      %v1238 = vld [vmem:[%s6 + $0x6f8] sm:$0xff]
      %v1239 = vld [vmem:[%s6 + $0x700] sm:$0xff]
      %v1240 = vld [vmem:[%s6 + $0x708] sm:$0xff]
      %v1241 = vld [vmem:[%s6 + $0x710] sm:$0xff]
      %v1242 = vld [vmem:[%s6 + $0x718] sm:$0xff]
      %v1243 = vld [vmem:[%s6 + $0x720] sm:$0xff]
      %v1244 = vld [vmem:[%s6 + $0x728] sm:$0xff]
      %v1245 = vld [vmem:[%s6 + $0x730] sm:$0xff]
      %v1246 = vld [vmem:[%s6 + $0x738] sm:$0xff]
      %v1247 = vld [vmem:[%s6 + $0x740] sm:$0xff]
      %v1248 = vld [vmem:[%s6 + $0x748] sm:$0xff]
      %v1249 = vld [vmem:[%s6 + $0x750] sm:$0xff]
      %v1250 = vld [vmem:[%s6 + $0x758] sm:$0xff]
      %v1251 = vld [vmem:[%s6 + $0x760] sm:$0xff]
      %v1252 = vld [vmem:[%s6 + $0x768] sm:$0xff]
      %v1253 = vld [vmem:[%s6 + $0x770] sm:$0xff]
      %v1254 = vld [vmem:[%s6 + $0x778] sm:$0xff]
      %v1255 = vld [vmem:[%s6 + $0x780] sm:$0xff]
      %v1256 = vld [vmem:[%s6 + $0x788] sm:$0xff]
      %v1257 = vld [vmem:[%s6 + $0x790] sm:$0xff]
      %v1258 = vld [vmem:[%s6 + $0x798] sm:$0xff]
      %v1259 = vld [vmem:[%s6 + $0x7a0] sm:$0xff]
      %v1260 = vld [vmem:[%s6 + $0x7a8] sm:$0xff]
      %v1261 = vld [vmem:[%s6 + $0x7b0] sm:$0xff]
      %v1262 = vld [vmem:[%s6 + $0x7b8] sm:$0xff]
      %v1263 = vld [vmem:[%s6 + $0x7c0] sm:$0xff]
      %v1264 = vld [vmem:[%s6 + $0x7c8] sm:$0xff]
      %v1265 = vld [vmem:[%s6 + $0x7d0] sm:$0xff]
      %v1266 = vld [vmem:[%s6 + $0x7d8] sm:$0xff]
      %v1267 = vld [vmem:[%s6 + $0x7e0] sm:$0xff]
      %v1268 = vld [vmem:[%s6 + $0x7e8] sm:$0xff]
      %v1269 = vld [vmem:[%s6 + $0x7f0] sm:$0xff]
      %v1270 = vld [vmem:[%s6 + $0x7f8] sm:$0xff]
      %v1271 = vld [vmem:[%s7] sm:$0xf]
      %v1273 = vlaneseq
      %v1274 = vshrl.u32 %v1273, 7
      %v1275 = vsub.s32 0, %v1274
      %v1276 = vrot.slane %v1271, %v1275
      %v1277 = vlaneseq
      %v1278 = vshrl.u32 %v1277, 7
      %v1279 = vsub.s32 1, %v1278
      %v1280 = vrot.slane %v1271, %v1279
      %v1281 = vlaneseq
      %v1282 = vshrl.u32 %v1281, 7
      %v1283 = vsub.s32 2, %v1282
      %v1284 = vrot.slane %v1271, %v1283
      %v1285 = vlaneseq
      %v1286 = vshrl.u32 %v1285, 7
      %v1287 = vsub.s32 3, %v1286
      %v1288 = vrot.slane %v1271, %v1287
      %v1549 = vunpack.c.l.b16 %v1015
      %v1550 = vunpack.c.h.b16 %v1015
      %v1551 = vunpack.c.l.b16 %v1016
      %v1552 = vunpack.c.h.b16 %v1016
      %v1553 = vunpack.c.l.b16 %v1017
      %v1554 = vunpack.c.h.b16 %v1017
      %v1555 = vunpack.c.l.b16 %v1018
      %v1556 = vunpack.c.h.b16 %v1018
      %v1557 = vunpack.c.l.b16 %v1019
      %v1558 = vunpack.c.h.b16 %v1019
      %v1559 = vunpack.c.l.b16 %v1020
      %v1560 = vunpack.c.h.b16 %v1020
      %v1561 = vunpack.c.l.b16 %v1021
      %v1562 = vunpack.c.h.b16 %v1021
      %v1563 = vunpack.c.l.b16 %v1022
      %v1564 = vunpack.c.h.b16 %v1022
      %v1565 = vunpack.c.l.b16 %v1023
      %v1566 = vunpack.c.h.b16 %v1023
      %v1567 = vunpack.c.l.b16 %v1024
      %v1568 = vunpack.c.h.b16 %v1024
      %v1569 = vunpack.c.l.b16 %v1025
      %v1570 = vunpack.c.h.b16 %v1025
      %v1571 = vunpack.c.l.b16 %v1026
      %v1572 = vunpack.c.h.b16 %v1026
      %v1573 = vunpack.c.l.b16 %v1027
      %v1574 = vunpack.c.h.b16 %v1027
      %v1575 = vunpack.c.l.b16 %v1028
      %v1576 = vunpack.c.h.b16 %v1028
      %v1577 = vunpack.c.l.b16 %v1029
      %v1578 = vunpack.c.h.b16 %v1029
      %v1579 = vunpack.c.l.b16 %v1030
      %v1580 = vunpack.c.h.b16 %v1030
      %v1581 = vunpack.c.l.b16 %v1031
      %v1582 = vunpack.c.h.b16 %v1031
      %v1583 = vunpack.c.l.b16 %v1032
      %v1584 = vunpack.c.h.b16 %v1032
      %v1585 = vunpack.c.l.b16 %v1033
      %v1586 = vunpack.c.h.b16 %v1033
      %v1587 = vunpack.c.l.b16 %v1034
      %v1588 = vunpack.c.h.b16 %v1034
      %v1589 = vunpack.c.l.b16 %v1035
      %v1590 = vunpack.c.h.b16 %v1035
      %v1591 = vunpack.c.l.b16 %v1036
      %v1592 = vunpack.c.h.b16 %v1036
      %v1593 = vunpack.c.l.b16 %v1037
      %v1594 = vunpack.c.h.b16 %v1037
      %v1595 = vunpack.c.l.b16 %v1038
      %v1596 = vunpack.c.h.b16 %v1038
      %v1597 = vunpack.c.l.b16 %v1039
      %v1598 = vunpack.c.h.b16 %v1039
      %v1599 = vunpack.c.l.b16 %v1040
      %v1600 = vunpack.c.h.b16 %v1040
      %v1601 = vunpack.c.l.b16 %v1041
      %v1602 = vunpack.c.h.b16 %v1041
      %v1603 = vunpack.c.l.b16 %v1042
      %v1604 = vunpack.c.h.b16 %v1042
      %v1605 = vunpack.c.l.b16 %v1043
      %v1606 = vunpack.c.h.b16 %v1043
      %v1607 = vunpack.c.l.b16 %v1044
      %v1608 = vunpack.c.h.b16 %v1044
      %v1609 = vunpack.c.l.b16 %v1045
      %v1610 = vunpack.c.h.b16 %v1045
      %v1611 = vunpack.c.l.b16 %v1046
      %v1612 = vunpack.c.h.b16 %v1046
      %v1613 = vunpack.c.l.b16 %v1047
      %v1614 = vunpack.c.h.b16 %v1047
      %v1615 = vunpack.c.l.b16 %v1048
      %v1616 = vunpack.c.h.b16 %v1048
      %v1617 = vunpack.c.l.b16 %v1049
      %v1618 = vunpack.c.h.b16 %v1049
      %v1619 = vunpack.c.l.b16 %v1050
      %v1620 = vunpack.c.h.b16 %v1050
      %v1621 = vunpack.c.l.b16 %v1051
      %v1622 = vunpack.c.h.b16 %v1051
      %v1623 = vunpack.c.l.b16 %v1052
      %v1624 = vunpack.c.h.b16 %v1052
      %v1625 = vunpack.c.l.b16 %v1053
      %v1626 = vunpack.c.h.b16 %v1053
      %v1627 = vunpack.c.l.b16 %v1054
      %v1628 = vunpack.c.h.b16 %v1054
      %v1629 = vunpack.c.l.b16 %v1055
      %v1630 = vunpack.c.h.b16 %v1055
      %v1631 = vunpack.c.l.b16 %v1056
      %v1632 = vunpack.c.h.b16 %v1056
      %v1633 = vunpack.c.l.b16 %v1057
      %v1634 = vunpack.c.h.b16 %v1057
      %v1635 = vunpack.c.l.b16 %v1058
      %v1636 = vunpack.c.h.b16 %v1058
      %v1637 = vunpack.c.l.b16 %v1059
      %v1638 = vunpack.c.h.b16 %v1059
      %v1639 = vunpack.c.l.b16 %v1060
      %v1640 = vunpack.c.h.b16 %v1060
      %v1641 = vunpack.c.l.b16 %v1061
      %v1642 = vunpack.c.h.b16 %v1061
      %v1643 = vunpack.c.l.b16 %v1062
      %v1644 = vunpack.c.h.b16 %v1062
      %v1645 = vunpack.c.l.b16 %v1063
      %v1646 = vunpack.c.h.b16 %v1063
      %v1647 = vunpack.c.l.b16 %v1064
      %v1648 = vunpack.c.h.b16 %v1064
      %v1649 = vunpack.c.l.b16 %v1065
      %v1650 = vunpack.c.h.b16 %v1065
      %v1651 = vunpack.c.l.b16 %v1066
      %v1652 = vunpack.c.h.b16 %v1066
      %v1653 = vunpack.c.l.b16 %v1067
      %v1654 = vunpack.c.h.b16 %v1067
      %v1655 = vunpack.c.l.b16 %v1068
      %v1656 = vunpack.c.h.b16 %v1068
      %v1657 = vunpack.c.l.b16 %v1069
      %v1658 = vunpack.c.h.b16 %v1069
      %v1659 = vunpack.c.l.b16 %v1070
      %v1660 = vunpack.c.h.b16 %v1070
      %v1661 = vunpack.c.l.b16 %v1071
      %v1662 = vunpack.c.h.b16 %v1071
      %v1663 = vunpack.c.l.b16 %v1072
      %v1664 = vunpack.c.h.b16 %v1072
      %v1665 = vunpack.c.l.b16 %v1073
      %v1666 = vunpack.c.h.b16 %v1073
      %v1667 = vunpack.c.l.b16 %v1074
      %v1668 = vunpack.c.h.b16 %v1074
      %v1669 = vunpack.c.l.b16 %v1075
      %v1670 = vunpack.c.h.b16 %v1075
      %v1671 = vunpack.c.l.b16 %v1076
      %v1672 = vunpack.c.h.b16 %v1076
      %v1673 = vunpack.c.l.b16 %v1077
      %v1674 = vunpack.c.h.b16 %v1077
      %v1675 = vunpack.c.l.b16 %v1078
      %v1676 = vunpack.c.h.b16 %v1078
      %v1677 = vunpack.c.l.b16 %v1079
      %v1678 = vunpack.c.h.b16 %v1079
      %v1679 = vunpack.c.l.b16 %v1080
      %v1680 = vunpack.c.h.b16 %v1080
      %v1681 = vunpack.c.l.b16 %v1081
      %v1682 = vunpack.c.h.b16 %v1081
      %v1683 = vunpack.c.l.b16 %v1082
      %v1684 = vunpack.c.h.b16 %v1082
      %v1685 = vunpack.c.l.b16 %v1083
      %v1686 = vunpack.c.h.b16 %v1083
      %v1687 = vunpack.c.l.b16 %v1084
      %v1688 = vunpack.c.h.b16 %v1084
      %v1689 = vunpack.c.l.b16 %v1085
      %v1690 = vunpack.c.h.b16 %v1085
      %v1691 = vunpack.c.l.b16 %v1086
      %v1692 = vunpack.c.h.b16 %v1086
      %v1693 = vunpack.c.l.b16 %v1087
      %v1694 = vunpack.c.h.b16 %v1087
      %v1695 = vunpack.c.l.b16 %v1088
      %v1696 = vunpack.c.h.b16 %v1088
      %v1697 = vunpack.c.l.b16 %v1089
      %v1698 = vunpack.c.h.b16 %v1089
      %v1699 = vunpack.c.l.b16 %v1090
      %v1700 = vunpack.c.h.b16 %v1090
      %v1701 = vunpack.c.l.b16 %v1091
      %v1702 = vunpack.c.h.b16 %v1091
      %v1703 = vunpack.c.l.b16 %v1092
      %v1704 = vunpack.c.h.b16 %v1092
      %v1705 = vunpack.c.l.b16 %v1093
      %v1706 = vunpack.c.h.b16 %v1093
      %v1707 = vunpack.c.l.b16 %v1094
      %v1708 = vunpack.c.h.b16 %v1094
      %v1709 = vunpack.c.l.b16 %v1095
      %v1710 = vunpack.c.h.b16 %v1095
      %v1711 = vunpack.c.l.b16 %v1096
      %v1712 = vunpack.c.h.b16 %v1096
      %v1713 = vunpack.c.l.b16 %v1097
      %v1714 = vunpack.c.h.b16 %v1097
      %v1715 = vunpack.c.l.b16 %v1098
      %v1716 = vunpack.c.h.b16 %v1098
      %v1717 = vunpack.c.l.b16 %v1099
      %v1718 = vunpack.c.h.b16 %v1099
      %v1719 = vunpack.c.l.b16 %v1100
      %v1720 = vunpack.c.h.b16 %v1100
      %v1721 = vunpack.c.l.b16 %v1101
      %v1722 = vunpack.c.h.b16 %v1101
      %v1723 = vunpack.c.l.b16 %v1102
      %v1724 = vunpack.c.h.b16 %v1102
      %v1725 = vunpack.c.l.b16 %v1103
      %v1726 = vunpack.c.h.b16 %v1103
      %v1727 = vunpack.c.l.b16 %v1104
      %v1728 = vunpack.c.h.b16 %v1104
      %v1729 = vunpack.c.l.b16 %v1105
      %v1730 = vunpack.c.h.b16 %v1105
      %v1731 = vunpack.c.l.b16 %v1106
      %v1732 = vunpack.c.h.b16 %v1106
      %v1733 = vunpack.c.l.b16 %v1107
      %v1734 = vunpack.c.h.b16 %v1107
      %v1735 = vunpack.c.l.b16 %v1108
      %v1736 = vunpack.c.h.b16 %v1108
      %v1737 = vunpack.c.l.b16 %v1109
      %v1738 = vunpack.c.h.b16 %v1109
      %v1739 = vunpack.c.l.b16 %v1110
      %v1740 = vunpack.c.h.b16 %v1110
      %v1741 = vunpack.c.l.b16 %v1111
      %v1742 = vunpack.c.h.b16 %v1111
      %v1743 = vunpack.c.l.b16 %v1112
      %v1744 = vunpack.c.h.b16 %v1112
      %v1745 = vunpack.c.l.b16 %v1113
      %v1746 = vunpack.c.h.b16 %v1113
      %v1747 = vunpack.c.l.b16 %v1114
      %v1748 = vunpack.c.h.b16 %v1114
      %v1749 = vunpack.c.l.b16 %v1115
      %v1750 = vunpack.c.h.b16 %v1115
      %v1751 = vunpack.c.l.b16 %v1116
      %v1752 = vunpack.c.h.b16 %v1116
      %v1753 = vunpack.c.l.b16 %v1117
      %v1754 = vunpack.c.h.b16 %v1117
      %v1755 = vunpack.c.l.b16 %v1118
      %v1756 = vunpack.c.h.b16 %v1118
      %v1757 = vunpack.c.l.b16 %v1119
      %v1758 = vunpack.c.h.b16 %v1119
      %v1759 = vunpack.c.l.b16 %v1120
      %v1760 = vunpack.c.h.b16 %v1120
      %v1761 = vunpack.c.l.b16 %v1121
      %v1762 = vunpack.c.h.b16 %v1121
      %v1763 = vunpack.c.l.b16 %v1122
      %v1764 = vunpack.c.h.b16 %v1122
      %v1765 = vunpack.c.l.b16 %v1123
      %v1766 = vunpack.c.h.b16 %v1123
      %v1767 = vunpack.c.l.b16 %v1124
      %v1768 = vunpack.c.h.b16 %v1124
      %v1769 = vunpack.c.l.b16 %v1125
      %v1770 = vunpack.c.h.b16 %v1125
      %v1771 = vunpack.c.l.b16 %v1126
      %v1772 = vunpack.c.h.b16 %v1126
      %v1773 = vunpack.c.l.b16 %v1127
      %v1774 = vunpack.c.h.b16 %v1127
      %v1775 = vunpack.c.l.b16 %v1128
      %v1776 = vunpack.c.h.b16 %v1128
      %v1777 = vunpack.c.l.b16 %v1129
      %v1778 = vunpack.c.h.b16 %v1129
      %v1779 = vunpack.c.l.b16 %v1130
      %v1780 = vunpack.c.h.b16 %v1130
      %v1781 = vunpack.c.l.b16 %v1131
      %v1782 = vunpack.c.h.b16 %v1131
      %v1783 = vunpack.c.l.b16 %v1132
      %v1784 = vunpack.c.h.b16 %v1132
      %v1785 = vunpack.c.l.b16 %v1133
      %v1786 = vunpack.c.h.b16 %v1133
      %v1787 = vunpack.c.l.b16 %v1134
      %v1788 = vunpack.c.h.b16 %v1134
      %v1789 = vunpack.c.l.b16 %v1135
      %v1790 = vunpack.c.h.b16 %v1135
      %v1791 = vunpack.c.l.b16 %v1136
      %v1792 = vunpack.c.h.b16 %v1136
      %v1793 = vunpack.c.l.b16 %v1137
      %v1794 = vunpack.c.h.b16 %v1137
      %v1795 = vunpack.c.l.b16 %v1138
      %v1796 = vunpack.c.h.b16 %v1138
      %v1797 = vunpack.c.l.b16 %v1139
      %v1798 = vunpack.c.h.b16 %v1139
      %v1799 = vunpack.c.l.b16 %v1140
      %v1800 = vunpack.c.h.b16 %v1140
      %v1801 = vunpack.c.l.b16 %v1141
      %v1802 = vunpack.c.h.b16 %v1141
      %v1803 = vunpack.c.l.b16 %v1142
      %v1804 = vunpack.c.h.b16 %v1142
      %v1805 = vunpack.c.l.b16 %v1143
      %v1806 = vunpack.c.h.b16 %v1143
      %v1807 = vunpack.c.l.b16 %v1144
      %v1808 = vunpack.c.h.b16 %v1144
      %v1809 = vunpack.c.l.b16 %v1145
      %v1810 = vunpack.c.h.b16 %v1145
      %v1811 = vunpack.c.l.b16 %v1146
      %v1812 = vunpack.c.h.b16 %v1146
      %v1813 = vunpack.c.l.b16 %v1147
      %v1814 = vunpack.c.h.b16 %v1147
      %v1815 = vunpack.c.l.b16 %v1148
      %v1816 = vunpack.c.h.b16 %v1148
      %v1817 = vunpack.c.l.b16 %v1149
      %v1818 = vunpack.c.h.b16 %v1149
      %v1819 = vunpack.c.l.b16 %v1150
      %v1820 = vunpack.c.h.b16 %v1150
      %v1821 = vunpack.c.l.b16 %v1151
      %v1822 = vunpack.c.h.b16 %v1151
      %v1823 = vunpack.c.l.b16 %v1152
      %v1824 = vunpack.c.h.b16 %v1152
      %v1825 = vunpack.c.l.b16 %v1153
      %v1826 = vunpack.c.h.b16 %v1153
      %v1827 = vunpack.c.l.b16 %v1154
      %v1828 = vunpack.c.h.b16 %v1154
      %v1829 = vunpack.c.l.b16 %v1155
      %v1830 = vunpack.c.h.b16 %v1155
      %v1831 = vunpack.c.l.b16 %v1156
      %v1832 = vunpack.c.h.b16 %v1156
      %v1833 = vunpack.c.l.b16 %v1157
      %v1834 = vunpack.c.h.b16 %v1157
      %v1835 = vunpack.c.l.b16 %v1158
      %v1836 = vunpack.c.h.b16 %v1158
      %v1837 = vunpack.c.l.b16 %v1159
      %v1838 = vunpack.c.h.b16 %v1159
      %v1839 = vunpack.c.l.b16 %v1160
      %v1840 = vunpack.c.h.b16 %v1160
      %v1841 = vunpack.c.l.b16 %v1161
      %v1842 = vunpack.c.h.b16 %v1161
      %v1843 = vunpack.c.l.b16 %v1162
      %v1844 = vunpack.c.h.b16 %v1162
      %v1845 = vunpack.c.l.b16 %v1163
      %v1846 = vunpack.c.h.b16 %v1163
      %v1847 = vunpack.c.l.b16 %v1164
      %v1848 = vunpack.c.h.b16 %v1164
      %v1849 = vunpack.c.l.b16 %v1165
      %v1850 = vunpack.c.h.b16 %v1165
      %v1851 = vunpack.c.l.b16 %v1166
      %v1852 = vunpack.c.h.b16 %v1166
      %v1853 = vunpack.c.l.b16 %v1167
      %v1854 = vunpack.c.h.b16 %v1167
      %v1855 = vunpack.c.l.b16 %v1168
      %v1856 = vunpack.c.h.b16 %v1168
      %v1857 = vunpack.c.l.b16 %v1169
      %v1858 = vunpack.c.h.b16 %v1169
      %v1859 = vunpack.c.l.b16 %v1170
      %v1860 = vunpack.c.h.b16 %v1170
      %v1861 = vunpack.c.l.b16 %v1171
      %v1862 = vunpack.c.h.b16 %v1171
      %v1863 = vunpack.c.l.b16 %v1172
      %v1864 = vunpack.c.h.b16 %v1172
      %v1865 = vunpack.c.l.b16 %v1173
      %v1866 = vunpack.c.h.b16 %v1173
      %v1867 = vunpack.c.l.b16 %v1174
      %v1868 = vunpack.c.h.b16 %v1174
      %v1869 = vunpack.c.l.b16 %v1175
      %v1870 = vunpack.c.h.b16 %v1175
      %v1871 = vunpack.c.l.b16 %v1176
      %v1872 = vunpack.c.h.b16 %v1176
      %v1873 = vunpack.c.l.b16 %v1177
      %v1874 = vunpack.c.h.b16 %v1177
      %v1875 = vunpack.c.l.b16 %v1178
      %v1876 = vunpack.c.h.b16 %v1178
      %v1877 = vunpack.c.l.b16 %v1179
      %v1878 = vunpack.c.h.b16 %v1179
      %v1879 = vunpack.c.l.b16 %v1180
      %v1880 = vunpack.c.h.b16 %v1180
      %v1881 = vunpack.c.l.b16 %v1181
      %v1882 = vunpack.c.h.b16 %v1181
      %v1883 = vunpack.c.l.b16 %v1182
      %v1884 = vunpack.c.h.b16 %v1182
      %v1885 = vunpack.c.l.b16 %v1183
      %v1886 = vunpack.c.h.b16 %v1183
      %v1887 = vunpack.c.l.b16 %v1184
      %v1888 = vunpack.c.h.b16 %v1184
      %v1889 = vunpack.c.l.b16 %v1185
      %v1890 = vunpack.c.h.b16 %v1185
      %v1891 = vunpack.c.l.b16 %v1186
      %v1892 = vunpack.c.h.b16 %v1186
      %v1893 = vunpack.c.l.b16 %v1187
      %v1894 = vunpack.c.h.b16 %v1187
      %v1895 = vunpack.c.l.b16 %v1188
      %v1896 = vunpack.c.h.b16 %v1188
      %v1897 = vunpack.c.l.b16 %v1189
      %v1898 = vunpack.c.h.b16 %v1189
      %v1899 = vunpack.c.l.b16 %v1190
      %v1900 = vunpack.c.h.b16 %v1190
      %v1901 = vunpack.c.l.b16 %v1191
      %v1902 = vunpack.c.h.b16 %v1191
      %v1903 = vunpack.c.l.b16 %v1192
      %v1904 = vunpack.c.h.b16 %v1192
      %v1905 = vunpack.c.l.b16 %v1193
      %v1906 = vunpack.c.h.b16 %v1193
      %v1907 = vunpack.c.l.b16 %v1194
      %v1908 = vunpack.c.h.b16 %v1194
      %v1909 = vunpack.c.l.b16 %v1195
      %v1910 = vunpack.c.h.b16 %v1195
      %v1911 = vunpack.c.l.b16 %v1196
      %v1912 = vunpack.c.h.b16 %v1196
      %v1913 = vunpack.c.l.b16 %v1197
      %v1914 = vunpack.c.h.b16 %v1197
      %v1915 = vunpack.c.l.b16 %v1198
      %v1916 = vunpack.c.h.b16 %v1198
      %v1917 = vunpack.c.l.b16 %v1199
      %v1918 = vunpack.c.h.b16 %v1199
      %v1919 = vunpack.c.l.b16 %v1200
      %v1920 = vunpack.c.h.b16 %v1200
      %v1921 = vunpack.c.l.b16 %v1201
      %v1922 = vunpack.c.h.b16 %v1201
      %v1923 = vunpack.c.l.b16 %v1202
      %v1924 = vunpack.c.h.b16 %v1202
      %v1925 = vunpack.c.l.b16 %v1203
      %v1926 = vunpack.c.h.b16 %v1203
      %v1927 = vunpack.c.l.b16 %v1204
      %v1928 = vunpack.c.h.b16 %v1204
      %v1929 = vunpack.c.l.b16 %v1205
      %v1930 = vunpack.c.h.b16 %v1205
      %v1931 = vunpack.c.l.b16 %v1206
      %v1932 = vunpack.c.h.b16 %v1206
      %v1933 = vunpack.c.l.b16 %v1207
      %v1934 = vunpack.c.h.b16 %v1207
      %v1935 = vunpack.c.l.b16 %v1208
      %v1936 = vunpack.c.h.b16 %v1208
      %v1937 = vunpack.c.l.b16 %v1209
      %v1938 = vunpack.c.h.b16 %v1209
      %v1939 = vunpack.c.l.b16 %v1210
      %v1940 = vunpack.c.h.b16 %v1210
      %v1941 = vunpack.c.l.b16 %v1211
      %v1942 = vunpack.c.h.b16 %v1211
      %v1943 = vunpack.c.l.b16 %v1212
      %v1944 = vunpack.c.h.b16 %v1212
      %v1945 = vunpack.c.l.b16 %v1213
      %v1946 = vunpack.c.h.b16 %v1213
      %v1947 = vunpack.c.l.b16 %v1214
      %v1948 = vunpack.c.h.b16 %v1214
      %v1949 = vunpack.c.l.b16 %v1215
      %v1950 = vunpack.c.h.b16 %v1215
      %v1951 = vunpack.c.l.b16 %v1216
      %v1952 = vunpack.c.h.b16 %v1216
      %v1953 = vunpack.c.l.b16 %v1217
      %v1954 = vunpack.c.h.b16 %v1217
      %v1955 = vunpack.c.l.b16 %v1218
      %v1956 = vunpack.c.h.b16 %v1218
      %v1957 = vunpack.c.l.b16 %v1219
      %v1958 = vunpack.c.h.b16 %v1219
      %v1959 = vunpack.c.l.b16 %v1220
      %v1960 = vunpack.c.h.b16 %v1220
      %v1961 = vunpack.c.l.b16 %v1221
      %v1962 = vunpack.c.h.b16 %v1221
      %v1963 = vunpack.c.l.b16 %v1222
      %v1964 = vunpack.c.h.b16 %v1222
      %v1965 = vunpack.c.l.b16 %v1223
      %v1966 = vunpack.c.h.b16 %v1223
      %v1967 = vunpack.c.l.b16 %v1224
      %v1968 = vunpack.c.h.b16 %v1224
      %v1969 = vunpack.c.l.b16 %v1225
      %v1970 = vunpack.c.h.b16 %v1225
      %v1971 = vunpack.c.l.b16 %v1226
      %v1972 = vunpack.c.h.b16 %v1226
      %v1973 = vunpack.c.l.b16 %v1227
      %v1974 = vunpack.c.h.b16 %v1227
      %v1975 = vunpack.c.l.b16 %v1228
      %v1976 = vunpack.c.h.b16 %v1228
      %v1977 = vunpack.c.l.b16 %v1229
      %v1978 = vunpack.c.h.b16 %v1229
      %v1979 = vunpack.c.l.b16 %v1230
      %v1980 = vunpack.c.h.b16 %v1230
      %v1981 = vunpack.c.l.b16 %v1231
      %v1982 = vunpack.c.h.b16 %v1231
      %v1983 = vunpack.c.l.b16 %v1232
      %v1984 = vunpack.c.h.b16 %v1232
      %v1985 = vunpack.c.l.b16 %v1233
      %v1986 = vunpack.c.h.b16 %v1233
      %v1987 = vunpack.c.l.b16 %v1234
      %v1988 = vunpack.c.h.b16 %v1234
      %v1989 = vunpack.c.l.b16 %v1235
      %v1990 = vunpack.c.h.b16 %v1235
      %v1991 = vunpack.c.l.b16 %v1236
      %v1992 = vunpack.c.h.b16 %v1236
      %v1993 = vunpack.c.l.b16 %v1237
      %v1994 = vunpack.c.h.b16 %v1237
      %v1995 = vunpack.c.l.b16 %v1238
      %v1996 = vunpack.c.h.b16 %v1238
      %v1997 = vunpack.c.l.b16 %v1239
      %v1998 = vunpack.c.h.b16 %v1239
      %v1999 = vunpack.c.l.b16 %v1240
      %v2000 = vunpack.c.h.b16 %v1240
      %v2001 = vunpack.c.l.b16 %v1241
      %v2002 = vunpack.c.h.b16 %v1241
      %v2003 = vunpack.c.l.b16 %v1242
      %v2004 = vunpack.c.h.b16 %v1242
      %v2005 = vunpack.c.l.b16 %v1243
      %v2006 = vunpack.c.h.b16 %v1243
      %v2007 = vunpack.c.l.b16 %v1244
      %v2008 = vunpack.c.h.b16 %v1244
      %v2009 = vunpack.c.l.b16 %v1245
      %v2010 = vunpack.c.h.b16 %v1245
      %v2011 = vunpack.c.l.b16 %v1246
      %v2012 = vunpack.c.h.b16 %v1246
      %v2013 = vunpack.c.l.b16 %v1247
      %v2014 = vunpack.c.h.b16 %v1247
      %v2015 = vunpack.c.l.b16 %v1248
      %v2016 = vunpack.c.h.b16 %v1248
      %v2017 = vunpack.c.l.b16 %v1249
      %v2018 = vunpack.c.h.b16 %v1249
      %v2019 = vunpack.c.l.b16 %v1250
      %v2020 = vunpack.c.h.b16 %v1250
      %v2021 = vunpack.c.l.b16 %v1251
      %v2022 = vunpack.c.h.b16 %v1251
      %v2023 = vunpack.c.l.b16 %v1252
      %v2024 = vunpack.c.h.b16 %v1252
      %v2025 = vunpack.c.l.b16 %v1253
      %v2026 = vunpack.c.h.b16 %v1253
      %v2027 = vunpack.c.l.b16 %v1254
      %v2028 = vunpack.c.h.b16 %v1254
      %v2029 = vunpack.c.l.b16 %v1255
      %v2030 = vunpack.c.h.b16 %v1255
      %v2031 = vunpack.c.l.b16 %v1256
      %v2032 = vunpack.c.h.b16 %v1256
      %v2033 = vunpack.c.l.b16 %v1257
      %v2034 = vunpack.c.h.b16 %v1257
      %v2035 = vunpack.c.l.b16 %v1258
      %v2036 = vunpack.c.h.b16 %v1258
      %v2037 = vunpack.c.l.b16 %v1259
      %v2038 = vunpack.c.h.b16 %v1259
      %v2039 = vunpack.c.l.b16 %v1260
      %v2040 = vunpack.c.h.b16 %v1260
      %v2041 = vunpack.c.l.b16 %v1261
      %v2042 = vunpack.c.h.b16 %v1261
      %v2043 = vunpack.c.l.b16 %v1262
      %v2044 = vunpack.c.h.b16 %v1262
      %v2045 = vunpack.c.l.b16 %v1263
      %v2046 = vunpack.c.h.b16 %v1263
      %v2047 = vunpack.c.l.b16 %v1264
      %v2048 = vunpack.c.h.b16 %v1264
      %v2049 = vunpack.c.l.b16 %v1265
      %v2050 = vunpack.c.h.b16 %v1265
      %v2051 = vunpack.c.l.b16 %v1266
      %v2052 = vunpack.c.h.b16 %v1266
      %v2053 = vunpack.c.l.b16 %v1267
      %v2054 = vunpack.c.h.b16 %v1267
      %v2055 = vunpack.c.l.b16 %v1268
      %v2056 = vunpack.c.h.b16 %v1268
      %v2057 = vunpack.c.l.b16 %v1269
      %v2058 = vunpack.c.h.b16 %v1269
      %v2059 = vunpack.c.l.b16 %v1270
      %v2060 = vunpack.c.h.b16 %v1270
      %v2061 = vpack.c.b16 %v1553, %v1549
      %v2062 = vpack.c.b16 %v1554, %v1550
      %v2063 = vpack.c.b16 %v1555, %v1551
      %v2064 = vpack.c.b16 %v1556, %v1552
      %v2065 = vpack.c.b16 %v1561, %v1557
      %v2066 = vpack.c.b16 %v1562, %v1558
      %v2067 = vpack.c.b16 %v1563, %v1559
      %v2068 = vpack.c.b16 %v1564, %v1560
      %v2069 = vpack.c.b16 %v1569, %v1565
      %v2070 = vpack.c.b16 %v1570, %v1566
      %v2071 = vpack.c.b16 %v1571, %v1567
      %v2072 = vpack.c.b16 %v1572, %v1568
      %v2073 = vpack.c.b16 %v1577, %v1573
      %v2074 = vpack.c.b16 %v1578, %v1574
      %v2075 = vpack.c.b16 %v1579, %v1575
      %v2076 = vpack.c.b16 %v1580, %v1576
      %v2077 = vpack.c.b16 %v1585, %v1581
      %v2078 = vpack.c.b16 %v1586, %v1582
      %v2079 = vpack.c.b16 %v1587, %v1583
      %v2080 = vpack.c.b16 %v1588, %v1584
      %v2081 = vpack.c.b16 %v1593, %v1589
      %v2082 = vpack.c.b16 %v1594, %v1590
      %v2083 = vpack.c.b16 %v1595, %v1591
      %v2084 = vpack.c.b16 %v1596, %v1592
      %v2085 = vpack.c.b16 %v1601, %v1597
      %v2086 = vpack.c.b16 %v1602, %v1598
      %v2087 = vpack.c.b16 %v1603, %v1599
      %v2088 = vpack.c.b16 %v1604, %v1600
      %v2089 = vpack.c.b16 %v1609, %v1605
      %v2090 = vpack.c.b16 %v1610, %v1606
      %v2091 = vpack.c.b16 %v1611, %v1607
      %v2092 = vpack.c.b16 %v1612, %v1608
      %v2093 = vpack.c.b16 %v1617, %v1613
      %v2094 = vpack.c.b16 %v1618, %v1614
      %v2095 = vpack.c.b16 %v1619, %v1615
      %v2096 = vpack.c.b16 %v1620, %v1616
      %v2097 = vpack.c.b16 %v1625, %v1621
      %v2098 = vpack.c.b16 %v1626, %v1622
      %v2099 = vpack.c.b16 %v1627, %v1623
      %v2100 = vpack.c.b16 %v1628, %v1624
      %v2101 = vpack.c.b16 %v1633, %v1629
      %v2102 = vpack.c.b16 %v1634, %v1630
      %v2103 = vpack.c.b16 %v1635, %v1631
      %v2104 = vpack.c.b16 %v1636, %v1632
      %v2105 = vpack.c.b16 %v1641, %v1637
      %v2106 = vpack.c.b16 %v1642, %v1638
      %v2107 = vpack.c.b16 %v1643, %v1639
      %v2108 = vpack.c.b16 %v1644, %v1640
      %v2109 = vpack.c.b16 %v1649, %v1645
      %v2110 = vpack.c.b16 %v1650, %v1646
      %v2111 = vpack.c.b16 %v1651, %v1647
      %v2112 = vpack.c.b16 %v1652, %v1648
      %v2113 = vpack.c.b16 %v1657, %v1653
      %v2114 = vpack.c.b16 %v1658, %v1654
      %v2115 = vpack.c.b16 %v1659, %v1655
      %v2116 = vpack.c.b16 %v1660, %v1656
      %v2117 = vpack.c.b16 %v1665, %v1661
      %v2118 = vpack.c.b16 %v1666, %v1662
      %v2119 = vpack.c.b16 %v1667, %v1663
      %v2120 = vpack.c.b16 %v1668, %v1664
      %v2121 = vpack.c.b16 %v1673, %v1669
      %v2122 = vpack.c.b16 %v1674, %v1670
      %v2123 = vpack.c.b16 %v1675, %v1671
      %v2124 = vpack.c.b16 %v1676, %v1672
      %v2125 = vpack.c.b16 %v1681, %v1677
      %v2126 = vpack.c.b16 %v1682, %v1678
      %v2127 = vpack.c.b16 %v1683, %v1679
      %v2128 = vpack.c.b16 %v1684, %v1680
      %v2129 = vpack.c.b16 %v1689, %v1685
      %v2130 = vpack.c.b16 %v1690, %v1686
      %v2131 = vpack.c.b16 %v1691, %v1687
      %v2132 = vpack.c.b16 %v1692, %v1688
      %v2133 = vpack.c.b16 %v1697, %v1693
      %v2134 = vpack.c.b16 %v1698, %v1694
      %v2135 = vpack.c.b16 %v1699, %v1695
      %v2136 = vpack.c.b16 %v1700, %v1696
      %v2137 = vpack.c.b16 %v1705, %v1701
      %v2138 = vpack.c.b16 %v1706, %v1702
      %v2139 = vpack.c.b16 %v1707, %v1703
      %v2140 = vpack.c.b16 %v1708, %v1704
      %v2141 = vpack.c.b16 %v1713, %v1709
      %v2142 = vpack.c.b16 %v1714, %v1710
      %v2143 = vpack.c.b16 %v1715, %v1711
      %v2144 = vpack.c.b16 %v1716, %v1712
      %v2145 = vpack.c.b16 %v1721, %v1717
      %v2146 = vpack.c.b16 %v1722, %v1718
      %v2147 = vpack.c.b16 %v1723, %v1719
      %v2148 = vpack.c.b16 %v1724, %v1720
      %v2149 = vpack.c.b16 %v1729, %v1725
      %v2150 = vpack.c.b16 %v1730, %v1726
      %v2151 = vpack.c.b16 %v1731, %v1727
      %v2152 = vpack.c.b16 %v1732, %v1728
      %v2153 = vpack.c.b16 %v1737, %v1733
      %v2154 = vpack.c.b16 %v1738, %v1734
      %v2155 = vpack.c.b16 %v1739, %v1735
      %v2156 = vpack.c.b16 %v1740, %v1736
      %v2157 = vpack.c.b16 %v1745, %v1741
      %v2158 = vpack.c.b16 %v1746, %v1742
      %v2159 = vpack.c.b16 %v1747, %v1743
      %v2160 = vpack.c.b16 %v1748, %v1744
      %v2161 = vpack.c.b16 %v1753, %v1749
      %v2162 = vpack.c.b16 %v1754, %v1750
      %v2163 = vpack.c.b16 %v1755, %v1751
      %v2164 = vpack.c.b16 %v1756, %v1752
      %v2165 = vpack.c.b16 %v1761, %v1757
      %v2166 = vpack.c.b16 %v1762, %v1758
      %v2167 = vpack.c.b16 %v1763, %v1759
      %v2168 = vpack.c.b16 %v1764, %v1760
      %v2169 = vpack.c.b16 %v1769, %v1765
      %v2170 = vpack.c.b16 %v1770, %v1766
      %v2171 = vpack.c.b16 %v1771, %v1767
      %v2172 = vpack.c.b16 %v1772, %v1768
      %v2173 = vpack.c.b16 %v1777, %v1773
      %v2174 = vpack.c.b16 %v1778, %v1774
      %v2175 = vpack.c.b16 %v1779, %v1775
      %v2176 = vpack.c.b16 %v1780, %v1776
      %v2177 = vpack.c.b16 %v1785, %v1781
      %v2178 = vpack.c.b16 %v1786, %v1782
      %v2179 = vpack.c.b16 %v1787, %v1783
      %v2180 = vpack.c.b16 %v1788, %v1784
      %v2181 = vpack.c.b16 %v1793, %v1789
      %v2182 = vpack.c.b16 %v1794, %v1790
      %v2183 = vpack.c.b16 %v1795, %v1791
      %v2184 = vpack.c.b16 %v1796, %v1792
      %v2185 = vpack.c.b16 %v1801, %v1797
      %v2186 = vpack.c.b16 %v1802, %v1798
      %v2187 = vpack.c.b16 %v1803, %v1799
      %v2188 = vpack.c.b16 %v1804, %v1800
      %v2189 = vpack.c.b16 %v1809, %v1805
      %v2190 = vpack.c.b16 %v1810, %v1806
      %v2191 = vpack.c.b16 %v1811, %v1807
      %v2192 = vpack.c.b16 %v1812, %v1808
      %v2193 = vpack.c.b16 %v1817, %v1813
      %v2194 = vpack.c.b16 %v1818, %v1814
      %v2195 = vpack.c.b16 %v1819, %v1815
      %v2196 = vpack.c.b16 %v1820, %v1816
      %v2197 = vpack.c.b16 %v1825, %v1821
      %v2198 = vpack.c.b16 %v1826, %v1822
      %v2199 = vpack.c.b16 %v1827, %v1823
      %v2200 = vpack.c.b16 %v1828, %v1824
      %v2201 = vpack.c.b16 %v1833, %v1829
      %v2202 = vpack.c.b16 %v1834, %v1830
      %v2203 = vpack.c.b16 %v1835, %v1831
      %v2204 = vpack.c.b16 %v1836, %v1832
      %v2205 = vpack.c.b16 %v1841, %v1837
      %v2206 = vpack.c.b16 %v1842, %v1838
      %v2207 = vpack.c.b16 %v1843, %v1839
      %v2208 = vpack.c.b16 %v1844, %v1840
      %v2209 = vpack.c.b16 %v1849, %v1845
      %v2210 = vpack.c.b16 %v1850, %v1846
      %v2211 = vpack.c.b16 %v1851, %v1847
      %v2212 = vpack.c.b16 %v1852, %v1848
      %v2213 = vpack.c.b16 %v1857, %v1853
      %v2214 = vpack.c.b16 %v1858, %v1854
      %v2215 = vpack.c.b16 %v1859, %v1855
      %v2216 = vpack.c.b16 %v1860, %v1856
      %v2217 = vpack.c.b16 %v1865, %v1861
      %v2218 = vpack.c.b16 %v1866, %v1862
      %v2219 = vpack.c.b16 %v1867, %v1863
      %v2220 = vpack.c.b16 %v1868, %v1864
      %v2221 = vpack.c.b16 %v1873, %v1869
      %v2222 = vpack.c.b16 %v1874, %v1870
      %v2223 = vpack.c.b16 %v1875, %v1871
      %v2224 = vpack.c.b16 %v1876, %v1872
      %v2225 = vpack.c.b16 %v1881, %v1877
      %v2226 = vpack.c.b16 %v1882, %v1878
      %v2227 = vpack.c.b16 %v1883, %v1879
      %v2228 = vpack.c.b16 %v1884, %v1880
      %v2229 = vpack.c.b16 %v1889, %v1885
      %v2230 = vpack.c.b16 %v1890, %v1886
      %v2231 = vpack.c.b16 %v1891, %v1887
      %v2232 = vpack.c.b16 %v1892, %v1888
      %v2233 = vpack.c.b16 %v1897, %v1893
      %v2234 = vpack.c.b16 %v1898, %v1894
      %v2235 = vpack.c.b16 %v1899, %v1895
      %v2236 = vpack.c.b16 %v1900, %v1896
      %v2237 = vpack.c.b16 %v1905, %v1901
      %v2238 = vpack.c.b16 %v1906, %v1902
      %v2239 = vpack.c.b16 %v1907, %v1903
      %v2240 = vpack.c.b16 %v1908, %v1904
      %v2241 = vpack.c.b16 %v1913, %v1909
      %v2242 = vpack.c.b16 %v1914, %v1910
      %v2243 = vpack.c.b16 %v1915, %v1911
      %v2244 = vpack.c.b16 %v1916, %v1912
      %v2245 = vpack.c.b16 %v1921, %v1917
      %v2246 = vpack.c.b16 %v1922, %v1918
      %v2247 = vpack.c.b16 %v1923, %v1919
      %v2248 = vpack.c.b16 %v1924, %v1920
      %v2249 = vpack.c.b16 %v1929, %v1925
      %v2250 = vpack.c.b16 %v1930, %v1926
      %v2251 = vpack.c.b16 %v1931, %v1927
      %v2252 = vpack.c.b16 %v1932, %v1928
      %v2253 = vpack.c.b16 %v1937, %v1933
      %v2254 = vpack.c.b16 %v1938, %v1934
      %v2255 = vpack.c.b16 %v1939, %v1935
      %v2256 = vpack.c.b16 %v1940, %v1936
      %v2257 = vpack.c.b16 %v1945, %v1941
      %v2258 = vpack.c.b16 %v1946, %v1942
      %v2259 = vpack.c.b16 %v1947, %v1943
      %v2260 = vpack.c.b16 %v1948, %v1944
      %v2261 = vpack.c.b16 %v1953, %v1949
      %v2262 = vpack.c.b16 %v1954, %v1950
      %v2263 = vpack.c.b16 %v1955, %v1951
      %v2264 = vpack.c.b16 %v1956, %v1952
      %v2265 = vpack.c.b16 %v1961, %v1957
      %v2266 = vpack.c.b16 %v1962, %v1958
      %v2267 = vpack.c.b16 %v1963, %v1959
      %v2268 = vpack.c.b16 %v1964, %v1960
      %v2269 = vpack.c.b16 %v1969, %v1965
      %v2270 = vpack.c.b16 %v1970, %v1966
      %v2271 = vpack.c.b16 %v1971, %v1967
      %v2272 = vpack.c.b16 %v1972, %v1968
      %v2273 = vpack.c.b16 %v1977, %v1973
      %v2274 = vpack.c.b16 %v1978, %v1974
      %v2275 = vpack.c.b16 %v1979, %v1975
      %v2276 = vpack.c.b16 %v1980, %v1976
      %v2277 = vpack.c.b16 %v1985, %v1981
      %v2278 = vpack.c.b16 %v1986, %v1982
      %v2279 = vpack.c.b16 %v1987, %v1983
      %v2280 = vpack.c.b16 %v1988, %v1984
      %v2281 = vpack.c.b16 %v1993, %v1989
      %v2282 = vpack.c.b16 %v1994, %v1990
      %v2283 = vpack.c.b16 %v1995, %v1991
      %v2284 = vpack.c.b16 %v1996, %v1992
      %v2285 = vpack.c.b16 %v2001, %v1997
      %v2286 = vpack.c.b16 %v2002, %v1998
      %v2287 = vpack.c.b16 %v2003, %v1999
      %v2288 = vpack.c.b16 %v2004, %v2000
      %v2289 = vpack.c.b16 %v2009, %v2005
      %v2290 = vpack.c.b16 %v2010, %v2006
      %v2291 = vpack.c.b16 %v2011, %v2007
      %v2292 = vpack.c.b16 %v2012, %v2008
      %v2293 = vpack.c.b16 %v2017, %v2013
      %v2294 = vpack.c.b16 %v2018, %v2014
      %v2295 = vpack.c.b16 %v2019, %v2015
      %v2296 = vpack.c.b16 %v2020, %v2016
      %v2297 = vpack.c.b16 %v2025, %v2021
      %v2298 = vpack.c.b16 %v2026, %v2022
      %v2299 = vpack.c.b16 %v2027, %v2023
      %v2300 = vpack.c.b16 %v2028, %v2024
      %v2301 = vpack.c.b16 %v2033, %v2029
      %v2302 = vpack.c.b16 %v2034, %v2030
      %v2303 = vpack.c.b16 %v2035, %v2031
      %v2304 = vpack.c.b16 %v2036, %v2032
      %v2305 = vpack.c.b16 %v2041, %v2037
      %v2306 = vpack.c.b16 %v2042, %v2038
      %v2307 = vpack.c.b16 %v2043, %v2039
      %v2308 = vpack.c.b16 %v2044, %v2040
      %v2309 = vpack.c.b16 %v2049, %v2045
      %v2310 = vpack.c.b16 %v2050, %v2046
      %v2311 = vpack.c.b16 %v2051, %v2047
      %v2312 = vpack.c.b16 %v2052, %v2048
      %v2313 = vpack.c.b16 %v2057, %v2053
      %v2314 = vpack.c.b16 %v2058, %v2054
      %v2315 = vpack.c.b16 %v2059, %v2055
      %v2316 = vpack.c.b16 %v2060, %v2056
      %2573 = vmatprep.subr.bf16.mxu0 %v2062
      %2574 = vmatpush1.bf16.msra.mxu0 %v2061
      %2575 = vmatprep.subr.bf16.mxu0 %v2066
      %2576 = vmatpush1.bf16.msra.mxu0 %v2065
      %2577 = vmatprep.subr.bf16.mxu0 %v2070
      %2578 = vmatpush1.bf16.msra.mxu0 %v2069
      %2579 = vmatprep.subr.bf16.mxu0 %v2074
      %2580 = vmatpush1.bf16.msra.mxu0 %v2073
      %2581 = vmatprep.subr.bf16.mxu0 %v2078
      %2582 = vmatpush1.bf16.msra.mxu0 %v2077
      %2583 = vmatprep.subr.bf16.mxu0 %v2082
      %2584 = vmatpush1.bf16.msra.mxu0 %v2081
      %2585 = vmatprep.subr.bf16.mxu0 %v2086
      %2586 = vmatpush1.bf16.msra.mxu0 %v2085
      %2587 = vmatprep.subr.bf16.mxu0 %v2090
      %2588 = vmatpush1.bf16.msra.mxu0 %v2089
      %2589 = vmatprep.subr.bf16.mxu0 %v2094
      %2590 = vmatpush1.bf16.msra.mxu0 %v2093
      %2591 = vmatprep.subr.bf16.mxu0 %v2098
      %2592 = vmatpush1.bf16.msra.mxu0 %v2097
      %2593 = vmatprep.subr.bf16.mxu0 %v2102
      %2594 = vmatpush1.bf16.msra.mxu0 %v2101
      %2595 = vmatprep.subr.bf16.mxu0 %v2106
      %2596 = vmatpush1.bf16.msra.mxu0 %v2105
      %2597 = vmatprep.subr.bf16.mxu0 %v2110
      %2598 = vmatpush1.bf16.msra.mxu0 %v2109
      %2599 = vmatprep.subr.bf16.mxu0 %v2114
      %2600 = vmatpush1.bf16.msra.mxu0 %v2113
      %2601 = vmatprep.subr.bf16.mxu0 %v2118
      %2602 = vmatpush1.bf16.msra.mxu0 %v2117
      %2603 = vmatprep.subr.bf16.mxu0 %v2122
      %2604 = vmatpush1.bf16.msra.mxu0 %v2121
      %2605 = vmatprep.mubr.bf16.mxu0 %v1008
      %2606 = vmatmul.mubr.bf16.gmra.mrb[0].mxu0 %v1007
      %v2607 = vpop.f32.mrb[0].mxu0
      %v2608 = vadd.f32 %v1276, %v2607
      %v2609 = vpop.f32.mrb[0].mxu0
      %v2610 = vadd.f32 %v1280, %v2609
      %v2611 = vpop.f32.mrb[0].mxu0
      %v2612 = vadd.f32 %v1276, %v2611
      %v2613 = vpop.f32.mrb[0].mxu0
      %v2614 = vadd.f32 %v1280, %v2613
      %2615 = vdwg.mxu0
      %2616 = vmatprep.subr.bf16.mxu0 %v2126
      %2617 = vmatpush1.bf16.msra.mxu0 %v2125
      %2618 = vmatprep.subr.bf16.mxu0 %v2130
      %2619 = vmatpush1.bf16.msra.mxu0 %v2129
      %2620 = vmatprep.subr.bf16.mxu0 %v2134
      %2621 = vmatpush1.bf16.msra.mxu0 %v2133
      %2622 = vmatprep.subr.bf16.mxu0 %v2138
      %2623 = vmatpush1.bf16.msra.mxu0 %v2137
      %2624 = vmatprep.subr.bf16.mxu0 %v2142
      %2625 = vmatpush1.bf16.msra.mxu0 %v2141
      %2626 = vmatprep.subr.bf16.mxu0 %v2146
      %2627 = vmatpush1.bf16.msra.mxu0 %v2145
      %2628 = vmatprep.subr.bf16.mxu0 %v2150
      %2629 = vmatpush1.bf16.msra.mxu0 %v2149
      %2630 = vmatprep.subr.bf16.mxu0 %v2154
      %2631 = vmatpush1.bf16.msra.mxu0 %v2153
      %2632 = vmatprep.subr.bf16.mxu0 %v2158
      %2633 = vmatpush1.bf16.msra.mxu0 %v2157
      %2634 = vmatprep.subr.bf16.mxu0 %v2162
      %2635 = vmatpush1.bf16.msra.mxu0 %v2161
      %2636 = vmatprep.subr.bf16.mxu0 %v2166
      %2637 = vmatpush1.bf16.msra.mxu0 %v2165
      %2638 = vmatprep.subr.bf16.mxu0 %v2170
      %2639 = vmatpush1.bf16.msra.mxu0 %v2169
      %2640 = vmatprep.subr.bf16.mxu0 %v2174
      %2641 = vmatpush1.bf16.msra.mxu0 %v2173
      %2642 = vmatprep.subr.bf16.mxu0 %v2178
      %2643 = vmatpush1.bf16.msra.mxu0 %v2177
      %2644 = vmatprep.subr.bf16.mxu0 %v2182
      %2645 = vmatpush1.bf16.msra.mxu0 %v2181
      %2646 = vmatprep.subr.bf16.mxu0 %v2186
      %2647 = vmatpush1.bf16.msra.mxu0 %v2185
      %2648 = vmatprep.mubr.bf16.mxu0 %v1010
      %2649 = vmatmul.mubr.bf16.gmra.mrb[0].mxu0 %v1009
      %v2650 = vpop.f32.mrb[0].mxu0
      %v2651 = vadd.f32 %v2608, %v2650
      %v2652 = vpop.f32.mrb[0].mxu0
      %v2653 = vadd.f32 %v2610, %v2652
      %v2654 = vpop.f32.mrb[0].mxu0
      %v2655 = vadd.f32 %v2612, %v2654
      %v2656 = vpop.f32.mrb[0].mxu0
      %v2657 = vadd.f32 %v2614, %v2656
      %2658 = vdwg.mxu0
      %2659 = vmatprep.subr.bf16.mxu0 %v2190
      %2660 = vmatpush1.bf16.msra.mxu0 %v2189
      %2661 = vmatprep.subr.bf16.mxu0 %v2194
      %2662 = vmatpush1.bf16.msra.mxu0 %v2193
      %2663 = vmatprep.subr.bf16.mxu0 %v2198
      %2664 = vmatpush1.bf16.msra.mxu0 %v2197
      %2665 = vmatprep.subr.bf16.mxu0 %v2202
      %2666 = vmatpush1.bf16.msra.mxu0 %v2201
      %2667 = vmatprep.subr.bf16.mxu0 %v2206
      %2668 = vmatpush1.bf16.msra.mxu0 %v2205
      %2669 = vmatprep.subr.bf16.mxu0 %v2210
      %2670 = vmatpush1.bf16.msra.mxu0 %v2209
      %2671 = vmatprep.subr.bf16.mxu0 %v2214
      %2672 = vmatpush1.bf16.msra.mxu0 %v2213
      %2673 = vmatprep.subr.bf16.mxu0 %v2218
      %2674 = vmatpush1.bf16.msra.mxu0 %v2217
      %2675 = vmatprep.subr.bf16.mxu0 %v2222
      %2676 = vmatpush1.bf16.msra.mxu0 %v2221
      %2677 = vmatprep.subr.bf16.mxu0 %v2226
      %2678 = vmatpush1.bf16.msra.mxu0 %v2225
      %2679 = vmatprep.subr.bf16.mxu0 %v2230
      %2680 = vmatpush1.bf16.msra.mxu0 %v2229
      %2681 = vmatprep.subr.bf16.mxu0 %v2234
      %2682 = vmatpush1.bf16.msra.mxu0 %v2233
      %2683 = vmatprep.subr.bf16.mxu0 %v2238
      %2684 = vmatpush1.bf16.msra.mxu0 %v2237
      %2685 = vmatprep.subr.bf16.mxu0 %v2242
      %2686 = vmatpush1.bf16.msra.mxu0 %v2241
      %2687 = vmatprep.subr.bf16.mxu0 %v2246
      %2688 = vmatpush1.bf16.msra.mxu0 %v2245
      %2689 = vmatprep.subr.bf16.mxu0 %v2250
      %2690 = vmatpush1.bf16.msra.mxu0 %v2249
      %2691 = vmatprep.mubr.bf16.mxu0 %v1012
      %2692 = vmatmul.mubr.bf16.gmra.mrb[0].mxu0 %v1011
      %v2693 = vpop.f32.mrb[0].mxu0
      %v2694 = vadd.f32 %v2651, %v2693
      %v2695 = vpop.f32.mrb[0].mxu0
      %v2696 = vadd.f32 %v2653, %v2695
      %v2697 = vpop.f32.mrb[0].mxu0
      %v2698 = vadd.f32 %v2655, %v2697
      %v2699 = vpop.f32.mrb[0].mxu0
      %v2700 = vadd.f32 %v2657, %v2699
      %2701 = vdwg.mxu0
      %2702 = vmatprep.subr.bf16.mxu0 %v2254
      %2703 = vmatpush1.bf16.msra.mxu0 %v2253
      %2704 = vmatprep.subr.bf16.mxu0 %v2258
      %2705 = vmatpush1.bf16.msra.mxu0 %v2257
      %2706 = vmatprep.subr.bf16.mxu0 %v2262
      %2707 = vmatpush1.bf16.msra.mxu0 %v2261
      %2708 = vmatprep.subr.bf16.mxu0 %v2266
      %2709 = vmatpush1.bf16.msra.mxu0 %v2265
      %2710 = vmatprep.subr.bf16.mxu0 %v2270
      %2711 = vmatpush1.bf16.msra.mxu0 %v2269
      %2712 = vmatprep.subr.bf16.mxu0 %v2274
      %2713 = vmatpush1.bf16.msra.mxu0 %v2273
      %2714 = vmatprep.subr.bf16.mxu0 %v2278
      %2715 = vmatpush1.bf16.msra.mxu0 %v2277
      %2716 = vmatprep.subr.bf16.mxu0 %v2282
      %2717 = vmatpush1.bf16.msra.mxu0 %v2281
      %2718 = vmatprep.subr.bf16.mxu0 %v2286
      %2719 = vmatpush1.bf16.msra.mxu0 %v2285
      %2720 = vmatprep.subr.bf16.mxu0 %v2290
      %2721 = vmatpush1.bf16.msra.mxu0 %v2289
      %2722 = vmatprep.subr.bf16.mxu0 %v2294
      %2723 = vmatpush1.bf16.msra.mxu0 %v2293
      %2724 = vmatprep.subr.bf16.mxu0 %v2298
      %2725 = vmatpush1.bf16.msra.mxu0 %v2297
      %2726 = vmatprep.subr.bf16.mxu0 %v2302
      %2727 = vmatpush1.bf16.msra.mxu0 %v2301
      %2728 = vmatprep.subr.bf16.mxu0 %v2306
      %2729 = vmatpush1.bf16.msra.mxu0 %v2305
      %2730 = vmatprep.subr.bf16.mxu0 %v2310
      %2731 = vmatpush1.bf16.msra.mxu0 %v2309
      %2732 = vmatprep.subr.bf16.mxu0 %v2314
      %2733 = vmatpush1.bf16.msra.mxu0 %v2313
      %2734 = vmatprep.mubr.bf16.mxu0 %v1014
      %2735 = vmatmul.mubr.bf16.gmra.mrb[0].mxu0 %v1013
      %v2736 = vpop.f32.mrb[0].mxu0
      %v2737 = vadd.f32 %v2694, %v2736
      %v2738 = vpop.f32.mrb[0].mxu0
      %v2739 = vadd.f32 %v2696, %v2738
      %v2740 = vpop.f32.mrb[0].mxu0
      %v2741 = vadd.f32 %v2698, %v2740
      %v2742 = vpop.f32.mrb[0].mxu0
      %v2743 = vadd.f32 %v2700, %v2742
      %2744 = vdwg.mxu0
      %2745 = vmatprep.subr.bf16.mxu0 %v2064
      %2746 = vmatpush1.bf16.msra.mxu0 %v2063
      %2747 = vmatprep.subr.bf16.mxu0 %v2068
      %2748 = vmatpush1.bf16.msra.mxu0 %v2067
      %2749 = vmatprep.subr.bf16.mxu0 %v2072
      %2750 = vmatpush1.bf16.msra.mxu0 %v2071
      %2751 = vmatprep.subr.bf16.mxu0 %v2076
      %2752 = vmatpush1.bf16.msra.mxu0 %v2075
      %2753 = vmatprep.subr.bf16.mxu0 %v2080
      %2754 = vmatpush1.bf16.msra.mxu0 %v2079
      %2755 = vmatprep.subr.bf16.mxu0 %v2084
      %2756 = vmatpush1.bf16.msra.mxu0 %v2083
      %2757 = vmatprep.subr.bf16.mxu0 %v2088
      %2758 = vmatpush1.bf16.msra.mxu0 %v2087
      %2759 = vmatprep.subr.bf16.mxu0 %v2092
      %2760 = vmatpush1.bf16.msra.mxu0 %v2091
      %2761 = vmatprep.subr.bf16.mxu0 %v2096
      %2762 = vmatpush1.bf16.msra.mxu0 %v2095
      %2763 = vmatprep.subr.bf16.mxu0 %v2100
      %2764 = vmatpush1.bf16.msra.mxu0 %v2099
      %2765 = vmatprep.subr.bf16.mxu0 %v2104
      %2766 = vmatpush1.bf16.msra.mxu0 %v2103
      %2767 = vmatprep.subr.bf16.mxu0 %v2108
      %2768 = vmatpush1.bf16.msra.mxu0 %v2107
      %2769 = vmatprep.subr.bf16.mxu0 %v2112
      %2770 = vmatpush1.bf16.msra.mxu0 %v2111
      %2771 = vmatprep.subr.bf16.mxu0 %v2116
      %2772 = vmatpush1.bf16.msra.mxu0 %v2115
      %2773 = vmatprep.subr.bf16.mxu0 %v2120
      %2774 = vmatpush1.bf16.msra.mxu0 %v2119
      %2775 = vmatprep.subr.bf16.mxu0 %v2124
      %2776 = vmatpush1.bf16.msra.mxu0 %v2123
      %2777 = vmatprep.mubr.bf16.mxu0 %v1008
      %2778 = vmatmul.mubr.bf16.gmra.mrb[0].mxu0 %v1007
      %v2779 = vpop.f32.mrb[0].mxu0
      %v2780 = vadd.f32 %v1284, %v2779
      %v2781 = vpop.f32.mrb[0].mxu0
      %v2782 = vadd.f32 %v1288, %v2781
      %v2783 = vpop.f32.mrb[0].mxu0
      %v2784 = vadd.f32 %v1284, %v2783
      %v2785 = vpop.f32.mrb[0].mxu0
      %v2786 = vadd.f32 %v1288, %v2785
      %2787 = vdwg.mxu0
      %2788 = vmatprep.subr.bf16.mxu0 %v2128
      %2789 = vmatpush1.bf16.msra.mxu0 %v2127
      %2790 = vmatprep.subr.bf16.mxu0 %v2132
      %2791 = vmatpush1.bf16.msra.mxu0 %v2131
      %2792 = vmatprep.subr.bf16.mxu0 %v2136
      %2793 = vmatpush1.bf16.msra.mxu0 %v2135
      %2794 = vmatprep.subr.bf16.mxu0 %v2140
      %2795 = vmatpush1.bf16.msra.mxu0 %v2139
      %2796 = vmatprep.subr.bf16.mxu0 %v2144
      %2797 = vmatpush1.bf16.msra.mxu0 %v2143
      %2798 = vmatprep.subr.bf16.mxu0 %v2148
      %2799 = vmatpush1.bf16.msra.mxu0 %v2147
      %2800 = vmatprep.subr.bf16.mxu0 %v2152
      %2801 = vmatpush1.bf16.msra.mxu0 %v2151
      %2802 = vmatprep.subr.bf16.mxu0 %v2156
      %2803 = vmatpush1.bf16.msra.mxu0 %v2155
      %2804 = vmatprep.subr.bf16.mxu0 %v2160
      %2805 = vmatpush1.bf16.msra.mxu0 %v2159
      %2806 = vmatprep.subr.bf16.mxu0 %v2164
      %2807 = vmatpush1.bf16.msra.mxu0 %v2163
      %2808 = vmatprep.subr.bf16.mxu0 %v2168
      %2809 = vmatpush1.bf16.msra.mxu0 %v2167
      %2810 = vmatprep.subr.bf16.mxu0 %v2172
      %2811 = vmatpush1.bf16.msra.mxu0 %v2171
      %2812 = vmatprep.subr.bf16.mxu0 %v2176
      %2813 = vmatpush1.bf16.msra.mxu0 %v2175
      %2814 = vmatprep.subr.bf16.mxu0 %v2180
      %2815 = vmatpush1.bf16.msra.mxu0 %v2179
      %2816 = vmatprep.subr.bf16.mxu0 %v2184
      %2817 = vmatpush1.bf16.msra.mxu0 %v2183
      %2818 = vmatprep.subr.bf16.mxu0 %v2188
      %2819 = vmatpush1.bf16.msra.mxu0 %v2187
      %2820 = vmatprep.mubr.bf16.mxu0 %v1010
      %2821 = vmatmul.mubr.bf16.gmra.mrb[0].mxu0 %v1009
      %v2822 = vpop.f32.mrb[0].mxu0
      %v2823 = vadd.f32 %v2780, %v2822
      %v2824 = vpop.f32.mrb[0].mxu0
      %v2825 = vadd.f32 %v2782, %v2824
      %v2826 = vpop.f32.mrb[0].mxu0
      %v2827 = vadd.f32 %v2784, %v2826
      %v2828 = vpop.f32.mrb[0].mxu0
      %v2829 = vadd.f32 %v2786, %v2828
      %2830 = vdwg.mxu0
      %2831 = vmatprep.subr.bf16.mxu0 %v2192
      %2832 = vmatpush1.bf16.msra.mxu0 %v2191
      %2833 = vmatprep.subr.bf16.mxu0 %v2196
      %2834 = vmatpush1.bf16.msra.mxu0 %v2195
      %2835 = vmatprep.subr.bf16.mxu0 %v2200
      %2836 = vmatpush1.bf16.msra.mxu0 %v2199
      %2837 = vmatprep.subr.bf16.mxu0 %v2204
      %2838 = vmatpush1.bf16.msra.mxu0 %v2203
      %2839 = vmatprep.subr.bf16.mxu0 %v2208
      %2840 = vmatpush1.bf16.msra.mxu0 %v2207
      %2841 = vmatprep.subr.bf16.mxu0 %v2212
      %2842 = vmatpush1.bf16.msra.mxu0 %v2211
      %2843 = vmatprep.subr.bf16.mxu0 %v2216
      %2844 = vmatpush1.bf16.msra.mxu0 %v2215
      %2845 = vmatprep.subr.bf16.mxu0 %v2220
      %2846 = vmatpush1.bf16.msra.mxu0 %v2219
      %2847 = vmatprep.subr.bf16.mxu0 %v2224
      %2848 = vmatpush1.bf16.msra.mxu0 %v2223
      %2849 = vmatprep.subr.bf16.mxu0 %v2228
      %2850 = vmatpush1.bf16.msra.mxu0 %v2227
      %2851 = vmatprep.subr.bf16.mxu0 %v2232
      %2852 = vmatpush1.bf16.msra.mxu0 %v2231
      %2853 = vmatprep.subr.bf16.mxu0 %v2236
      %2854 = vmatpush1.bf16.msra.mxu0 %v2235
      %2855 = vmatprep.subr.bf16.mxu0 %v2240
      %2856 = vmatpush1.bf16.msra.mxu0 %v2239
      %2857 = vmatprep.subr.bf16.mxu0 %v2244
      %2858 = vmatpush1.bf16.msra.mxu0 %v2243
      %2859 = vmatprep.subr.bf16.mxu0 %v2248
      %2860 = vmatpush1.bf16.msra.mxu0 %v2247
      %2861 = vmatprep.subr.bf16.mxu0 %v2252
      %2862 = vmatpush1.bf16.msra.mxu0 %v2251
      %2863 = vmatprep.mubr.bf16.mxu0 %v1012
      %2864 = vmatmul.mubr.bf16.gmra.mrb[0].mxu0 %v1011
      %v2865 = vpop.f32.mrb[0].mxu0
      %v2866 = vadd.f32 %v2823, %v2865
      %v2867 = vpop.f32.mrb[0].mxu0
      %v2868 = vadd.f32 %v2825, %v2867
      %v2869 = vpop.f32.mrb[0].mxu0
      %v2870 = vadd.f32 %v2827, %v2869
      %v2871 = vpop.f32.mrb[0].mxu0
      %v2872 = vadd.f32 %v2829, %v2871
      %2873 = vdwg.mxu0
      %2874 = vmatprep.subr.bf16.mxu0 %v2256
      %2875 = vmatpush1.bf16.msra.mxu0 %v2255
      %2876 = vmatprep.subr.bf16.mxu0 %v2260
      %2877 = vmatpush1.bf16.msra.mxu0 %v2259
      %2878 = vmatprep.subr.bf16.mxu0 %v2264
      %2879 = vmatpush1.bf16.msra.mxu0 %v2263
      %2880 = vmatprep.subr.bf16.mxu0 %v2268
      %2881 = vmatpush1.bf16.msra.mxu0 %v2267
      %2882 = vmatprep.subr.bf16.mxu0 %v2272
      %2883 = vmatpush1.bf16.msra.mxu0 %v2271
      %2884 = vmatprep.subr.bf16.mxu0 %v2276
      %2885 = vmatpush1.bf16.msra.mxu0 %v2275
      %2886 = vmatprep.subr.bf16.mxu0 %v2280
      %2887 = vmatpush1.bf16.msra.mxu0 %v2279
      %2888 = vmatprep.subr.bf16.mxu0 %v2284
      %2889 = vmatpush1.bf16.msra.mxu0 %v2283
      %2890 = vmatprep.subr.bf16.mxu0 %v2288
      %2891 = vmatpush1.bf16.msra.mxu0 %v2287
      %2892 = vmatprep.subr.bf16.mxu0 %v2292
      %2893 = vmatpush1.bf16.msra.mxu0 %v2291
      %2894 = vmatprep.subr.bf16.mxu0 %v2296
      %2895 = vmatpush1.bf16.msra.mxu0 %v2295
      %2896 = vmatprep.subr.bf16.mxu0 %v2300
      %2897 = vmatpush1.bf16.msra.mxu0 %v2299
      %2898 = vmatprep.subr.bf16.mxu0 %v2304
      %2899 = vmatpush1.bf16.msra.mxu0 %v2303
      %2900 = vmatprep.subr.bf16.mxu0 %v2308
      %2901 = vmatpush1.bf16.msra.mxu0 %v2307
      %2902 = vmatprep.subr.bf16.mxu0 %v2312
      %2903 = vmatpush1.bf16.msra.mxu0 %v2311
      %2904 = vmatprep.subr.bf16.mxu0 %v2316
      %2905 = vmatpush1.bf16.msra.mxu0 %v2315
      %2906 = vmatprep.mubr.bf16.mxu0 %v1014
      %2907 = vmatmul.mubr.bf16.gmra.mrb[0].mxu0 %v1013
      %v2908 = vpop.f32.mrb[0].mxu0
      %v2909 = vadd.f32 %v2866, %v2908
      %v2910 = vpop.f32.mrb[0].mxu0
      %v2911 = vadd.f32 %v2868, %v2910
      %v2912 = vpop.f32.mrb[0].mxu0
      %v2913 = vadd.f32 %v2870, %v2912
      %v2914 = vpop.f32.mrb[0].mxu0
      %v2915 = vadd.f32 %v2872, %v2914
      %2916 = vdwg.mxu0
      %v2917 = vmax.f32 %v2737, 0.0
      %v2918 = vmax.f32 %v2739, 0.0
      %v2919 = vmax.f32 %v2909, 0.0
      %v2920 = vmax.f32 %v2911, 0.0
      %v2921 = vmax.f32 %v2741, 0.0
      %v2922 = vmax.f32 %v2743, 0.0
      %v2923 = vmax.f32 %v2913, 0.0
      %v2924 = vmax.f32 %v2915, 0.0
      %v2925 = vpack.c.bf16 %v2921, %v2917
      %v2926 = vpack.c.bf16 %v2922, %v2918
      %v2927 = vpack.c.bf16 %v2923, %v2919
      %v2928 = vpack.c.bf16 %v2924, %v2920
      %v2929 = vld [vmem:[%s8] sm:$0xf]
      %v2930 = vld [vmem:[%s8 + $0x4] sm:$0xf]
      %v2931 = vld [vmem:[%s8 + $0x8] sm:$0xf]
      %v2932 = vld [vmem:[%s8 + $0xc] sm:$0xf]
      %v2933 = vld [vmem:[%s8 + $0x10] sm:$0xf]
      %v2934 = vld [vmem:[%s8 + $0x14] sm:$0xf]
      %v2935 = vld [vmem:[%s8 + $0x18] sm:$0xf]
      %v2936 = vld [vmem:[%s8 + $0x1c] sm:$0xf]
      %v2937 = vld [vmem:[%s8 + $0x20] sm:$0xf]
      %v2938 = vld [vmem:[%s8 + $0x24] sm:$0xf]
      %v2939 = vld [vmem:[%s8 + $0x28] sm:$0xf]
      %v2940 = vld [vmem:[%s8 + $0x2c] sm:$0xf]
      %v2941 = vld [vmem:[%s8 + $0x30] sm:$0xf]
      %v2942 = vld [vmem:[%s8 + $0x34] sm:$0xf]
      %v2943 = vld [vmem:[%s8 + $0x38] sm:$0xf]
      %v2944 = vld [vmem:[%s8 + $0x3c] sm:$0xf]
      %v2945 = vld [vmem:[%s8 + $0x40] sm:$0xf]
      %v2946 = vld [vmem:[%s8 + $0x44] sm:$0xf]
      %v2947 = vld [vmem:[%s8 + $0x48] sm:$0xf]
      %v2948 = vld [vmem:[%s8 + $0x4c] sm:$0xf]
      %v2949 = vld [vmem:[%s8 + $0x50] sm:$0xf]
      %v2950 = vld [vmem:[%s8 + $0x54] sm:$0xf]
      %v2951 = vld [vmem:[%s8 + $0x58] sm:$0xf]
      %v2952 = vld [vmem:[%s8 + $0x5c] sm:$0xf]
      %v2953 = vld [vmem:[%s8 + $0x60] sm:$0xf]
      %v2954 = vld [vmem:[%s8 + $0x64] sm:$0xf]
      %v2955 = vld [vmem:[%s8 + $0x68] sm:$0xf]
      %v2956 = vld [vmem:[%s8 + $0x6c] sm:$0xf]
      %v2957 = vld [vmem:[%s8 + $0x70] sm:$0xf]
      %v2958 = vld [vmem:[%s8 + $0x74] sm:$0xf]
      %v2959 = vld [vmem:[%s8 + $0x78] sm:$0xf]
      %v2960 = vld [vmem:[%s8 + $0x7c] sm:$0xf]
      %v2961 = vld [vmem:[%s8 + $0x80] sm:$0xf]
      %v2962 = vld [vmem:[%s8 + $0x84] sm:$0xf]
      %v2963 = vld [vmem:[%s8 + $0x88] sm:$0xf]
      %v2964 = vld [vmem:[%s8 + $0x8c] sm:$0xf]
      %v2965 = vld [vmem:[%s8 + $0x90] sm:$0xf]
      %v2966 = vld [vmem:[%s8 + $0x94] sm:$0xf]
      %v2967 = vld [vmem:[%s8 + $0x98] sm:$0xf]
      %v2968 = vld [vmem:[%s8 + $0x9c] sm:$0xf]
      %v2969 = vld [vmem:[%s8 + $0xa0] sm:$0xf]
      %v2970 = vld [vmem:[%s8 + $0xa4] sm:$0xf]
      %v2971 = vld [vmem:[%s8 + $0xa8] sm:$0xf]
      %v2972 = vld [vmem:[%s8 + $0xac] sm:$0xf]
      %v2973 = vld [vmem:[%s8 + $0xb0] sm:$0xf]
      %v2974 = vld [vmem:[%s8 + $0xb4] sm:$0xf]
      %v2975 = vld [vmem:[%s8 + $0xb8] sm:$0xf]
      %v2976 = vld [vmem:[%s8 + $0xbc] sm:$0xf]
      %v2977 = vld [vmem:[%s8 + $0xc0] sm:$0xf]
      %v2978 = vld [vmem:[%s8 + $0xc4] sm:$0xf]
      %v2979 = vld [vmem:[%s8 + $0xc8] sm:$0xf]
      %v2980 = vld [vmem:[%s8 + $0xcc] sm:$0xf]
      %v2981 = vld [vmem:[%s8 + $0xd0] sm:$0xf]
      %v2982 = vld [vmem:[%s8 + $0xd4] sm:$0xf]
      %v2983 = vld [vmem:[%s8 + $0xd8] sm:$0xf]
      %v2984 = vld [vmem:[%s8 + $0xdc] sm:$0xf]
      %v2985 = vld [vmem:[%s8 + $0xe0] sm:$0xf]
      %v2986 = vld [vmem:[%s8 + $0xe4] sm:$0xf]
      %v2987 = vld [vmem:[%s8 + $0xe8] sm:$0xf]
      %v2988 = vld [vmem:[%s8 + $0xec] sm:$0xf]
      %v2989 = vld [vmem:[%s8 + $0xf0] sm:$0xf]
      %v2990 = vld [vmem:[%s8 + $0xf4] sm:$0xf]
      %v2991 = vld [vmem:[%s8 + $0xf8] sm:$0xf]
      %v2992 = vld [vmem:[%s8 + $0xfc] sm:$0xf]
      %v2993 = vld [vmem:[%s9] sm:$0x1]
      %v2995 = vlaneseq
      %v2996 = vshrl.u32 %v2995, 7
      %v2997 = vsub.s32 0, %v2996
      %v2998 = vrot.slane %v2993, %v2997
      %v3064 = vunpack.c.l.b16 %v2929
      %v3065 = vunpack.c.l.b16 %v2930
      %v3066 = vunpack.c.l.b16 %v2931
      %v3067 = vunpack.c.l.b16 %v2932
      %v3068 = vunpack.c.l.b16 %v2933
      %v3069 = vunpack.c.l.b16 %v2934
      %v3070 = vunpack.c.l.b16 %v2935
      %v3071 = vunpack.c.l.b16 %v2936
      %v3072 = vunpack.c.l.b16 %v2937
      %v3073 = vunpack.c.l.b16 %v2938
      %v3074 = vunpack.c.l.b16 %v2939
      %v3075 = vunpack.c.l.b16 %v2940
      %v3076 = vunpack.c.l.b16 %v2941
      %v3077 = vunpack.c.l.b16 %v2942
      %v3078 = vunpack.c.l.b16 %v2943
      %v3079 = vunpack.c.l.b16 %v2944
      %v3080 = vunpack.c.l.b16 %v2945
      %v3081 = vunpack.c.l.b16 %v2946
      %v3082 = vunpack.c.l.b16 %v2947
      %v3083 = vunpack.c.l.b16 %v2948
      %v3084 = vunpack.c.l.b16 %v2949
      %v3085 = vunpack.c.l.b16 %v2950
      %v3086 = vunpack.c.l.b16 %v2951
      %v3087 = vunpack.c.l.b16 %v2952
      %v3088 = vunpack.c.l.b16 %v2953
      %v3089 = vunpack.c.l.b16 %v2954
      %v3090 = vunpack.c.l.b16 %v2955
      %v3091 = vunpack.c.l.b16 %v2956
      %v3092 = vunpack.c.l.b16 %v2957
      %v3093 = vunpack.c.l.b16 %v2958
      %v3094 = vunpack.c.l.b16 %v2959
      %v3095 = vunpack.c.l.b16 %v2960
      %v3096 = vunpack.c.l.b16 %v2961
      %v3097 = vunpack.c.l.b16 %v2962
      %v3098 = vunpack.c.l.b16 %v2963
      %v3099 = vunpack.c.l.b16 %v2964
      %v3100 = vunpack.c.l.b16 %v2965
      %v3101 = vunpack.c.l.b16 %v2966
      %v3102 = vunpack.c.l.b16 %v2967
      %v3103 = vunpack.c.l.b16 %v2968
      %v3104 = vunpack.c.l.b16 %v2969
      %v3105 = vunpack.c.l.b16 %v2970
      %v3106 = vunpack.c.l.b16 %v2971
      %v3107 = vunpack.c.l.b16 %v2972
      %v3108 = vunpack.c.l.b16 %v2973
      %v3109 = vunpack.c.l.b16 %v2974
      %v3110 = vunpack.c.l.b16 %v2975
      %v3111 = vunpack.c.l.b16 %v2976
      %v3112 = vunpack.c.l.b16 %v2977
      %v3113 = vunpack.c.l.b16 %v2978
      %v3114 = vunpack.c.l.b16 %v2979
      %v3115 = vunpack.c.l.b16 %v2980
      %v3116 = vunpack.c.l.b16 %v2981
      %v3117 = vunpack.c.l.b16 %v2982
      %v3118 = vunpack.c.l.b16 %v2983
      %v3119 = vunpack.c.l.b16 %v2984
      %v3120 = vunpack.c.l.b16 %v2985
      %v3121 = vunpack.c.l.b16 %v2986
      %v3122 = vunpack.c.l.b16 %v2987
      %v3123 = vunpack.c.l.b16 %v2988
      %v3124 = vunpack.c.l.b16 %v2989
      %v3125 = vunpack.c.l.b16 %v2990
      %v3126 = vunpack.c.l.b16 %v2991
      %v3127 = vunpack.c.l.b16 %v2992
      %v3128 = vpack.c.b16 %v3065, %v3064
      %v3129 = vpack.c.b16 %v3067, %v3066
      %v3130 = vpack.c.b16 %v3069, %v3068
      %v3131 = vpack.c.b16 %v3071, %v3070
      %v3132 = vpack.c.b16 %v3073, %v3072
      %v3133 = vpack.c.b16 %v3075, %v3074
      %v3134 = vpack.c.b16 %v3077, %v3076
      %v3135 = vpack.c.b16 %v3079, %v3078
      %v3136 = vpack.c.b16 %v3081, %v3080
      %v3137 = vpack.c.b16 %v3083, %v3082
      %v3138 = vpack.c.b16 %v3085, %v3084
      %v3139 = vpack.c.b16 %v3087, %v3086
      %v3140 = vpack.c.b16 %v3089, %v3088
      %v3141 = vpack.c.b16 %v3091, %v3090
      %v3142 = vpack.c.b16 %v3093, %v3092
      %v3143 = vpack.c.b16 %v3095, %v3094
      %v3144 = vpack.c.b16 %v3097, %v3096
      %v3145 = vpack.c.b16 %v3099, %v3098
      %v3146 = vpack.c.b16 %v3101, %v3100
      %v3147 = vpack.c.b16 %v3103, %v3102
      %v3148 = vpack.c.b16 %v3105, %v3104
      %v3149 = vpack.c.b16 %v3107, %v3106
      %v3150 = vpack.c.b16 %v3109, %v3108
      %v3151 = vpack.c.b16 %v3111, %v3110
      %v3152 = vpack.c.b16 %v3113, %v3112
      %v3153 = vpack.c.b16 %v3115, %v3114
      %v3154 = vpack.c.b16 %v3117, %v3116
      %v3155 = vpack.c.b16 %v3119, %v3118
      %v3156 = vpack.c.b16 %v3121, %v3120
      %v3157 = vpack.c.b16 %v3123, %v3122
      %v3158 = vpack.c.b16 %v3125, %v3124
      %v3159 = vpack.c.b16 %v3127, %v3126
      %3192 = vmatprep.subr.bf16.mxu0 0
      %3193 = vmatpush1.bf16.msra.mxu0 %v3128
      %3194 = vmatprep.subr.bf16.mxu0 0
      %3195 = vmatpush1.bf16.msra.mxu0 %v3129
      %3196 = vmatprep.subr.bf16.mxu0 0
      %3197 = vmatpush1.bf16.msra.mxu0 %v3130
      %3198 = vmatprep.subr.bf16.mxu0 0
      %3199 = vmatpush1.bf16.msra.mxu0 %v3131
      %3200 = vmatprep.subr.bf16.mxu0 0
      %3201 = vmatpush1.bf16.msra.mxu0 %v3132
      %3202 = vmatprep.subr.bf16.mxu0 0
      %3203 = vmatpush1.bf16.msra.mxu0 %v3133
      %3204 = vmatprep.subr.bf16.mxu0 0
      %3205 = vmatpush1.bf16.msra.mxu0 %v3134
      %3206 = vmatprep.subr.bf16.mxu0 0
      %3207 = vmatpush1.bf16.msra.mxu0 %v3135
      %3208 = vmatprep.subr.bf16.mxu0 0
      %3209 = vmatpush1.bf16.msra.mxu0 %v3136
      %3210 = vmatprep.subr.bf16.mxu0 0
      %3211 = vmatpush1.bf16.msra.mxu0 %v3137
      %3212 = vmatprep.subr.bf16.mxu0 0
      %3213 = vmatpush1.bf16.msra.mxu0 %v3138
      %3214 = vmatprep.subr.bf16.mxu0 0
      %3215 = vmatpush1.bf16.msra.mxu0 %v3139
      %3216 = vmatprep.subr.bf16.mxu0 0
      %3217 = vmatpush1.bf16.msra.mxu0 %v3140
      %3218 = vmatprep.subr.bf16.mxu0 0
      %3219 = vmatpush1.bf16.msra.mxu0 %v3141
      %3220 = vmatprep.subr.bf16.mxu0 0
      %3221 = vmatpush1.bf16.msra.mxu0 %v3142
      %3222 = vmatprep.subr.bf16.mxu0 0
      %3223 = vmatpush1.bf16.msra.mxu0 %v3143
      %3224 = vmatprep.mubr.bf16.mxu0 %v2926
      %3225 = vmatmul.mubr.bf16.gmra.mrb[0].mxu0 %v2925
      %v3226 = vpop.f32.mrb[0].mxu0
      %v3227 = vadd.f32 %v2998, %v3226
      %v3228 = vpop.f32.mrb[0].mxu0
      %v3229 = vpop.f32.mrb[0].mxu0
      %v3230 = vadd.f32 %v2998, %v3229
      %v3231 = vpop.f32.mrb[0].mxu0
      %3232 = vdwg.mxu0
      %3233 = vmatprep.subr.bf16.mxu0 0
      %3234 = vmatpush1.bf16.msra.mxu0 %v3144
      %3235 = vmatprep.subr.bf16.mxu0 0
      %3236 = vmatpush1.bf16.msra.mxu0 %v3145
      %3237 = vmatprep.subr.bf16.mxu0 0
      %3238 = vmatpush1.bf16.msra.mxu0 %v3146
      %3239 = vmatprep.subr.bf16.mxu0 0
      %3240 = vmatpush1.bf16.msra.mxu0 %v3147
      %3241 = vmatprep.subr.bf16.mxu0 0
      %3242 = vmatpush1.bf16.msra.mxu0 %v3148
      %3243 = vmatprep.subr.bf16.mxu0 0
      %3244 = vmatpush1.bf16.msra.mxu0 %v3149
      %3245 = vmatprep.subr.bf16.mxu0 0
      %3246 = vmatpush1.bf16.msra.mxu0 %v3150
      %3247 = vmatprep.subr.bf16.mxu0 0
      %3248 = vmatpush1.bf16.msra.mxu0 %v3151
      %3249 = vmatprep.subr.bf16.mxu0 0
      %3250 = vmatpush1.bf16.msra.mxu0 %v3152
      %3251 = vmatprep.subr.bf16.mxu0 0
      %3252 = vmatpush1.bf16.msra.mxu0 %v3153
      %3253 = vmatprep.subr.bf16.mxu0 0
      %3254 = vmatpush1.bf16.msra.mxu0 %v3154
      %3255 = vmatprep.subr.bf16.mxu0 0
      %3256 = vmatpush1.bf16.msra.mxu0 %v3155
      %3257 = vmatprep.subr.bf16.mxu0 0
      %3258 = vmatpush1.bf16.msra.mxu0 %v3156
      %3259 = vmatprep.subr.bf16.mxu0 0
      %3260 = vmatpush1.bf16.msra.mxu0 %v3157
      %3261 = vmatprep.subr.bf16.mxu0 0
      %3262 = vmatpush1.bf16.msra.mxu0 %v3158
      %3263 = vmatprep.subr.bf16.mxu0 0
      %3264 = vmatpush1.bf16.msra.mxu0 %v3159
      %3265 = vmatprep.mubr.bf16.mxu0 %v2928
      %3266 = vmatmul.mubr.bf16.gmra.mrb[0].mxu0 %v2927
      %v3267 = vpop.f32.mrb[0].mxu0
      %v3268 = vadd.f32 %v3227, %v3267
      %v3269 = vpop.f32.mrb[0].mxu0
      %v3270 = vpop.f32.mrb[0].mxu0
      %v3271 = vadd.f32 %v3230, %v3270
      %v3272 = vpop.f32.mrb[0].mxu0
      %3273 = vdwg.mxu0
      %v3274 = vpack.c.bf16 %v3271, %v3268
      %v3276 = vunpack.c.l.b16 %v3274
      %v3277 = vunpack.c.h.b16 %v3274
      %v3278 = vpack.c.b16 %v3276, %v3276
      %v3279 = vpack.c.b16 %v3277, %v3277
      %3282 = vst [vmem:[%s434] sm:$0xf] %v3278
      %3283 = vst [vmem:[%s434 + $0x4] sm:$0xf] %v3279
      %s3284 = smul.u32 2, %s26
      %p3285 = scmp.lt.s32.totalorder %s25, 1
      %s3286 = scalar_select %p3285, %s25, 1
      %p3287 = scmp.lt.s32.totalorder %s3284, 1
      %s3288 = scalar_select %p3287, %s3284, 1
      %s3289 = smul.addr %s3286, 2
      %s3290 = sadd.s32 %s3288, %s3289
      %s3291 = smul.addr %s3290, 4
      %s3292 = scalar_lea.vmem %s10, %s3291
      // Predicated region
      $region61: #{pointnetfeat_forward.5} parent=59 // pred_check
        %p3293 = pneg %p280
      $region62: #{pointnetfeat_forward.5} parent=59 // pred_check_branch
        %3295 = sbr.rel (%p3293) target = $region64
      $region63: #{pointnetfeat_forward.5} parent=59 // pred_region
        %s3296 = smul.u32 2, %s26
      $region64: #{pointnetfeat_forward.5} parent=59 // pred_fallthru
        _
    $region60: #{pointnetfeat_forward.5} parent=5 // pred_fallthru
      _
    %p3297 = scmp.le.s32.totalorder 2, %s16
    // Predicated region
    $region65: #{pointnetfeat_forward.5} parent=5 // pred_check
      %p3298 = pneg %p3297
    $region66: #{pointnetfeat_forward.5} parent=5 // pred_check_branch
      %3300 = sbr.rel (%p3298) target = $region68
    $region67: #{pointnetfeat_forward.5} parent=5 // pred_region
      %s3301 = ssub.s32 %s16, 2
      // Predicated region
      $region69: #{pointnetfeat_forward.5} parent=67 // pred_check
        %p3302 = pneg %p286
      $region70: #{pointnetfeat_forward.5} parent=67 // pred_check_branch
        %3304 = sbr.rel (%p3302) target = $region72
      $region71: #{pointnetfeat_forward.5} parent=67 // pred_region
        %s3305 = smul.u32 2, %s28
        %p3306 = scmp.lt.s32.totalorder %s27, 1
        %s3307 = scalar_select %p3306, %s27, 1
        %p3308 = scmp.lt.s32.totalorder %s3305, 1
        %s3309 = scalar_select %p3308, %s3305, 1
        %s3310 = smul.addr %s3307, 2
        %s3311 = sadd.s32 %s3309, %s3310
        %s3312 = smul.addr %s3311, 4
        %s3313 = scalar_lea.vmem %s10, %s3312
      $region72: #{pointnetfeat_forward.5} parent=67 // pred_fallthru
        _
    $region68: #{pointnetfeat_forward.5} parent=5 // pred_fallthru
      _
  $region6: #{pointnetfeat_forward.5} parent=0 // loop_footer
    %s20 = sadd.s32 1, %s16
  $region7: #{pointnetfeat_forward.5} parent=0 // loop_footer_branch
    %15 = sbr.rel target = $region3
  $region8: #{pointnetfeat_forward.5} parent=0 // loop_exit
    _

</llo_original>
